<compile_context>
chip_gen: v7x
topology: tpu7x:2x2x1
jax: 0.10.0
libtpu: 0.0.40
codegen_flags: <defaults>
</compile_context>

<pallas_src>
import jax
import jax.numpy as jnp
from jax.experimental import pallas as pl
from jax.experimental.pallas import tpu as pltpu

# ---- problem sizes (synthetic "environment") -------------------------------
B = 2              # batch
C_IN = 4           # environment.observation_space.shape[0]
H = W = 16         # environment.observation_space.shape[1] (square)
C_HID = 10         # hidden conv channels (PyTorch module)
C_HID_P = 16       # zero-padded hidden channels for clean lane tiling
A = 8              # environment.action_space.n
K1, P1 = 5, 2      # l1 conv: 5x5, pad 2
K2, P2 = 3, 1      # l2 / l3 conv: 3x3, pad 1

LIN = W * C_IN      # input lane width  (w-major, c-minor) = 64
LHD = W * C_HID_P   # hidden lane width (padded)           = 256
HA = H * A          # linear matmul lane width             = 128

PMAX = P1           # uniform halo rows per image block
S = H + 2 * PMAX    # rows per image block in the fused strip = 20
NS = B * S          # rows in the batch-fused strip            = 40
NEXT = NS + 2 * PMAX  # rows in extended (haloed) buffers      = 44


def policy_kernel(x_ref, w1_ref, b1_ref, w2_ref, b2_ref, w3_ref, b3_ref,
                  w4_ref, b4_ref, rmask_ref, smask_ref, bsum_ref, fold_ref,
                  out_ref, pbuf2, pbuf3):
    """Fused conv5x5 -> conv3x3 -> conv3x3 -> Linear -> softmax, whole batch."""
    rmask = rmask_ref[...]                                   # (NS, 1)

    # Zero only the halo rows of the scratch strips; the strip rows
    # [PMAX, PMAX+NS) are always (mask-)written by a layer before being read.
    zhalo = jnp.zeros((PMAX, LHD), jnp.float32)
    pbuf2[0:PMAX, :] = zhalo
    pbuf2[PMAX + NS:NEXT, :] = zhalo
    pbuf3[0:PMAX, :] = zhalo
    pbuf3[PMAX + NS:NEXT, :] = zhalo

    # ---- conv1 (5x5, pad 2) + bias + ReLU : 5 MXU dots over the batch strip.
    # out_strip[t] = sum_kh x_ext[t + kh] @ W1[kh]   (PMAX == P1)
    acc = jnp.dot(x_ref[0:NS, :], w1_ref[0],
                  preferred_element_type=jnp.float32) + b1_ref[...]
    for kh in range(1, K1):
        acc = acc + jnp.dot(x_ref[kh:kh + NS, :], w1_ref[kh],
                            preferred_element_type=jnp.float32)
    pbuf2[PMAX:PMAX + NS, :] = jnp.maximum(acc, 0.0) * rmask

    # ---- conv2 (3x3, pad 1) : slice offset = PMAX - P2 + kh = 1 + kh.
    acc = jnp.dot(pbuf2[1:1 + NS, :], w2_ref[0],
                  preferred_element_type=jnp.float32) + b2_ref[...]
    for kh in range(1, K2):
        acc = acc + jnp.dot(pbuf2[1 + kh:1 + kh + NS, :], w2_ref[kh],
                            preferred_element_type=jnp.float32)
    pbuf3[PMAX:PMAX + NS, :] = jnp.maximum(acc, 0.0) * rmask

    # ---- conv3 (3x3, pad 1) : output feeds only the Linear, keep as a value.
    acc = jnp.dot(pbuf3[1:1 + NS, :], w3_ref[0],
                  preferred_element_type=jnp.float32) + b3_ref[...]
    for kh in range(1, K2):
        acc = acc + jnp.dot(pbuf3[1 + kh:1 + kh + NS, :], w3_ref[kh],
                            preferred_element_type=jnp.float32)
    h3 = jnp.maximum(acc, 0.0)                               # (NS, LHD)

    # ---- Linear as one MXU matmul + row-selection mask + two tiny folds ----
    # p[t, h*A + a] = <h3[t, :], w4[a, h, :]> ; smask keeps only the columns
    # whose h equals the image-row of strip row t (and zeroes pad rows).
    p = jnp.dot(h3, w4_ref[...],
                preferred_element_type=jnp.float32) * smask_ref[...]   # (NS, 128)
    q = jnp.dot(bsum_ref[...], p,
                preferred_element_type=jnp.float32)                    # (B, 128)
    logits = jnp.dot(q, fold_ref[...],
                     preferred_element_type=jnp.float32) + b4_ref[...]  # (B, A)

    # ---- softmax over actions, single (B, A) store --------------------------
    m = jnp.max(logits, axis=-1, keepdims=True)
    e = jnp.exp(logits - m)
    out_ref[...] = (e / jnp.sum(e, axis=-1, keepdims=True)).astype(out_ref.dtype)


def _strip_weight(w, kk, pad, c_in, c_out):
    """PyTorch OIHW conv kernel (c_out, c_in, kk, kk) -> (kk, W*c_in, W*c_out).

    M[kh, w_in*c_in + ci, w_out*c_out + co] = w[co, ci, kh, w_in - w_out + pad]
    when 0 <= w_in - w_out + pad < kk, else 0.  One row-strip matmul with M[kh]
    performs the width-direction convolution (including zero padding) exactly.
    """
    kt = jnp.transpose(w, (2, 3, 1, 0)).astype(jnp.float32)        # (kh, kw, ci, co)
    d = jnp.arange(W)[:, None] - jnp.arange(W)[None, :] + pad      # w_in - w_out + pad
    valid = ((d >= 0) & (d < kk)).astype(jnp.float32)              # (W, W)
    g = kt[:, jnp.clip(d, 0, kk - 1), :, :]                        # (kh, Win, Wout, ci, co)
    g = g * valid[None, :, :, None, None]
    g = jnp.transpose(g, (0, 1, 3, 2, 4))                          # (kh, Win, ci, Wout, co)
    return g.reshape(kk, W * c_in, W * c_out)


def pack_params(w1, b1, w2, b2, w3, b3, w4, b4):
    """One-time weight repacking (PyTorch layouts -> kernel layouts)."""
    po = C_HID_P - C_HID
    w1p = jnp.pad(w1.astype(jnp.float32), ((0, po), (0, 0), (0, 0), (0, 0)))
    w2p = jnp.pad(w2.astype(jnp.float32), ((0, po), (0, po), (0, 0), (0, 0)))
    w3p = jnp.pad(w3.astype(jnp.float32), ((0, po), (0, po), (0, 0), (0, 0)))
    w1k = _strip_weight(w1p, K1, P1, C_IN, C_HID_P)        # (5,  64, 256)
    w2k = _strip_weight(w2p, K2, P2, C_HID_P, C_HID_P)     # (3, 256, 256)
    w3k = _strip_weight(w3p, K2, P2, C_HID_P, C_HID_P)     # (3, 256, 256)

    def bias_row(b):
        return jnp.tile(jnp.pad(b.astype(jnp.float32), (0, po)), W).reshape(1, LHD)

    b1k, b2k, b3k = bias_row(b1), bias_row(b2), bias_row(b3)

    # Linear: (A, C*H*W) NCHW-flatten -> (A, H, W*C_HID_P) row-strip layout,
    # then lane-dense (LHD, H*A) so the whole Linear is one MXU matmul.
    w4k = jnp.transpose(w4.astype(jnp.float32).reshape(A, C_HID, H, W), (0, 2, 3, 1))
    w4k = jnp.pad(w4k, ((0, 0), (0, 0), (0, 0), (0, po))).reshape(A, H, LHD)
    w4r = jnp.transpose(w4k, (2, 1, 0)).reshape(LHD, HA)   # (256, 128)
    b4k = b4.reshape(1, A).astype(jnp.float32)

    # Masks / fold matrices for the fused-strip layout.
    t = jnp.arange(NS)
    r = t % S
    interior = (r >= PMAX) & (r < PMAX + H)
    h_of = jnp.clip(r - PMAX, 0, H - 1)
    rowmask = interior.astype(jnp.float32)[:, None]                      # (NS, 1)
    col_h = jnp.arange(HA) // A
    selmask = (interior[:, None]
               & (col_h[None, :] == h_of[:, None])).astype(jnp.float32)  # (NS, 128)
    bsum = (t[None, :] // S == jnp.arange(B)[:, None]).astype(jnp.float32)  # (B, NS)
    fold = jnp.tile(jnp.eye(A, dtype=jnp.float32), (H, 1))               # (128, A)

    return dict(w1=w1k, b1=b1k, w2=w2k, b2=b2k, w3=w3k, b3=b3k,
                w4=w4r, b4=b4k, rowmask=rowmask, selmask=selmask,
                bsum=bsum, fold=fold)


def policy_forward(params, x_nchw):
    """x_nchw: (B, C_IN, H, W) f32 -> (B, A) action probabilities."""
    bn = x_nchw.shape[0]
    # NCHW -> batch-fused row-strip: each image block has PMAX zero pad rows
    # above/below, plus PMAX extra halo rows around the whole strip.
    x_rows = jnp.transpose(x_nchw, (0, 2, 3, 1)).astype(jnp.float32)
    x_rows = x_rows.reshape(bn, H, LIN)
    x_blk = jnp.pad(x_rows, ((0, 0), (PMAX, PMAX), (0, 0)))        # (B, S, LIN)
    x_ext = jnp.pad(x_blk.reshape(bn * S, LIN), ((PMAX, PMAX), (0, 0)))  # (NEXT, LIN)

    args = (x_ext, params['w1'], params['b1'], params['w2'], params['b2'],
            params['w3'], params['b3'], params['w4'], params['b4'],
            params['rowmask'], params['selmask'], params['bsum'], params['fold'])

    def full_spec(arr):
        zeros = (0,) * arr.ndim
        return pl.BlockSpec(arr.shape, lambda i, _z=zeros: _z)

    return pl.pallas_call(
        policy_kernel,
        out_shape=jax.ShapeDtypeStruct((bn, A), jnp.float32),
        grid=(1,),   # whole (tiny, ~2 MiB) problem in one step: weights resident
                     # once, no per-step grid overhead, single (B, A) store.
        in_specs=[full_spec(a) for a in args],
        out_specs=pl.BlockSpec((bn, A), lambda i: (0, 0)),
        scratch_shapes=[pltpu.VMEM((NEXT, LHD), jnp.float32),
                        pltpu.VMEM((NEXT, LHD), jnp.float32)],
        compiler_params=pltpu.CompilerParams(
            dimension_semantics=("arbitrary",)),
    )(*args)


policy_forward_jit = jax.jit(policy_forward)


def reference_forward(x, w1, b1, w2, b2, w3, b3, w4, b4):
    """Pure-JAX reference matching the PyTorch module exactly (NCHW)."""
    hp = jax.lax.Precision.HIGHEST

    def conv(h, w, b, pad):
        y = jax.lax.conv_general_dilated(
            h, w, window_strides=(1, 1),
            padding=((pad, pad), (pad, pad)),
            dimension_numbers=('NCHW', 'OIHW', 'NCHW'),
            precision=hp)
        return y + b[None, :, None, None]

    h = jax.nn.relu(conv(x, w1, b1, P1))
    h = jax.nn.relu(conv(h, w2, b2, P2))
    h = jax.nn.relu(conv(h, w3, b3, P2))
    h = h.reshape(h.shape[0], -1)          # NCHW flatten, as torch.reshape does
    logits = jnp.dot(h, w4.T, precision=hp) + b4
    return jax.nn.softmax(logits, axis=-1)


if __name__ == "__main__":
    key = jax.random.PRNGKey(0)
    ks = jax.random.split(key, 10)

    x = jax.random.normal(ks[0], (B, C_IN, H, W), jnp.float32)

    # Deterministic synthetic parameters (PyTorch layouts)
    w1 = 0.10 * jax.random.normal(ks[1], (C_HID, C_IN, K1, K1), jnp.float32)
    b1 = 0.01 * jax.random.normal(ks[2], (C_HID,), jnp.float32)
    w2 = 0.10 * jax.random.normal(ks[3], (C_HID, C_HID, K2, K2), jnp.float32)
    b2 = 0.01 * jax.random.normal(ks[4], (C_HID,), jnp.float32)
    w3 = 0.10 * jax.random.normal(ks[5], (C_HID, C_HID, K2, K2), jnp.float32)
    b3 = 0.01 * jax.random.normal(ks[6], (C_HID,), jnp.float32)
    w4 = 0.02 * jax.random.normal(ks[7], (A, C_HID * H * W), jnp.float32)
    b4 = 0.01 * jax.random.normal(ks[8], (A,), jnp.float32)

    # Pack weights ONCE (cached across forward calls), then run the jitted kernel.
    packed = jax.tree_util.tree_map(jax.block_until_ready,
                                    pack_params(w1, b1, w2, b2, w3, b3, w4, b4))
    out = jax.block_until_ready(policy_forward_jit(packed, x))
    ref = jax.block_until_ready(reference_forward(x, w1, b1, w2, b2, w3, b3, w4, b4))

    assert out.shape == (B, A)
    err = jnp.max(jnp.abs(out - ref))
    if not jnp.allclose(out, ref, rtol=1e-3, atol=1e-3):
        raise AssertionError(f"mismatch vs reference: max abs err {err}")

    print("KERNEL_OK")
</pallas_src>

<mosaic_0001>
module attributes {stable_mosaic.version = 11 : i64} {
  func.func @policy_kernel(%arg0: i32, %arg1: memref<44x64xf32, #tpu.memory_space<vmem>>, %arg2: memref<5x64x256xf32, #tpu.memory_space<vmem>>, %arg3: memref<1x256xf32, #tpu.memory_space<vmem>>, %arg4: memref<3x256x256xf32, #tpu.memory_space<vmem>>, %arg5: memref<1x256xf32, #tpu.memory_space<vmem>>, %arg6: memref<3x256x256xf32, #tpu.memory_space<vmem>>, %arg7: memref<1x256xf32, #tpu.memory_space<vmem>>, %arg8: memref<256x128xf32, #tpu.memory_space<vmem>>, %arg9: memref<1x8xf32, #tpu.memory_space<vmem>>, %arg10: memref<40x1xf32, #tpu.memory_space<vmem>>, %arg11: memref<40x128xf32, #tpu.memory_space<vmem>>, %arg12: memref<2x40xf32, #tpu.memory_space<vmem>>, %arg13: memref<128x8xf32, #tpu.memory_space<vmem>>, %arg14: memref<2x8xf32, #tpu.memory_space<vmem>>, %arg15: memref<44x256xf32, #tpu.memory_space<vmem>>, %arg16: memref<44x256xf32, #tpu.memory_space<vmem>>) attributes {dimension_semantics = [#tpu.dimension_semantics<arbitrary>], iteration_bounds = array<i64: 1>, scalar_prefetch = 0 : i64, scratch_operands = 2 : i64, tpu.core_type = #tpu.core_type<tc>, window_params = [{pipeline_mode = #tpu.pipeline_mode<synchronous>, transform_indices = @transform_0, window_bounds = array<i64: 44, 64>}, {pipeline_mode = #tpu.pipeline_mode<synchronous>, transform_indices = @transform_1, window_bounds = array<i64: 5, 64, 256>}, {pipeline_mode = #tpu.pipeline_mode<synchronous>, transform_indices = @transform_2, window_bounds = array<i64: 1, 256>}, {pipeline_mode = #tpu.pipeline_mode<synchronous>, transform_indices = @transform_3, window_bounds = array<i64: 3, 256, 256>}, {pipeline_mode = #tpu.pipeline_mode<synchronous>, transform_indices = @transform_4, window_bounds = array<i64: 1, 256>}, {pipeline_mode = #tpu.pipeline_mode<synchronous>, transform_indices = @transform_5, window_bounds = array<i64: 3, 256, 256>}, {pipeline_mode = #tpu.pipeline_mode<synchronous>, transform_indices = @transform_6, window_bounds = array<i64: 1, 256>}, {pipeline_mode = #tpu.pipeline_mode<synchronous>, transform_indices = @transform_7, window_bounds = array<i64: 256, 128>}, {pipeline_mode = #tpu.pipeline_mode<synchronous>, transform_indices = @transform_8, window_bounds = array<i64: 1, 8>}, {pipeline_mode = #tpu.pipeline_mode<synchronous>, transform_indices = @transform_9, window_bounds = array<i64: 40, 1>}, {pipeline_mode = #tpu.pipeline_mode<synchronous>, transform_indices = @transform_10, window_bounds = array<i64: 40, 128>}, {pipeline_mode = #tpu.pipeline_mode<synchronous>, transform_indices = @transform_11, window_bounds = array<i64: 2, 40>}, {pipeline_mode = #tpu.pipeline_mode<synchronous>, transform_indices = @transform_12, window_bounds = array<i64: 128, 8>}, {pipeline_mode = #tpu.pipeline_mode<synchronous>, transform_indices = @transform_13, window_bounds = array<i64: 2, 8>}]} {
    %c0 = arith.constant 0 : index
    %c0_0 = arith.constant 0 : index
    %0 = vector.load %arg10[%c0, %c0_0] : memref<40x1xf32, #tpu.memory_space<vmem>>, vector<40x1xf32>
    %cst = arith.constant 0.000000e+00 : f32
    %1 = vector.broadcast %cst : f32 to vector<2x256xf32>
    %c0_1 = arith.constant 0 : index
    %c0_2 = arith.constant 0 : index
    %2 = vector.load %arg15[%c0_1, %c0_2] : memref<44x256xf32, #tpu.memory_space<vmem>>, vector<2x256xf32>
    tpu.vector_store %arg15[%c0_1, %c0_2], %1 {strides = array<i32>} : memref<44x256xf32, #tpu.memory_space<vmem>>, vector<2x256xf32>,
    %c42 = arith.constant 42 : index
    %c0_3 = arith.constant 0 : index
    %3 = vector.load %arg15[%c42, %c0_3] : memref<44x256xf32, #tpu.memory_space<vmem>>, vector<2x256xf32>
    tpu.vector_store %arg15[%c42, %c0_3], %1 {strides = array<i32>} : memref<44x256xf32, #tpu.memory_space<vmem>>, vector<2x256xf32>,
    %c0_4 = arith.constant 0 : index
    %c0_5 = arith.constant 0 : index
    %4 = vector.load %arg16[%c0_4, %c0_5] : memref<44x256xf32, #tpu.memory_space<vmem>>, vector<2x256xf32>
    tpu.vector_store %arg16[%c0_4, %c0_5], %1 {strides = array<i32>} : memref<44x256xf32, #tpu.memory_space<vmem>>, vector<2x256xf32>,
    %c42_6 = arith.constant 42 : index
    %c0_7 = arith.constant 0 : index
    %5 = vector.load %arg16[%c42_6, %c0_7] : memref<44x256xf32, #tpu.memory_space<vmem>>, vector<2x256xf32>
    tpu.vector_store %arg16[%c42_6, %c0_7], %1 {strides = array<i32>} : memref<44x256xf32, #tpu.memory_space<vmem>>, vector<2x256xf32>,
    %c0_8 = arith.constant 0 : index
    %c0_9 = arith.constant 0 : index
    %6 = vector.load %arg1[%c0_8, %c0_9] : memref<44x64xf32, #tpu.memory_space<vmem>>, vector<40x64xf32>
    %c0_10 = arith.constant 0 : index
    %c0_11 = arith.constant 0 : index
    %c0_12 = arith.constant 0 : index
    %7 = vector.load %arg2[%c0_10, %c0_11, %c0_12] : memref<5x64x256xf32, #tpu.memory_space<vmem>>, vector<1x64x256xf32>
    %8 = vector.shape_cast %7 : vector<1x64x256xf32> to vector<64x256xf32>
    %cst_13 = arith.constant dense<0.000000e+00> : vector<40x256xf32>
    %9 = tpu.matmul %6, %8, %cst_13 {dimension_numbers = #tpu.dot_dimension_numbers<[1], [0], [0], [1], [0, 0, 1, 1], [], []>} : vector<40x64xf32>, vector<64x256xf32>, vector<40x256xf32> -> vector<40x256xf32>
    %c0_14 = arith.constant 0 : index
    %c0_15 = arith.constant 0 : index
    %10 = vector.load %arg3[%c0_14, %c0_15] : memref<1x256xf32, #tpu.memory_space<vmem>>, vector<1x256xf32>
    %11 = vector.broadcast %10 : vector<1x256xf32> to vector<40x256xf32>
    %12 = arith.addf %9, %11 : vector<40x256xf32>
    %c1 = arith.constant 1 : index
    %c0_16 = arith.constant 0 : index
    %13 = vector.load %arg1[%c1, %c0_16] : memref<44x64xf32, #tpu.memory_space<vmem>>, vector<40x64xf32>
    %c1_17 = arith.constant 1 : index
    %c0_18 = arith.constant 0 : index
    %c0_19 = arith.constant 0 : index
    %14 = vector.load %arg2[%c1_17, %c0_18, %c0_19] : memref<5x64x256xf32, #tpu.memory_space<vmem>>, vector<1x64x256xf32>
    %15 = vector.shape_cast %14 : vector<1x64x256xf32> to vector<64x256xf32>
    %cst_20 = arith.constant dense<0.000000e+00> : vector<40x256xf32>
    %16 = tpu.matmul %13, %15, %cst_20 {dimension_numbers = #tpu.dot_dimension_numbers<[1], [0], [0], [1], [0, 0, 1, 1], [], []>} : vector<40x64xf32>, vector<64x256xf32>, vector<40x256xf32> -> vector<40x256xf32>
    %17 = arith.addf %12, %16 : vector<40x256xf32>
    %c2 = arith.constant 2 : index
    %c0_21 = arith.constant 0 : index
    %18 = vector.load %arg1[%c2, %c0_21] : memref<44x64xf32, #tpu.memory_space<vmem>>, vector<40x64xf32>
    %c2_22 = arith.constant 2 : index
    %c0_23 = arith.constant 0 : index
    %c0_24 = arith.constant 0 : index
    %19 = vector.load %arg2[%c2_22, %c0_23, %c0_24] : memref<5x64x256xf32, #tpu.memory_space<vmem>>, vector<1x64x256xf32>
    %20 = vector.shape_cast %19 : vector<1x64x256xf32> to vector<64x256xf32>
    %cst_25 = arith.constant dense<0.000000e+00> : vector<40x256xf32>
    %21 = tpu.matmul %18, %20, %cst_25 {dimension_numbers = #tpu.dot_dimension_numbers<[1], [0], [0], [1], [0, 0, 1, 1], [], []>} : vector<40x64xf32>, vector<64x256xf32>, vector<40x256xf32> -> vector<40x256xf32>
    %22 = arith.addf %17, %21 : vector<40x256xf32>
    %c3 = arith.constant 3 : index
    %c0_26 = arith.constant 0 : index
    %23 = vector.load %arg1[%c3, %c0_26] : memref<44x64xf32, #tpu.memory_space<vmem>>, vector<40x64xf32>
    %c3_27 = arith.constant 3 : index
    %c0_28 = arith.constant 0 : index
    %c0_29 = arith.constant 0 : index
    %24 = vector.load %arg2[%c3_27, %c0_28, %c0_29] : memref<5x64x256xf32, #tpu.memory_space<vmem>>, vector<1x64x256xf32>
    %25 = vector.shape_cast %24 : vector<1x64x256xf32> to vector<64x256xf32>
    %cst_30 = arith.constant dense<0.000000e+00> : vector<40x256xf32>
    %26 = tpu.matmul %23, %25, %cst_30 {dimension_numbers = #tpu.dot_dimension_numbers<[1], [0], [0], [1], [0, 0, 1, 1], [], []>} : vector<40x64xf32>, vector<64x256xf32>, vector<40x256xf32> -> vector<40x256xf32>
    %27 = arith.addf %22, %26 : vector<40x256xf32>
    %c4 = arith.constant 4 : index
    %c0_31 = arith.constant 0 : index
    %28 = vector.load %arg1[%c4, %c0_31] : memref<44x64xf32, #tpu.memory_space<vmem>>, vector<40x64xf32>
    %c4_32 = arith.constant 4 : index
    %c0_33 = arith.constant 0 : index
    %c0_34 = arith.constant 0 : index
    %29 = vector.load %arg2[%c4_32, %c0_33, %c0_34] : memref<5x64x256xf32, #tpu.memory_space<vmem>>, vector<1x64x256xf32>
    %30 = vector.shape_cast %29 : vector<1x64x256xf32> to vector<64x256xf32>
    %cst_35 = arith.constant dense<0.000000e+00> : vector<40x256xf32>
    %31 = tpu.matmul %28, %30, %cst_35 {dimension_numbers = #tpu.dot_dimension_numbers<[1], [0], [0], [1], [0, 0, 1, 1], [], []>} : vector<40x64xf32>, vector<64x256xf32>, vector<40x256xf32> -> vector<40x256xf32>
    %32 = arith.addf %27, %31 : vector<40x256xf32>
    %cst_36 = arith.constant 0.000000e+00 : f32
    %33 = vector.broadcast %cst_36 : f32 to vector<40x256xf32>
    %34 = arith.maximumf %32, %33 : vector<40x256xf32>
    %35 = vector.broadcast %0 : vector<40x1xf32> to vector<40x256xf32>
    %36 = arith.mulf %34, %35 : vector<40x256xf32>
    %c2_37 = arith.constant 2 : index
    %c0_38 = arith.constant 0 : index
    %37 = vector.load %arg15[%c2_37, %c0_38] : memref<44x256xf32, #tpu.memory_space<vmem>>, vector<40x256xf32>
    tpu.vector_store %arg15[%c2_37, %c0_38], %36 {strides = array<i32>} : memref<44x256xf32, #tpu.memory_space<vmem>>, vector<40x256xf32>,
    %c1_39 = arith.constant 1 : index
    %c0_40 = arith.constant 0 : index
    %38 = vector.load %arg15[%c1_39, %c0_40] : memref<44x256xf32, #tpu.memory_space<vmem>>, vector<40x256xf32>
    %c0_41 = arith.constant 0 : index
    %c0_42 = arith.constant 0 : index
    %c0_43 = arith.constant 0 : index
    %39 = vector.load %arg4[%c0_41, %c0_42, %c0_43] : memref<3x256x256xf32, #tpu.memory_space<vmem>>, vector<1x256x256xf32>
    %40 = vector.shape_cast %39 : vector<1x256x256xf32> to vector<256x256xf32>
    %cst_44 = arith.constant dense<0.000000e+00> : vector<40x256xf32>
    %41 = tpu.matmul %38, %40, %cst_44 {dimension_numbers = #tpu.dot_dimension_numbers<[1], [0], [0], [1], [0, 0, 1, 1], [], []>} : vector<40x256xf32>, vector<256x256xf32>, vector<40x256xf32> -> vector<40x256xf32>
    %c0_45 = arith.constant 0 : index
    %c0_46 = arith.constant 0 : index
    %42 = vector.load %arg5[%c0_45, %c0_46] : memref<1x256xf32, #tpu.memory_space<vmem>>, vector<1x256xf32>
    %43 = vector.broadcast %42 : vector<1x256xf32> to vector<40x256xf32>
    %44 = arith.addf %41, %43 : vector<40x256xf32>
    %c2_47 = arith.constant 2 : index
    %c0_48 = arith.constant 0 : index
    %45 = vector.load %arg15[%c2_47, %c0_48] : memref<44x256xf32, #tpu.memory_space<vmem>>, vector<40x256xf32>
    %c1_49 = arith.constant 1 : index
    %c0_50 = arith.constant 0 : index
    %c0_51 = arith.constant 0 : index
    %46 = vector.load %arg4[%c1_49, %c0_50, %c0_51] : memref<3x256x256xf32, #tpu.memory_space<vmem>>, vector<1x256x256xf32>
    %47 = vector.shape_cast %46 : vector<1x256x256xf32> to vector<256x256xf32>
    %cst_52 = arith.constant dense<0.000000e+00> : vector<40x256xf32>
    %48 = tpu.matmul %45, %47, %cst_52 {dimension_numbers = #tpu.dot_dimension_numbers<[1], [0], [0], [1], [0, 0, 1, 1], [], []>} : vector<40x256xf32>, vector<256x256xf32>, vector<40x256xf32> -> vector<40x256xf32>
    %49 = arith.addf %44, %48 : vector<40x256xf32>
    %c3_53 = arith.constant 3 : index
    %c0_54 = arith.constant 0 : index
    %50 = vector.load %arg15[%c3_53, %c0_54] : memref<44x256xf32, #tpu.memory_space<vmem>>, vector<40x256xf32>
    %c2_55 = arith.constant 2 : index
    %c0_56 = arith.constant 0 : index
    %c0_57 = arith.constant 0 : index
    %51 = vector.load %arg4[%c2_55, %c0_56, %c0_57] : memref<3x256x256xf32, #tpu.memory_space<vmem>>, vector<1x256x256xf32>
    %52 = vector.shape_cast %51 : vector<1x256x256xf32> to vector<256x256xf32>
    %cst_58 = arith.constant dense<0.000000e+00> : vector<40x256xf32>
    %53 = tpu.matmul %50, %52, %cst_58 {dimension_numbers = #tpu.dot_dimension_numbers<[1], [0], [0], [1], [0, 0, 1, 1], [], []>} : vector<40x256xf32>, vector<256x256xf32>, vector<40x256xf32> -> vector<40x256xf32>
    %54 = arith.addf %49, %53 : vector<40x256xf32>
    %cst_59 = arith.constant 0.000000e+00 : f32
    %55 = vector.broadcast %cst_59 : f32 to vector<40x256xf32>
    %56 = arith.maximumf %54, %55 : vector<40x256xf32>
    %57 = vector.broadcast %0 : vector<40x1xf32> to vector<40x256xf32>
    %58 = arith.mulf %56, %57 : vector<40x256xf32>
    %c2_60 = arith.constant 2 : index
    %c0_61 = arith.constant 0 : index
    %59 = vector.load %arg16[%c2_60, %c0_61] : memref<44x256xf32, #tpu.memory_space<vmem>>, vector<40x256xf32>
    tpu.vector_store %arg16[%c2_60, %c0_61], %58 {strides = array<i32>} : memref<44x256xf32, #tpu.memory_space<vmem>>, vector<40x256xf32>,
    %c1_62 = arith.constant 1 : index
    %c0_63 = arith.constant 0 : index
    %60 = vector.load %arg16[%c1_62, %c0_63] : memref<44x256xf32, #tpu.memory_space<vmem>>, vector<40x256xf32>
    %c0_64 = arith.constant 0 : index
    %c0_65 = arith.constant 0 : index
    %c0_66 = arith.constant 0 : index
    %61 = vector.load %arg6[%c0_64, %c0_65, %c0_66] : memref<3x256x256xf32, #tpu.memory_space<vmem>>, vector<1x256x256xf32>
    %62 = vector.shape_cast %61 : vector<1x256x256xf32> to vector<256x256xf32>
    %cst_67 = arith.constant dense<0.000000e+00> : vector<40x256xf32>
    %63 = tpu.matmul %60, %62, %cst_67 {dimension_numbers = #tpu.dot_dimension_numbers<[1], [0], [0], [1], [0, 0, 1, 1], [], []>} : vector<40x256xf32>, vector<256x256xf32>, vector<40x256xf32> -> vector<40x256xf32>
    %c0_68 = arith.constant 0 : index
    %c0_69 = arith.constant 0 : index
    %64 = vector.load %arg7[%c0_68, %c0_69] : memref<1x256xf32, #tpu.memory_space<vmem>>, vector<1x256xf32>
    %65 = vector.broadcast %64 : vector<1x256xf32> to vector<40x256xf32>
    %66 = arith.addf %63, %65 : vector<40x256xf32>
    %c2_70 = arith.constant 2 : index
    %c0_71 = arith.constant 0 : index
    %67 = vector.load %arg16[%c2_70, %c0_71] : memref<44x256xf32, #tpu.memory_space<vmem>>, vector<40x256xf32>
    %c1_72 = arith.constant 1 : index
    %c0_73 = arith.constant 0 : index
    %c0_74 = arith.constant 0 : index
    %68 = vector.load %arg6[%c1_72, %c0_73, %c0_74] : memref<3x256x256xf32, #tpu.memory_space<vmem>>, vector<1x256x256xf32>
    %69 = vector.shape_cast %68 : vector<1x256x256xf32> to vector<256x256xf32>
    %cst_75 = arith.constant dense<0.000000e+00> : vector<40x256xf32>
    %70 = tpu.matmul %67, %69, %cst_75 {dimension_numbers = #tpu.dot_dimension_numbers<[1], [0], [0], [1], [0, 0, 1, 1], [], []>} : vector<40x256xf32>, vector<256x256xf32>, vector<40x256xf32> -> vector<40x256xf32>
    %71 = arith.addf %66, %70 : vector<40x256xf32>
    %c3_76 = arith.constant 3 : index
    %c0_77 = arith.constant 0 : index
    %72 = vector.load %arg16[%c3_76, %c0_77] : memref<44x256xf32, #tpu.memory_space<vmem>>, vector<40x256xf32>
    %c2_78 = arith.constant 2 : index
    %c0_79 = arith.constant 0 : index
    %c0_80 = arith.constant 0 : index
    %73 = vector.load %arg6[%c2_78, %c0_79, %c0_80] : memref<3x256x256xf32, #tpu.memory_space<vmem>>, vector<1x256x256xf32>
    %74 = vector.shape_cast %73 : vector<1x256x256xf32> to vector<256x256xf32>
    %cst_81 = arith.constant dense<0.000000e+00> : vector<40x256xf32>
    %75 = tpu.matmul %72, %74, %cst_81 {dimension_numbers = #tpu.dot_dimension_numbers<[1], [0], [0], [1], [0, 0, 1, 1], [], []>} : vector<40x256xf32>, vector<256x256xf32>, vector<40x256xf32> -> vector<40x256xf32>
    %76 = arith.addf %71, %75 : vector<40x256xf32>
    %cst_82 = arith.constant 0.000000e+00 : f32
    %77 = vector.broadcast %cst_82 : f32 to vector<40x256xf32>
    %78 = arith.maximumf %76, %77 : vector<40x256xf32>
    %c0_83 = arith.constant 0 : index
    %c0_84 = arith.constant 0 : index
    %79 = vector.load %arg8[%c0_83, %c0_84] : memref<256x128xf32, #tpu.memory_space<vmem>>, vector<256x128xf32>
    %cst_85 = arith.constant dense<0.000000e+00> : vector<40x128xf32>
    %80 = tpu.matmul %78, %79, %cst_85 {dimension_numbers = #tpu.dot_dimension_numbers<[1], [0], [0], [1], [0, 0, 1, 1], [], []>} : vector<40x256xf32>, vector<256x128xf32>, vector<40x128xf32> -> vector<40x128xf32>
    %c0_86 = arith.constant 0 : index
    %c0_87 = arith.constant 0 : index
    %81 = vector.load %arg11[%c0_86, %c0_87] : memref<40x128xf32, #tpu.memory_space<vmem>>, vector<40x128xf32>
    %82 = arith.mulf %80, %81 : vector<40x128xf32>
    %c0_88 = arith.constant 0 : index
    %c0_89 = arith.constant 0 : index
    %83 = vector.load %arg12[%c0_88, %c0_89] : memref<2x40xf32, #tpu.memory_space<vmem>>, vector<2x40xf32>
    %cst_90 = arith.constant dense<0.000000e+00> : vector<2x128xf32>
    %84 = tpu.matmul %83, %82, %cst_90 {dimension_numbers = #tpu.dot_dimension_numbers<[1], [0], [0], [1], [0, 0, 1, 1], [], []>} : vector<2x40xf32>, vector<40x128xf32>, vector<2x128xf32> -> vector<2x128xf32>
    %c0_91 = arith.constant 0 : index
    %c0_92 = arith.constant 0 : index
    %85 = vector.load %arg13[%c0_91, %c0_92] : memref<128x8xf32, #tpu.memory_space<vmem>>, vector<128x8xf32>
    %cst_93 = arith.constant dense<0.000000e+00> : vector<2x8xf32>
    %86 = tpu.matmul %84, %85, %cst_93 {dimension_numbers = #tpu.dot_dimension_numbers<[1], [0], [0], [1], [0, 0, 1, 1], [], []>} : vector<2x128xf32>, vector<128x8xf32>, vector<2x8xf32> -> vector<2x8xf32>
    %c0_94 = arith.constant 0 : index
    %c0_95 = arith.constant 0 : index
    %87 = vector.load %arg9[%c0_94, %c0_95] : memref<1x8xf32, #tpu.memory_space<vmem>>, vector<1x8xf32>
    %88 = vector.broadcast %87 : vector<1x8xf32> to vector<2x8xf32>
    %89 = arith.addf %86, %88 : vector<2x8xf32>
    %cst_96 = arith.constant dense<0xFF800000> : vector<2xf32>
    %90 = vector.multi_reduction <maximumf>, %89, %cst_96 [1] : vector<2x8xf32> to vector<2xf32>
    %91 = vector.shape_cast %90 : vector<2xf32> to vector<2x1xf32>
    %92 = vector.broadcast %91 : vector<2x1xf32> to vector<2x8xf32>
    %93 = arith.subf %89, %92 : vector<2x8xf32>
    %94 = math.exp %93 : vector<2x8xf32>
    %cst_97 = arith.constant dense<0.000000e+00> : vector<2xf32>
    %95 = vector.multi_reduction <add>, %94, %cst_97 [1] : vector<2x8xf32> to vector<2xf32>
    %96 = vector.shape_cast %95 : vector<2xf32> to vector<2x1xf32>
    %97 = vector.broadcast %96 : vector<2x1xf32> to vector<2x8xf32>
    %98 = arith.divf %94, %97 : vector<2x8xf32>
    %c0_98 = arith.constant 0 : index
    %c0_99 = arith.constant 0 : index
    %99 = vector.load %arg14[%c0_98, %c0_99] : memref<2x8xf32, #tpu.memory_space<vmem>>, vector<2x8xf32>
    tpu.vector_store %arg14[%c0_98, %c0_99], %98 {strides = array<i32>} : memref<2x8xf32, #tpu.memory_space<vmem>>, vector<2x8xf32>,
    return
  }
  func.func @transform_0(%arg0: i32) -> (i32, i32) {
    %c0_i32 = arith.constant 0 : i32
    %c0_i32_0 = arith.constant 0 : i32
    %c0_i32_1 = arith.constant 0 : i32
    return %c0_i32, %c0_i32_0 : i32, i32
  }
  func.func @transform_1(%arg0: i32) -> (i32, i32, i32) {
    %c0_i32 = arith.constant 0 : i32
    %c0_i32_0 = arith.constant 0 : i32
    %c0_i32_1 = arith.constant 0 : i32
    %c0_i32_2 = arith.constant 0 : i32
    return %c0_i32, %c0_i32_0, %c0_i32_1 : i32, i32, i32
  }
  func.func @transform_2(%arg0: i32) -> (i32, i32) {
    %c0_i32 = arith.constant 0 : i32
    %c0_i32_0 = arith.constant 0 : i32
    %c0_i32_1 = arith.constant 0 : i32
    return %c0_i32, %c0_i32_0 : i32, i32
  }
  func.func @transform_3(%arg0: i32) -> (i32, i32, i32) {
    %c0_i32 = arith.constant 0 : i32
    %c0_i32_0 = arith.constant 0 : i32
    %c0_i32_1 = arith.constant 0 : i32
    %c0_i32_2 = arith.constant 0 : i32
    return %c0_i32, %c0_i32_0, %c0_i32_1 : i32, i32, i32
  }
  func.func @transform_4(%arg0: i32) -> (i32, i32) {
    %c0_i32 = arith.constant 0 : i32
    %c0_i32_0 = arith.constant 0 : i32
    %c0_i32_1 = arith.constant 0 : i32
    return %c0_i32, %c0_i32_0 : i32, i32
  }
  func.func @transform_5(%arg0: i32) -> (i32, i32, i32) {
    %c0_i32 = arith.constant 0 : i32
    %c0_i32_0 = arith.constant 0 : i32
    %c0_i32_1 = arith.constant 0 : i32
    %c0_i32_2 = arith.constant 0 : i32
    return %c0_i32, %c0_i32_0, %c0_i32_1 : i32, i32, i32
  }
  func.func @transform_6(%arg0: i32) -> (i32, i32) {
    %c0_i32 = arith.constant 0 : i32
    %c0_i32_0 = arith.constant 0 : i32
    %c0_i32_1 = arith.constant 0 : i32
    return %c0_i32, %c0_i32_0 : i32, i32
  }
  func.func @transform_7(%arg0: i32) -> (i32, i32) {
    %c0_i32 = arith.constant 0 : i32
    %c0_i32_0 = arith.constant 0 : i32
    %c0_i32_1 = arith.constant 0 : i32
    return %c0_i32, %c0_i32_0 : i32, i32
  }
  func.func @transform_8(%arg0: i32) -> (i32, i32) {
    %c0_i32 = arith.constant 0 : i32
    %c0_i32_0 = arith.constant 0 : i32
    %c0_i32_1 = arith.constant 0 : i32
    return %c0_i32, %c0_i32_0 : i32, i32
  }
  func.func @transform_9(%arg0: i32) -> (i32, i32) {
    %c0_i32 = arith.constant 0 : i32
    %c0_i32_0 = arith.constant 0 : i32
    %c0_i32_1 = arith.constant 0 : i32
    return %c0_i32, %c0_i32_0 : i32, i32
  }
  func.func @transform_10(%arg0: i32) -> (i32, i32) {
    %c0_i32 = arith.constant 0 : i32
    %c0_i32_0 = arith.constant 0 : i32
    %c0_i32_1 = arith.constant 0 : i32
    return %c0_i32, %c0_i32_0 : i32, i32
  }
  func.func @transform_11(%arg0: i32) -> (i32, i32) {
    %c0_i32 = arith.constant 0 : i32
    %c0_i32_0 = arith.constant 0 : i32
    %c0_i32_1 = arith.constant 0 : i32
    return %c0_i32, %c0_i32_0 : i32, i32
  }
  func.func @transform_12(%arg0: i32) -> (i32, i32) {
    %c0_i32 = arith.constant 0 : i32
    %c0_i32_0 = arith.constant 0 : i32
    %c0_i32_1 = arith.constant 0 : i32
    return %c0_i32, %c0_i32_0 : i32, i32
  }
  func.func @transform_13(%arg0: i32) -> (i32, i32) {
    %c0_i32 = arith.constant 0 : i32
    %c0_i32_0 = arith.constant 0 : i32
    %c0_i32_1 = arith.constant 0 : i32
    return %c0_i32, %c0_i32_0 : i32, i32
  }
}

</mosaic_0001>

<llo_original>
// kernel: policy_forward.1
$region0: #{policy_forward.1}
  #allocation0 [shape = 'u32[]', space=smem, size = 0x4, offset = 0x4, fixed_abs, tag = 'smem constant byte address 0x4 - core index']
  #allocation1 [shape = 'u32[144,128]{1,0:T(1,128)}', space=vmem, size = 0x12000, scoped, tag = 'internal scratch']
  #allocation2 [shape = 'f32[44,256]{1,0:T(8,128)}', space=vmem, size = 0xc000, scoped, tag = 'scratch operand']
  #allocation3 [shape = 'f32[44,256]{1,0:T(8,128)}', space=vmem, size = 0xc000, scoped, tag = 'scratch operand']
  %s0 = inlined_call_operand.vmem [shape: f32[44,64], index: 0, kind: input, shape index: {}]
  %s1 = inlined_call_operand.vmem [shape: f32[5,64,256], index: 1, kind: input, shape index: {}]
  %s2 = inlined_call_operand.vmem [shape: f32[1,256], index: 2, kind: input, shape index: {}]
  %s3 = inlined_call_operand.hbm [shape: f32[3,256,256], index: 3, kind: input, shape index: {}]
  %s4 = inlined_call_operand.vmem [shape: f32[1,256], index: 4, kind: input, shape index: {}]
  %s5 = inlined_call_operand.hbm [shape: f32[3,256,256], index: 5, kind: input, shape index: {}]
  %s6 = inlined_call_operand.vmem [shape: f32[1,256], index: 6, kind: input, shape index: {}]
  %s7 = inlined_call_operand.hbm [shape: f32[256,128], index: 7, kind: input, shape index: {}]
  %s8 = inlined_call_operand.vmem [shape: f32[1,8], index: 8, kind: input, shape index: {}]
  %s9 = inlined_call_operand.vmem [shape: f32[40,1], index: 9, kind: input, shape index: {}]
  %s10 = inlined_call_operand.vmem [shape: f32[40,128], index: 10, kind: input, shape index: {}]
  %s11 = inlined_call_operand.vmem [shape: f32[2,40], index: 11, kind: input, shape index: {}]
  %s12 = inlined_call_operand.vmem [shape: f32[128,8], index: 12, kind: input, shape index: {}]
  %s13 = inlined_call_operand.hbm [shape: f32[2,8], index: 13, kind: output, shape index: {}]
  %s14 = sld [smem:[#allocation0]]
  $region74: #{policy_forward.1} parent=0
    _
  %s16 = ssub.s32 1, %s14
  %s17 = scalar_select 0, %s16, %s14
  $region1: #{policy_forward.1} parent=0
    #allocation4 [shape = 'u8[786432]{0}', space=vmem, size = 0xc0000, scoped, tag = 'input window, operand 3, single buffered']
    #allocation5 [shape = 's32[1]{0}', space=sflag, size = 0x4, scoped, tag = 'scoped memory for policy_forward.1']
    #allocation6 [shape = 's32[1]{0}', space=sflag, size = 0x4, scoped, tag = 'scoped memory for policy_forward.1']
    #allocation7 [shape = 'u8[786432]{0}', space=vmem, size = 0xc0000, scoped, tag = 'input window, operand 5, single buffered']
    #allocation8 [shape = 's32[1]{0}', space=sflag, size = 0x4, scoped, tag = 'scoped memory for policy_forward.1']
    #allocation9 [shape = 'u8[131072]{0}', space=vmem, size = 0x20000, scoped, tag = 'input window, operand 7, single buffered']
    #allocation10 [shape = 'u8[1024]{0}', space=vmem, size = 0x400, scoped, tag = 'output window, operand 0, single buffered']
    %18 = vsyncpa [#allocation5], 0
    %19 = vsyncpa [#allocation8], 0
    %20 = vsyncpa [#allocation6], 0
    // Predicated region
    $region2: #{policy_forward.1} parent=1 // pred_check
      _
    $region3: #{policy_forward.1} parent=1 // pred_check_branch
      %22 = sbr.rel (0) target = $region5
    $region4: #{policy_forward.1} parent=1 // pred_region
      _
    $region5: #{policy_forward.1} parent=1 // pred_fallthru
      _
    // Predicated region
    $region6: #{policy_forward.1} parent=1 // pred_check
      _
    $region7: #{policy_forward.1} parent=1 // pred_check_branch
      %24 = sbr.rel (0) target = $region9
    $region8: #{policy_forward.1} parent=1 // pred_region
      _
    $region9: #{policy_forward.1} parent=1 // pred_fallthru
      _
    // Predicated region
    $region10: #{policy_forward.1} parent=1 // pred_check
      _
    $region11: #{policy_forward.1} parent=1 // pred_check_branch
      %26 = sbr.rel (0) target = $region13
    $region12: #{policy_forward.1} parent=1 // pred_region
      _
    $region13: #{policy_forward.1} parent=1 // pred_fallthru
      _
    // Predicated region
    $region14: #{policy_forward.1} parent=1 // pred_check
      _
    $region15: #{policy_forward.1} parent=1 // pred_check_branch
      %28 = sbr.rel (0) target = $region17
    $region16: #{policy_forward.1} parent=1 // pred_region
      %s30 = ssub.s32 24576, 24576
      %31 = vsyncadd [#allocation5], %s30
      %s32 = sshll.u32 [#allocation4], 4
      %s33 = int_to_ptr.vmem [resolvable:$true] %s32
      %38 = dma.hbm_to_vmem [thread:$0]  %s3, 24576, %s33, [#allocation5], 256, 256, 16
    $region17: #{policy_forward.1} parent=1 // pred_fallthru
      _
    // Predicated region
    $region18: #{policy_forward.1} parent=1 // pred_check
      _
    $region19: #{policy_forward.1} parent=1 // pred_check_branch
      %40 = sbr.rel (0) target = $region21
    $region20: #{policy_forward.1} parent=1 // pred_region
      _
    $region21: #{policy_forward.1} parent=1 // pred_fallthru
      _
    // Predicated region
    $region22: #{policy_forward.1} parent=1 // pred_check
      _
    $region23: #{policy_forward.1} parent=1 // pred_check_branch
      %42 = sbr.rel (0) target = $region25
    $region24: #{policy_forward.1} parent=1 // pred_region
      %s44 = ssub.s32 24576, 24576
      %45 = vsyncadd [#allocation8], %s44
      %s46 = sshll.u32 [#allocation7], 4
      %s47 = int_to_ptr.vmem [resolvable:$true] %s46
      %52 = dma.hbm_to_vmem [thread:$0]  %s5, 24576, %s47, [#allocation8], 256, 256, 16
    $region25: #{policy_forward.1} parent=1 // pred_fallthru
      _
    // Predicated region
    $region26: #{policy_forward.1} parent=1 // pred_check
      _
    $region27: #{policy_forward.1} parent=1 // pred_check_branch
      %54 = sbr.rel (0) target = $region29
    $region28: #{policy_forward.1} parent=1 // pred_region
      _
    $region29: #{policy_forward.1} parent=1 // pred_fallthru
      _
    // Predicated region
    $region30: #{policy_forward.1} parent=1 // pred_check
      _
    $region31: #{policy_forward.1} parent=1 // pred_check_branch
      %56 = sbr.rel (0) target = $region33
    $region32: #{policy_forward.1} parent=1 // pred_region
      %s58 = ssub.s32 4096, 4096
      %59 = vsyncadd [#allocation8], %s58
      %s60 = sshll.u32 [#allocation9], 4
      %s61 = int_to_ptr.vmem [resolvable:$true] %s60
      %66 = dma.hbm_to_vmem [thread:$0]  %s7, 4096, %s61, [#allocation8], 128, 128, 8
    $region33: #{policy_forward.1} parent=1 // pred_fallthru
      _
    // Predicated region
    $region34: #{policy_forward.1} parent=1 // pred_check
      _
    $region35: #{policy_forward.1} parent=1 // pred_check_branch
      %68 = sbr.rel (0) target = $region37
    $region36: #{policy_forward.1} parent=1 // pred_region
      _
    $region37: #{policy_forward.1} parent=1 // pred_fallthru
      _
    // Predicated region
    $region38: #{policy_forward.1} parent=1 // pred_check
      _
    $region39: #{policy_forward.1} parent=1 // pred_check_branch
      %70 = sbr.rel (0) target = $region41
    $region40: #{policy_forward.1} parent=1 // pred_region
      _
    $region41: #{policy_forward.1} parent=1 // pred_fallthru
      _
    // Predicated region
    $region42: #{policy_forward.1} parent=1 // pred_check
      _
    $region43: #{policy_forward.1} parent=1 // pred_check_branch
      %72 = sbr.rel (0) target = $region45
    $region44: #{policy_forward.1} parent=1 // pred_region
      _
    $region45: #{policy_forward.1} parent=1 // pred_fallthru
      _
    // Predicated region
    $region46: #{policy_forward.1} parent=1 // pred_check
      _
    $region47: #{policy_forward.1} parent=1 // pred_check_branch
      %74 = sbr.rel (0) target = $region49
    $region48: #{policy_forward.1} parent=1 // pred_region
      _
    $region49: #{policy_forward.1} parent=1 // pred_fallthru
      _
    // Predicated region
    $region50: #{policy_forward.1} parent=1 // pred_check
      _
    $region51: #{policy_forward.1} parent=1 // pred_check_branch
      %76 = sbr.rel (0) target = $region53
    $region52: #{policy_forward.1} parent=1 // pred_region
      _
    $region53: #{policy_forward.1} parent=1 // pred_fallthru
      _
    // Predicated region
    $region54: #{policy_forward.1} parent=1 // pred_check
      _
    $region55: #{policy_forward.1} parent=1 // pred_check_branch
      %78 = sbr.rel (0) target = $region57
    $region56: #{policy_forward.1} parent=1 // pred_region
      %79 = dma.done [#allocation5], 24576
    $region57: #{policy_forward.1} parent=1 // pred_fallthru
      _
    // Predicated region
    $region58: #{policy_forward.1} parent=1 // pred_check
      _
    $region59: #{policy_forward.1} parent=1 // pred_check_branch
      %81 = sbr.rel (0) target = $region61
    $region60: #{policy_forward.1} parent=1 // pred_region
      %82 = dma.done [#allocation8], 24576
    $region61: #{policy_forward.1} parent=1 // pred_fallthru
      _
    // Predicated region
    $region62: #{policy_forward.1} parent=1 // pred_check
      _
    $region63: #{policy_forward.1} parent=1 // pred_check_branch
      %84 = sbr.rel (0) target = $region65
    $region64: #{policy_forward.1} parent=1 // pred_region
      %85 = dma.done [#allocation8], 4096
    $region65: #{policy_forward.1} parent=1 // pred_fallthru
      _
    %v86 = vld [vmem:[%s9] sm:$0xff]
    %v87 = vld [vmem:[%s9 + $0x8] sm:$0xff]
    %v88 = vld [vmem:[%s9 + $0x10] sm:$0xff]
    %v89 = vld [vmem:[%s9 + $0x18] sm:$0xff]
    %v90 = vld [vmem:[%s9 + $0x20] sm:$0xff]
    %91 = vst [vmem:[#allocation2] sm:$0x3] 0.0
    %92 = vst [vmem:[#allocation2 + $0x8] sm:$0x3] 0.0
    %93 = vst [vmem:[#allocation2 + $0x50] sm:$0xc] 0.0
    %94 = vst [vmem:[#allocation2 + $0x58] sm:$0xc] 0.0
    %95 = vst [vmem:[#allocation3] sm:$0x3] 0.0
    %96 = vst [vmem:[#allocation3 + $0x8] sm:$0x3] 0.0
    %97 = vst [vmem:[#allocation3 + $0x50] sm:$0xc] 0.0
    %98 = vst [vmem:[#allocation3 + $0x58] sm:$0xc] 0.0
    %v99 = vld [vmem:[%s0] sm:$0xff]
    %v100 = vld [vmem:[%s0 + $0x8] sm:$0xff]
    %v101 = vld [vmem:[%s0 + $0x10] sm:$0xff]
    %v102 = vld [vmem:[%s0 + $0x18] sm:$0xff]
    %v103 = vld [vmem:[%s0 + $0x20] sm:$0xff]
    %v104 = vld [vmem:[%s1] sm:$0xff]
    %v105 = vld [vmem:[%s1 + $0x8] sm:$0xff]
    %v106 = vld [vmem:[%s1 + $0x10] sm:$0xff]
    %v107 = vld [vmem:[%s1 + $0x18] sm:$0xff]
    %v108 = vld [vmem:[%s1 + $0x20] sm:$0xff]
    %v109 = vld [vmem:[%s1 + $0x28] sm:$0xff]
    %v110 = vld [vmem:[%s1 + $0x30] sm:$0xff]
    %v111 = vld [vmem:[%s1 + $0x38] sm:$0xff]
    %v112 = vld [vmem:[%s1 + $0x40] sm:$0xff]
    %v113 = vld [vmem:[%s1 + $0x48] sm:$0xff]
    %v114 = vld [vmem:[%s1 + $0x50] sm:$0xff]
    %v115 = vld [vmem:[%s1 + $0x58] sm:$0xff]
    %v116 = vld [vmem:[%s1 + $0x60] sm:$0xff]
    %v117 = vld [vmem:[%s1 + $0x68] sm:$0xff]
    %v118 = vld [vmem:[%s1 + $0x70] sm:$0xff]
    %v119 = vld [vmem:[%s1 + $0x78] sm:$0xff]
    %v120 = vld [vmem:[%s2] sm:$0x3]
    %v122 = vlaneseq
    %v123 = vshrl.u32 %v122, 7
    %v124 = vsub.s32 0, %v123
    %v125 = vrot.slane %v120, %v124
    %v126 = vlaneseq
    %v127 = vshrl.u32 %v126, 7
    %v128 = vsub.s32 1, %v127
    %v129 = vrot.slane %v120, %v128
    %vm132 = vcmask 523264
    %v134 = vsel %vm132, %v99, 0
    %v137 = vsel %vm132, %v100, 0
    %v140 = vsel %vm132, %v101, 0
    %v143 = vsel %vm132, %v102, 0
    %v146 = vsel %vm132, %v103, 0
    %148 = vmatprep.subr.mxu0 %v105
    %149 = vmatpush1.msra.mxu0 %v104
    %150 = vmatprep.subr.mxu0 %v107
    %151 = vmatpush1.msra.mxu0 %v106
    %152 = vmatprep.subr.mxu0 %v109
    %153 = vmatpush1.msra.mxu0 %v108
    %154 = vmatprep.subr.mxu0 %v111
    %155 = vmatpush1.msra.mxu0 %v110
    %156 = vmatprep.subr.mxu0 %v113
    %157 = vmatpush1.msra.mxu0 %v112
    %158 = vmatprep.subr.mxu0 %v115
    %159 = vmatpush1.msra.mxu0 %v114
    %160 = vmatprep.subr.mxu0 %v117
    %161 = vmatpush1.msra.mxu0 %v116
    %162 = vmatprep.subr.mxu0 %v119
    %163 = vmatpush1.msra.mxu0 %v118
    %164 = vmatprep.subr.mxu0 0.0
    %165 = vmatpush1.msra.mxu0 0.0
    %166 = vmatprep.subr.mxu0 0.0
    %167 = vmatpush1.msra.mxu0 0.0
    %168 = vmatprep.subr.mxu0 0.0
    %169 = vmatpush1.msra.mxu0 0.0
    %170 = vmatprep.subr.mxu0 0.0
    %171 = vmatpush1.msra.mxu0 0.0
    %172 = vmatprep.subr.mxu0 0.0
    %173 = vmatpush1.msra.mxu0 0.0
    %174 = vmatprep.subr.mxu0 0.0
    %175 = vmatpush1.msra.mxu0 0.0
    %176 = vmatprep.subr.mxu0 0.0
    %177 = vmatpush1.msra.mxu0 0.0
    %178 = vmatprep.subr.mxu0 0.0
    %179 = vmatpush1.msra.mxu0 0.0
    %180 = vmatprep.subr.mxu0 0.0
    %181 = vmatpush1.msra.mxu0 0.0
    %182 = vmatprep.subr.mxu0 0.0
    %183 = vmatpush1.msra.mxu0 0.0
    %184 = vmatprep.subr.mxu0 0.0
    %185 = vmatpush1.msra.mxu0 0.0
    %186 = vmatprep.subr.mxu0 0.0
    %187 = vmatpush1.msra.mxu0 0.0
    %188 = vmatprep.subr.mxu0 0.0
    %189 = vmatpush1.msra.mxu0 0.0
    %190 = vmatprep.subr.mxu0 0.0
    %191 = vmatpush1.msra.mxu0 0.0
    %192 = vmatprep.subr.mxu0 0.0
    %193 = vmatpush1.msra.mxu0 0.0
    %194 = vmatprep.subr.mxu0 0.0
    %195 = vmatpush1.msra.mxu0 0.0
    %196 = vmatprep.subr.mxu0 0.0
    %197 = vmatpush1.msra.mxu0 0.0
    %198 = vmatprep.subr.mxu0 0.0
    %199 = vmatpush1.msra.mxu0 0.0
    %200 = vmatprep.subr.mxu0 0.0
    %201 = vmatpush1.msra.mxu0 0.0
    %202 = vmatprep.subr.mxu0 0.0
    %203 = vmatpush1.msra.mxu0 0.0
    %204 = vmatprep.subr.mxu0 0.0
    %205 = vmatpush1.msra.mxu0 0.0
    %206 = vmatprep.subr.mxu0 0.0
    %207 = vmatpush1.msra.mxu0 0.0
    %208 = vmatprep.subr.mxu0 0.0
    %209 = vmatpush1.msra.mxu0 0.0
    %210 = vmatprep.subr.mxu0 0.0
    %211 = vmatpush1.msra.mxu0 0.0
    %212 = vmatprep.mubr.f32.mxu0 0.0
    %213 = vmatmul.mubr.f32.gmra.mrb[0].mxu0 %v134
    %v214 = vpop.f32.mrb[0].mxu0
    %v215 = vadd.f32 %v125, %v214
    %v216 = vpop.f32.mrb[0].mxu0
    %v217 = vadd.f32 %v129, %v216
    %218 = vmatprep.mubr.f32.mxu0 0.0
    %219 = vmatmul.mubr.f32.gmra.mrb[0].mxu0 %v137
    %v220 = vpop.f32.mrb[0].mxu0
    %v221 = vadd.f32 %v125, %v220
    %v222 = vpop.f32.mrb[0].mxu0
    %v223 = vadd.f32 %v129, %v222
    %224 = vmatprep.mubr.f32.mxu0 0.0
    %225 = vmatmul.mubr.f32.gmra.mrb[0].mxu0 %v140
    %v226 = vpop.f32.mrb[0].mxu0
    %v227 = vadd.f32 %v125, %v226
    %v228 = vpop.f32.mrb[0].mxu0
    %v229 = vadd.f32 %v129, %v228
    %230 = vmatprep.mubr.f32.mxu0 0.0
    %231 = vmatmul.mubr.f32.gmra.mrb[0].mxu0 %v143
    %v232 = vpop.f32.mrb[0].mxu0
    %v233 = vadd.f32 %v125, %v232
    %v234 = vpop.f32.mrb[0].mxu0
    %v235 = vadd.f32 %v129, %v234
    %236 = vmatprep.mubr.f32.mxu0 0.0
    %237 = vmatmul.mubr.f32.gmra.mrb[0].mxu0 %v146
    %v238 = vpop.f32.mrb[0].mxu0
    %v239 = vadd.f32 %v125, %v238
    %v240 = vpop.f32.mrb[0].mxu0
    %v241 = vadd.f32 %v129, %v240
    %242 = vdwg.mxu0
    %v243 = vld [vmem:[%s0 + $0x1] sm:$0xff]
    %v244 = vld [vmem:[%s0 + $0x9] sm:$0xff]
    %v245 = vld [vmem:[%s0 + $0x11] sm:$0xff]
    %v246 = vld [vmem:[%s0 + $0x19] sm:$0xff]
    %v247 = vld [vmem:[%s0 + $0x21] sm:$0xff]
    %s248 = scalar_lea.vmem %s1, 128
    %v249 = vld [vmem:[%s248] sm:$0xff]
    %v250 = vld [vmem:[%s248 + $0x8] sm:$0xff]
    %v251 = vld [vmem:[%s248 + $0x10] sm:$0xff]
    %v252 = vld [vmem:[%s248 + $0x18] sm:$0xff]
    %v253 = vld [vmem:[%s248 + $0x20] sm:$0xff]
    %v254 = vld [vmem:[%s248 + $0x28] sm:$0xff]
    %v255 = vld [vmem:[%s248 + $0x30] sm:$0xff]
    %v256 = vld [vmem:[%s248 + $0x38] sm:$0xff]
    %v257 = vld [vmem:[%s248 + $0x40] sm:$0xff]
    %v258 = vld [vmem:[%s248 + $0x48] sm:$0xff]
    %v259 = vld [vmem:[%s248 + $0x50] sm:$0xff]
    %v260 = vld [vmem:[%s248 + $0x58] sm:$0xff]
    %v261 = vld [vmem:[%s248 + $0x60] sm:$0xff]
    %v262 = vld [vmem:[%s248 + $0x68] sm:$0xff]
    %v263 = vld [vmem:[%s248 + $0x70] sm:$0xff]
    %v264 = vld [vmem:[%s248 + $0x78] sm:$0xff]
    %v266 = vsel %vm132, %v243, 0
    %v269 = vsel %vm132, %v244, 0
    %v272 = vsel %vm132, %v245, 0
    %v275 = vsel %vm132, %v246, 0
    %v278 = vsel %vm132, %v247, 0
    %280 = vmatprep.subr.mxu0 %v250
    %281 = vmatpush1.msra.mxu0 %v249
    %282 = vmatprep.subr.mxu0 %v252
    %283 = vmatpush1.msra.mxu0 %v251
    %284 = vmatprep.subr.mxu0 %v254
    %285 = vmatpush1.msra.mxu0 %v253
    %286 = vmatprep.subr.mxu0 %v256
    %287 = vmatpush1.msra.mxu0 %v255
    %288 = vmatprep.subr.mxu0 %v258
    %289 = vmatpush1.msra.mxu0 %v257
    %290 = vmatprep.subr.mxu0 %v260
    %291 = vmatpush1.msra.mxu0 %v259
    %292 = vmatprep.subr.mxu0 %v262
    %293 = vmatpush1.msra.mxu0 %v261
    %294 = vmatprep.subr.mxu0 %v264
    %295 = vmatpush1.msra.mxu0 %v263
    %296 = vmatprep.subr.mxu0 0.0
    %297 = vmatpush1.msra.mxu0 0.0
    %298 = vmatprep.subr.mxu0 0.0
    %299 = vmatpush1.msra.mxu0 0.0
    %300 = vmatprep.subr.mxu0 0.0
    %301 = vmatpush1.msra.mxu0 0.0
    %302 = vmatprep.subr.mxu0 0.0
    %303 = vmatpush1.msra.mxu0 0.0
    %304 = vmatprep.subr.mxu0 0.0
    %305 = vmatpush1.msra.mxu0 0.0
    %306 = vmatprep.subr.mxu0 0.0
    %307 = vmatpush1.msra.mxu0 0.0
    %308 = vmatprep.subr.mxu0 0.0
    %309 = vmatpush1.msra.mxu0 0.0
    %310 = vmatprep.subr.mxu0 0.0
    %311 = vmatpush1.msra.mxu0 0.0
    %312 = vmatprep.subr.mxu0 0.0
    %313 = vmatpush1.msra.mxu0 0.0
    %314 = vmatprep.subr.mxu0 0.0
    %315 = vmatpush1.msra.mxu0 0.0
    %316 = vmatprep.subr.mxu0 0.0
    %317 = vmatpush1.msra.mxu0 0.0
    %318 = vmatprep.subr.mxu0 0.0
    %319 = vmatpush1.msra.mxu0 0.0
    %320 = vmatprep.subr.mxu0 0.0
    %321 = vmatpush1.msra.mxu0 0.0
    %322 = vmatprep.subr.mxu0 0.0
    %323 = vmatpush1.msra.mxu0 0.0
    %324 = vmatprep.subr.mxu0 0.0
    %325 = vmatpush1.msra.mxu0 0.0
    %326 = vmatprep.subr.mxu0 0.0
    %327 = vmatpush1.msra.mxu0 0.0
    %328 = vmatprep.subr.mxu0 0.0
    %329 = vmatpush1.msra.mxu0 0.0
    %330 = vmatprep.subr.mxu0 0.0
    %331 = vmatpush1.msra.mxu0 0.0
    %332 = vmatprep.subr.mxu0 0.0
    %333 = vmatpush1.msra.mxu0 0.0
    %334 = vmatprep.subr.mxu0 0.0
    %335 = vmatpush1.msra.mxu0 0.0
    %336 = vmatprep.subr.mxu0 0.0
    %337 = vmatpush1.msra.mxu0 0.0
    %338 = vmatprep.subr.mxu0 0.0
    %339 = vmatpush1.msra.mxu0 0.0
    %340 = vmatprep.subr.mxu0 0.0
    %341 = vmatpush1.msra.mxu0 0.0
    %342 = vmatprep.subr.mxu0 0.0
    %343 = vmatpush1.msra.mxu0 0.0
    %344 = vmatprep.mubr.f32.mxu0 0.0
    %345 = vmatmul.mubr.f32.gmra.mrb[0].mxu0 %v266
    %v346 = vpop.f32.mrb[0].mxu0
    %v347 = vadd.f32 0.0, %v346
    %v348 = vpop.f32.mrb[0].mxu0
    %v349 = vadd.f32 0.0, %v348
    %350 = vmatprep.mubr.f32.mxu0 0.0
    %351 = vmatmul.mubr.f32.gmra.mrb[0].mxu0 %v269
    %v352 = vpop.f32.mrb[0].mxu0
    %v353 = vadd.f32 0.0, %v352
    %v354 = vpop.f32.mrb[0].mxu0
    %v355 = vadd.f32 0.0, %v354
    %356 = vmatprep.mubr.f32.mxu0 0.0
    %357 = vmatmul.mubr.f32.gmra.mrb[0].mxu0 %v272
    %v358 = vpop.f32.mrb[0].mxu0
    %v359 = vadd.f32 0.0, %v358
    %v360 = vpop.f32.mrb[0].mxu0
    %v361 = vadd.f32 0.0, %v360
    %362 = vmatprep.mubr.f32.mxu0 0.0
    %363 = vmatmul.mubr.f32.gmra.mrb[0].mxu0 %v275
    %v364 = vpop.f32.mrb[0].mxu0
    %v365 = vadd.f32 0.0, %v364
    %v366 = vpop.f32.mrb[0].mxu0
    %v367 = vadd.f32 0.0, %v366
    %368 = vmatprep.mubr.f32.mxu0 0.0
    %369 = vmatmul.mubr.f32.gmra.mrb[0].mxu0 %v278
    %v370 = vpop.f32.mrb[0].mxu0
    %v371 = vadd.f32 0.0, %v370
    %v372 = vpop.f32.mrb[0].mxu0
    %v373 = vadd.f32 0.0, %v372
    %374 = vdwg.mxu0
    %v375 = vadd.f32 %v215, %v347
    %v376 = vadd.f32 %v217, %v349
    %v377 = vadd.f32 %v221, %v353
    %v378 = vadd.f32 %v223, %v355
    %v379 = vadd.f32 %v227, %v359
    %v380 = vadd.f32 %v229, %v361
    %v381 = vadd.f32 %v233, %v365
    %v382 = vadd.f32 %v235, %v367
    %v383 = vadd.f32 %v239, %v371
    %v384 = vadd.f32 %v241, %v373
    %v385 = vld [vmem:[%s0 + $0x2] sm:$0xff]
    %v386 = vld [vmem:[%s0 + $0xa] sm:$0xff]
    %v387 = vld [vmem:[%s0 + $0x12] sm:$0xff]
    %v388 = vld [vmem:[%s0 + $0x1a] sm:$0xff]
    %v389 = vld [vmem:[%s0 + $0x22] sm:$0xff]
    %s390 = scalar_lea.vmem %s1, 256
    %v391 = vld [vmem:[%s390] sm:$0xff]
    %v392 = vld [vmem:[%s390 + $0x8] sm:$0xff]
    %v393 = vld [vmem:[%s390 + $0x10] sm:$0xff]
    %v394 = vld [vmem:[%s390 + $0x18] sm:$0xff]
    %v395 = vld [vmem:[%s390 + $0x20] sm:$0xff]
    %v396 = vld [vmem:[%s390 + $0x28] sm:$0xff]
    %v397 = vld [vmem:[%s390 + $0x30] sm:$0xff]
    %v398 = vld [vmem:[%s390 + $0x38] sm:$0xff]
    %v399 = vld [vmem:[%s390 + $0x40] sm:$0xff]
    %v400 = vld [vmem:[%s390 + $0x48] sm:$0xff]
    %v401 = vld [vmem:[%s390 + $0x50] sm:$0xff]
    %v402 = vld [vmem:[%s390 + $0x58] sm:$0xff]
    %v403 = vld [vmem:[%s390 + $0x60] sm:$0xff]
    %v404 = vld [vmem:[%s390 + $0x68] sm:$0xff]
    %v405 = vld [vmem:[%s390 + $0x70] sm:$0xff]
    %v406 = vld [vmem:[%s390 + $0x78] sm:$0xff]
    %v408 = vsel %vm132, %v385, 0
    %v411 = vsel %vm132, %v386, 0
    %v414 = vsel %vm132, %v387, 0
    %v417 = vsel %vm132, %v388, 0
    %v420 = vsel %vm132, %v389, 0
    %422 = vmatprep.subr.mxu0 %v392
    %423 = vmatpush1.msra.mxu0 %v391
    %424 = vmatprep.subr.mxu0 %v394
    %425 = vmatpush1.msra.mxu0 %v393
    %426 = vmatprep.subr.mxu0 %v396
    %427 = vmatpush1.msra.mxu0 %v395
    %428 = vmatprep.subr.mxu0 %v398
    %429 = vmatpush1.msra.mxu0 %v397
    %430 = vmatprep.subr.mxu0 %v400
    %431 = vmatpush1.msra.mxu0 %v399
    %432 = vmatprep.subr.mxu0 %v402
    %433 = vmatpush1.msra.mxu0 %v401
    %434 = vmatprep.subr.mxu0 %v404
    %435 = vmatpush1.msra.mxu0 %v403
    %436 = vmatprep.subr.mxu0 %v406
    %437 = vmatpush1.msra.mxu0 %v405
    %438 = vmatprep.subr.mxu0 0.0
    %439 = vmatpush1.msra.mxu0 0.0
    %440 = vmatprep.subr.mxu0 0.0
    %441 = vmatpush1.msra.mxu0 0.0
    %442 = vmatprep.subr.mxu0 0.0
    %443 = vmatpush1.msra.mxu0 0.0
    %444 = vmatprep.subr.mxu0 0.0
    %445 = vmatpush1.msra.mxu0 0.0
    %446 = vmatprep.subr.mxu0 0.0
    %447 = vmatpush1.msra.mxu0 0.0
    %448 = vmatprep.subr.mxu0 0.0
    %449 = vmatpush1.msra.mxu0 0.0
    %450 = vmatprep.subr.mxu0 0.0
    %451 = vmatpush1.msra.mxu0 0.0
    %452 = vmatprep.subr.mxu0 0.0
    %453 = vmatpush1.msra.mxu0 0.0
    %454 = vmatprep.subr.mxu0 0.0
    %455 = vmatpush1.msra.mxu0 0.0
    %456 = vmatprep.subr.mxu0 0.0
    %457 = vmatpush1.msra.mxu0 0.0
    %458 = vmatprep.subr.mxu0 0.0
    %459 = vmatpush1.msra.mxu0 0.0
    %460 = vmatprep.subr.mxu0 0.0
    %461 = vmatpush1.msra.mxu0 0.0
    %462 = vmatprep.subr.mxu0 0.0
    %463 = vmatpush1.msra.mxu0 0.0
    %464 = vmatprep.subr.mxu0 0.0
    %465 = vmatpush1.msra.mxu0 0.0
    %466 = vmatprep.subr.mxu0 0.0
    %467 = vmatpush1.msra.mxu0 0.0
    %468 = vmatprep.subr.mxu0 0.0
    %469 = vmatpush1.msra.mxu0 0.0
    %470 = vmatprep.subr.mxu0 0.0
    %471 = vmatpush1.msra.mxu0 0.0
    %472 = vmatprep.subr.mxu0 0.0
    %473 = vmatpush1.msra.mxu0 0.0
    %474 = vmatprep.subr.mxu0 0.0
    %475 = vmatpush1.msra.mxu0 0.0
    %476 = vmatprep.subr.mxu0 0.0
    %477 = vmatpush1.msra.mxu0 0.0
    %478 = vmatprep.subr.mxu0 0.0
    %479 = vmatpush1.msra.mxu0 0.0
    %480 = vmatprep.subr.mxu0 0.0
    %481 = vmatpush1.msra.mxu0 0.0
    %482 = vmatprep.subr.mxu0 0.0
    %483 = vmatpush1.msra.mxu0 0.0
    %484 = vmatprep.subr.mxu0 0.0
    %485 = vmatpush1.msra.mxu0 0.0
    %486 = vmatprep.mubr.f32.mxu0 0.0
    %487 = vmatmul.mubr.f32.gmra.mrb[0].mxu0 %v408
    %v488 = vpop.f32.mrb[0].mxu0
    %v489 = vadd.f32 0.0, %v488
    %v490 = vpop.f32.mrb[0].mxu0
    %v491 = vadd.f32 0.0, %v490
    %492 = vmatprep.mubr.f32.mxu0 0.0
    %493 = vmatmul.mubr.f32.gmra.mrb[0].mxu0 %v411
    %v494 = vpop.f32.mrb[0].mxu0
    %v495 = vadd.f32 0.0, %v494
    %v496 = vpop.f32.mrb[0].mxu0
    %v497 = vadd.f32 0.0, %v496
    %498 = vmatprep.mubr.f32.mxu0 0.0
    %499 = vmatmul.mubr.f32.gmra.mrb[0].mxu0 %v414
    %v500 = vpop.f32.mrb[0].mxu0
    %v501 = vadd.f32 0.0, %v500
    %v502 = vpop.f32.mrb[0].mxu0
    %v503 = vadd.f32 0.0, %v502
    %504 = vmatprep.mubr.f32.mxu0 0.0
    %505 = vmatmul.mubr.f32.gmra.mrb[0].mxu0 %v417
    %v506 = vpop.f32.mrb[0].mxu0
    %v507 = vadd.f32 0.0, %v506
    %v508 = vpop.f32.mrb[0].mxu0
    %v509 = vadd.f32 0.0, %v508
    %510 = vmatprep.mubr.f32.mxu0 0.0
    %511 = vmatmul.mubr.f32.gmra.mrb[0].mxu0 %v420
    %v512 = vpop.f32.mrb[0].mxu0
    %v513 = vadd.f32 0.0, %v512
    %v514 = vpop.f32.mrb[0].mxu0
    %v515 = vadd.f32 0.0, %v514
    %516 = vdwg.mxu0
    %v517 = vadd.f32 %v375, %v489
    %v518 = vadd.f32 %v376, %v491
    %v519 = vadd.f32 %v377, %v495
    %v520 = vadd.f32 %v378, %v497
    %v521 = vadd.f32 %v379, %v501
    %v522 = vadd.f32 %v380, %v503
    %v523 = vadd.f32 %v381, %v507
    %v524 = vadd.f32 %v382, %v509
    %v525 = vadd.f32 %v383, %v513
    %v526 = vadd.f32 %v384, %v515
    %v527 = vld [vmem:[%s0 + $0x3] sm:$0xff]
    %v528 = vld [vmem:[%s0 + $0xb] sm:$0xff]
    %v529 = vld [vmem:[%s0 + $0x13] sm:$0xff]
    %v530 = vld [vmem:[%s0 + $0x1b] sm:$0xff]
    %v531 = vld [vmem:[%s0 + $0x23] sm:$0xff]
    %s532 = scalar_lea.vmem %s1, 384
    %v533 = vld [vmem:[%s532] sm:$0xff]
    %v534 = vld [vmem:[%s532 + $0x8] sm:$0xff]
    %v535 = vld [vmem:[%s532 + $0x10] sm:$0xff]
    %v536 = vld [vmem:[%s532 + $0x18] sm:$0xff]
    %v537 = vld [vmem:[%s532 + $0x20] sm:$0xff]
    %v538 = vld [vmem:[%s532 + $0x28] sm:$0xff]
    %v539 = vld [vmem:[%s532 + $0x30] sm:$0xff]
    %v540 = vld [vmem:[%s532 + $0x38] sm:$0xff]
    %v541 = vld [vmem:[%s532 + $0x40] sm:$0xff]
    %v542 = vld [vmem:[%s532 + $0x48] sm:$0xff]
    %v543 = vld [vmem:[%s532 + $0x50] sm:$0xff]
    %v544 = vld [vmem:[%s532 + $0x58] sm:$0xff]
    %v545 = vld [vmem:[%s532 + $0x60] sm:$0xff]
    %v546 = vld [vmem:[%s532 + $0x68] sm:$0xff]
    %v547 = vld [vmem:[%s532 + $0x70] sm:$0xff]
    %v548 = vld [vmem:[%s532 + $0x78] sm:$0xff]
    %v550 = vsel %vm132, %v527, 0
    %v553 = vsel %vm132, %v528, 0
    %v556 = vsel %vm132, %v529, 0
    %v559 = vsel %vm132, %v530, 0
    %v562 = vsel %vm132, %v531, 0
    %564 = vmatprep.subr.mxu0 %v534
    %565 = vmatpush1.msra.mxu0 %v533
    %566 = vmatprep.subr.mxu0 %v536
    %567 = vmatpush1.msra.mxu0 %v535
    %568 = vmatprep.subr.mxu0 %v538
    %569 = vmatpush1.msra.mxu0 %v537
    %570 = vmatprep.subr.mxu0 %v540
    %571 = vmatpush1.msra.mxu0 %v539
    %572 = vmatprep.subr.mxu0 %v542
    %573 = vmatpush1.msra.mxu0 %v541
    %574 = vmatprep.subr.mxu0 %v544
    %575 = vmatpush1.msra.mxu0 %v543
    %576 = vmatprep.subr.mxu0 %v546
    %577 = vmatpush1.msra.mxu0 %v545
    %578 = vmatprep.subr.mxu0 %v548
    %579 = vmatpush1.msra.mxu0 %v547
    %580 = vmatprep.subr.mxu0 0.0
    %581 = vmatpush1.msra.mxu0 0.0
    %582 = vmatprep.subr.mxu0 0.0
    %583 = vmatpush1.msra.mxu0 0.0
    %584 = vmatprep.subr.mxu0 0.0
    %585 = vmatpush1.msra.mxu0 0.0
    %586 = vmatprep.subr.mxu0 0.0
    %587 = vmatpush1.msra.mxu0 0.0
    %588 = vmatprep.subr.mxu0 0.0
    %589 = vmatpush1.msra.mxu0 0.0
    %590 = vmatprep.subr.mxu0 0.0
    %591 = vmatpush1.msra.mxu0 0.0
    %592 = vmatprep.subr.mxu0 0.0
    %593 = vmatpush1.msra.mxu0 0.0
    %594 = vmatprep.subr.mxu0 0.0
    %595 = vmatpush1.msra.mxu0 0.0
    %596 = vmatprep.subr.mxu0 0.0
    %597 = vmatpush1.msra.mxu0 0.0
    %598 = vmatprep.subr.mxu0 0.0
    %599 = vmatpush1.msra.mxu0 0.0
    %600 = vmatprep.subr.mxu0 0.0
    %601 = vmatpush1.msra.mxu0 0.0
    %602 = vmatprep.subr.mxu0 0.0
    %603 = vmatpush1.msra.mxu0 0.0
    %604 = vmatprep.subr.mxu0 0.0
    %605 = vmatpush1.msra.mxu0 0.0
    %606 = vmatprep.subr.mxu0 0.0
    %607 = vmatpush1.msra.mxu0 0.0
    %608 = vmatprep.subr.mxu0 0.0
    %609 = vmatpush1.msra.mxu0 0.0
    %610 = vmatprep.subr.mxu0 0.0
    %611 = vmatpush1.msra.mxu0 0.0
    %612 = vmatprep.subr.mxu0 0.0
    %613 = vmatpush1.msra.mxu0 0.0
    %614 = vmatprep.subr.mxu0 0.0
    %615 = vmatpush1.msra.mxu0 0.0
    %616 = vmatprep.subr.mxu0 0.0
    %617 = vmatpush1.msra.mxu0 0.0
    %618 = vmatprep.subr.mxu0 0.0
    %619 = vmatpush1.msra.mxu0 0.0
    %620 = vmatprep.subr.mxu0 0.0
    %621 = vmatpush1.msra.mxu0 0.0
    %622 = vmatprep.subr.mxu0 0.0
    %623 = vmatpush1.msra.mxu0 0.0
    %624 = vmatprep.subr.mxu0 0.0
    %625 = vmatpush1.msra.mxu0 0.0
    %626 = vmatprep.subr.mxu0 0.0
    %627 = vmatpush1.msra.mxu0 0.0
    %628 = vmatprep.mubr.f32.mxu0 0.0
    %629 = vmatmul.mubr.f32.gmra.mrb[0].mxu0 %v550
    %v630 = vpop.f32.mrb[0].mxu0
    %v631 = vadd.f32 0.0, %v630
    %v632 = vpop.f32.mrb[0].mxu0
    %v633 = vadd.f32 0.0, %v632
    %634 = vmatprep.mubr.f32.mxu0 0.0
    %635 = vmatmul.mubr.f32.gmra.mrb[0].mxu0 %v553
    %v636 = vpop.f32.mrb[0].mxu0
    %v637 = vadd.f32 0.0, %v636
    %v638 = vpop.f32.mrb[0].mxu0
    %v639 = vadd.f32 0.0, %v638
    %640 = vmatprep.mubr.f32.mxu0 0.0
    %641 = vmatmul.mubr.f32.gmra.mrb[0].mxu0 %v556
    %v642 = vpop.f32.mrb[0].mxu0
    %v643 = vadd.f32 0.0, %v642
    %v644 = vpop.f32.mrb[0].mxu0
    %v645 = vadd.f32 0.0, %v644
    %646 = vmatprep.mubr.f32.mxu0 0.0
    %647 = vmatmul.mubr.f32.gmra.mrb[0].mxu0 %v559
    %v648 = vpop.f32.mrb[0].mxu0
    %v649 = vadd.f32 0.0, %v648
    %v650 = vpop.f32.mrb[0].mxu0
    %v651 = vadd.f32 0.0, %v650
    %652 = vmatprep.mubr.f32.mxu0 0.0
    %653 = vmatmul.mubr.f32.gmra.mrb[0].mxu0 %v562
    %v654 = vpop.f32.mrb[0].mxu0
    %v655 = vadd.f32 0.0, %v654
    %v656 = vpop.f32.mrb[0].mxu0
    %v657 = vadd.f32 0.0, %v656
    %658 = vdwg.mxu0
    %v659 = vadd.f32 %v517, %v631
    %v660 = vadd.f32 %v518, %v633
    %v661 = vadd.f32 %v519, %v637
    %v662 = vadd.f32 %v520, %v639
    %v663 = vadd.f32 %v521, %v643
    %v664 = vadd.f32 %v522, %v645
    %v665 = vadd.f32 %v523, %v649
    %v666 = vadd.f32 %v524, %v651
    %v667 = vadd.f32 %v525, %v655
    %v668 = vadd.f32 %v526, %v657
    %v669 = vld [vmem:[%s0 + $0x4] sm:$0xff]
    %v670 = vld [vmem:[%s0 + $0xc] sm:$0xff]
    %v671 = vld [vmem:[%s0 + $0x14] sm:$0xff]
    %v672 = vld [vmem:[%s0 + $0x1c] sm:$0xff]
    %v673 = vld [vmem:[%s0 + $0x24] sm:$0xff]
    %s674 = scalar_lea.vmem %s1, 512
    %v675 = vld [vmem:[%s674] sm:$0xff]
    %v676 = vld [vmem:[%s674 + $0x8] sm:$0xff]
    %v677 = vld [vmem:[%s674 + $0x10] sm:$0xff]
    %v678 = vld [vmem:[%s674 + $0x18] sm:$0xff]
    %v679 = vld [vmem:[%s674 + $0x20] sm:$0xff]
    %v680 = vld [vmem:[%s674 + $0x28] sm:$0xff]
    %v681 = vld [vmem:[%s674 + $0x30] sm:$0xff]
    %v682 = vld [vmem:[%s674 + $0x38] sm:$0xff]
    %v683 = vld [vmem:[%s674 + $0x40] sm:$0xff]
    %v684 = vld [vmem:[%s674 + $0x48] sm:$0xff]
    %v685 = vld [vmem:[%s674 + $0x50] sm:$0xff]
    %v686 = vld [vmem:[%s674 + $0x58] sm:$0xff]
    %v687 = vld [vmem:[%s674 + $0x60] sm:$0xff]
    %v688 = vld [vmem:[%s674 + $0x68] sm:$0xff]
    %v689 = vld [vmem:[%s674 + $0x70] sm:$0xff]
    %v690 = vld [vmem:[%s674 + $0x78] sm:$0xff]
    %v692 = vsel %vm132, %v669, 0
    %v695 = vsel %vm132, %v670, 0
    %v698 = vsel %vm132, %v671, 0
    %v701 = vsel %vm132, %v672, 0
    %v704 = vsel %vm132, %v673, 0
    %706 = vmatprep.subr.mxu0 %v676
    %707 = vmatpush1.msra.mxu0 %v675
    %708 = vmatprep.subr.mxu0 %v678
    %709 = vmatpush1.msra.mxu0 %v677
    %710 = vmatprep.subr.mxu0 %v680
    %711 = vmatpush1.msra.mxu0 %v679
    %712 = vmatprep.subr.mxu0 %v682
    %713 = vmatpush1.msra.mxu0 %v681
    %714 = vmatprep.subr.mxu0 %v684
    %715 = vmatpush1.msra.mxu0 %v683
    %716 = vmatprep.subr.mxu0 %v686
    %717 = vmatpush1.msra.mxu0 %v685
    %718 = vmatprep.subr.mxu0 %v688
    %719 = vmatpush1.msra.mxu0 %v687
    %720 = vmatprep.subr.mxu0 %v690
    %721 = vmatpush1.msra.mxu0 %v689
    %722 = vmatprep.subr.mxu0 0.0
    %723 = vmatpush1.msra.mxu0 0.0
    %724 = vmatprep.subr.mxu0 0.0
    %725 = vmatpush1.msra.mxu0 0.0
    %726 = vmatprep.subr.mxu0 0.0
    %727 = vmatpush1.msra.mxu0 0.0
    %728 = vmatprep.subr.mxu0 0.0
    %729 = vmatpush1.msra.mxu0 0.0
    %730 = vmatprep.subr.mxu0 0.0
    %731 = vmatpush1.msra.mxu0 0.0
    %732 = vmatprep.subr.mxu0 0.0
    %733 = vmatpush1.msra.mxu0 0.0
    %734 = vmatprep.subr.mxu0 0.0
    %735 = vmatpush1.msra.mxu0 0.0
    %736 = vmatprep.subr.mxu0 0.0
    %737 = vmatpush1.msra.mxu0 0.0
    %738 = vmatprep.subr.mxu0 0.0
    %739 = vmatpush1.msra.mxu0 0.0
    %740 = vmatprep.subr.mxu0 0.0
    %741 = vmatpush1.msra.mxu0 0.0
    %742 = vmatprep.subr.mxu0 0.0
    %743 = vmatpush1.msra.mxu0 0.0
    %744 = vmatprep.subr.mxu0 0.0
    %745 = vmatpush1.msra.mxu0 0.0
    %746 = vmatprep.subr.mxu0 0.0
    %747 = vmatpush1.msra.mxu0 0.0
    %748 = vmatprep.subr.mxu0 0.0
    %749 = vmatpush1.msra.mxu0 0.0
    %750 = vmatprep.subr.mxu0 0.0
    %751 = vmatpush1.msra.mxu0 0.0
    %752 = vmatprep.subr.mxu0 0.0
    %753 = vmatpush1.msra.mxu0 0.0
    %754 = vmatprep.subr.mxu0 0.0
    %755 = vmatpush1.msra.mxu0 0.0
    %756 = vmatprep.subr.mxu0 0.0
    %757 = vmatpush1.msra.mxu0 0.0
    %758 = vmatprep.subr.mxu0 0.0
    %759 = vmatpush1.msra.mxu0 0.0
    %760 = vmatprep.subr.mxu0 0.0
    %761 = vmatpush1.msra.mxu0 0.0
    %762 = vmatprep.subr.mxu0 0.0
    %763 = vmatpush1.msra.mxu0 0.0
    %764 = vmatprep.subr.mxu0 0.0
    %765 = vmatpush1.msra.mxu0 0.0
    %766 = vmatprep.subr.mxu0 0.0
    %767 = vmatpush1.msra.mxu0 0.0
    %768 = vmatprep.subr.mxu0 0.0
    %769 = vmatpush1.msra.mxu0 0.0
    %770 = vmatprep.mubr.f32.mxu0 0.0
    %771 = vmatmul.mubr.f32.gmra.mrb[0].mxu0 %v692
    %v772 = vpop.f32.mrb[0].mxu0
    %v773 = vadd.f32 0.0, %v772
    %v774 = vpop.f32.mrb[0].mxu0
    %v775 = vadd.f32 0.0, %v774
    %776 = vmatprep.mubr.f32.mxu0 0.0
    %777 = vmatmul.mubr.f32.gmra.mrb[0].mxu0 %v695
    %v778 = vpop.f32.mrb[0].mxu0
    %v779 = vadd.f32 0.0, %v778
    %v780 = vpop.f32.mrb[0].mxu0
    %v781 = vadd.f32 0.0, %v780
    %782 = vmatprep.mubr.f32.mxu0 0.0
    %783 = vmatmul.mubr.f32.gmra.mrb[0].mxu0 %v698
    %v784 = vpop.f32.mrb[0].mxu0
    %v785 = vadd.f32 0.0, %v784
    %v786 = vpop.f32.mrb[0].mxu0
    %v787 = vadd.f32 0.0, %v786
    %788 = vmatprep.mubr.f32.mxu0 0.0
    %789 = vmatmul.mubr.f32.gmra.mrb[0].mxu0 %v701
    %v790 = vpop.f32.mrb[0].mxu0
    %v791 = vadd.f32 0.0, %v790
    %v792 = vpop.f32.mrb[0].mxu0
    %v793 = vadd.f32 0.0, %v792
    %794 = vmatprep.mubr.f32.mxu0 0.0
    %795 = vmatmul.mubr.f32.gmra.mrb[0].mxu0 %v704
    %v796 = vpop.f32.mrb[0].mxu0
    %v797 = vadd.f32 0.0, %v796
    %v798 = vpop.f32.mrb[0].mxu0
    %v799 = vadd.f32 0.0, %v798
    %800 = vdwg.mxu0
    %v801 = vadd.f32 %v659, %v773
    %v802 = vadd.f32 %v660, %v775
    %v803 = vadd.f32 %v661, %v779
    %v804 = vadd.f32 %v662, %v781
    %v805 = vadd.f32 %v663, %v785
    %v806 = vadd.f32 %v664, %v787
    %v807 = vadd.f32 %v665, %v791
    %v808 = vadd.f32 %v666, %v793
    %v809 = vadd.f32 %v667, %v797
    %v810 = vadd.f32 %v668, %v799
    %v811 = vmax.f32 %v801, 0.0
    %v812 = vmax.f32 %v802, 0.0
    %v813 = vmax.f32 %v803, 0.0
    %v814 = vmax.f32 %v804, 0.0
    %v815 = vmax.f32 %v805, 0.0
    %v816 = vmax.f32 %v806, 0.0
    %v817 = vmax.f32 %v807, 0.0
    %v818 = vmax.f32 %v808, 0.0
    %v819 = vmax.f32 %v809, 0.0
    %v820 = vmax.f32 %v810, 0.0
    %822 = vset.pattern.permute.xlu0 0
    %823 = vperm.xlu0 %822, %v86
    %v824 = vpop.permute.xlu0 %823
    %827 = vset.pattern.permute.xlu0 0
    %828 = vperm.xlu0 %827, %v87
    %v829 = vpop.permute.xlu0 %828
    %832 = vset.pattern.permute.xlu0 0
    %833 = vperm.xlu0 %832, %v88
    %v834 = vpop.permute.xlu0 %833
    %837 = vset.pattern.permute.xlu0 0
    %838 = vperm.xlu0 %837, %v89
    %v839 = vpop.permute.xlu0 %838
    %842 = vset.pattern.permute.xlu0 0
    %843 = vperm.xlu0 %842, %v90
    %v844 = vpop.permute.xlu0 %843
    %v846 = vmul.f32 %v811, %v824
    %v847 = vmul.f32 %v812, %v824
    %v848 = vmul.f32 %v813, %v829
    %v849 = vmul.f32 %v814, %v829
    %v850 = vmul.f32 %v815, %v834
    %v851 = vmul.f32 %v816, %v834
    %v852 = vmul.f32 %v817, %v839
    %v853 = vmul.f32 %v818, %v839
    %v854 = vmul.f32 %v819, %v844
    %v855 = vmul.f32 %v820, %v844
    %vm866 = vcmask 1041408
    %v867 = vrot.slane %v846, 6
    %v868 = vrot.slane %v847, 6
    %v869 = vrot.slane %v848, 6
    %v870 = vsel %vm866, %v867, %v869
    %v871 = vrot.slane %v849, 6
    %v872 = vsel %vm866, %v868, %v871
    %v873 = vrot.slane %v850, 6
    %v874 = vsel %vm866, %v869, %v873
    %v875 = vrot.slane %v851, 6
    %v876 = vsel %vm866, %v871, %v875
    %v877 = vrot.slane %v852, 6
    %v878 = vsel %vm866, %v873, %v877
    %v879 = vrot.slane %v853, 6
    %v880 = vsel %vm866, %v875, %v879
    %v881 = vrot.slane %v854, 6
    %v882 = vsel %vm866, %v877, %v881
    %v883 = vrot.slane %v855, 6
    %v884 = vsel %vm866, %v879, %v883
    %897 = vst [vmem:[#allocation2] sm:$0xfc] %v867
    %898 = vst [vmem:[#allocation2 + $0x8] sm:$0xfc] %v868
    %899 = vst [vmem:[#allocation2 + $0x10] sm:$0xff] %v870
    %900 = vst [vmem:[#allocation2 + $0x18] sm:$0xff] %v872
    %901 = vst [vmem:[#allocation2 + $0x20] sm:$0xff] %v874
    %902 = vst [vmem:[#allocation2 + $0x28] sm:$0xff] %v876
    %903 = vst [vmem:[#allocation2 + $0x30] sm:$0xff] %v878
    %904 = vst [vmem:[#allocation2 + $0x38] sm:$0xff] %v880
    %905 = vst [vmem:[#allocation2 + $0x40] sm:$0xff] %v882
    %906 = vst [vmem:[#allocation2 + $0x48] sm:$0xff] %v884
    %907 = vst [vmem:[#allocation2 + $0x50] sm:$0x3] %v881
    %908 = vst [vmem:[#allocation2 + $0x58] sm:$0x3] %v883
    %v909 = vld [vmem:[#allocation2] sm:$0xfe]
    %v910 = vld [vmem:[#allocation2 + $0x8] sm:$0xfe]
    %v911 = vld [vmem:[#allocation2 + $0x10] sm:$0xff]
    %v912 = vld [vmem:[#allocation2 + $0x18] sm:$0xff]
    %v913 = vld [vmem:[#allocation2 + $0x20] sm:$0xff]
    %v914 = vld [vmem:[#allocation2 + $0x28] sm:$0xff]
    %v915 = vld [vmem:[#allocation2 + $0x30] sm:$0xff]
    %v916 = vld [vmem:[#allocation2 + $0x38] sm:$0xff]
    %v917 = vld [vmem:[#allocation2 + $0x40] sm:$0xff]
    %v918 = vld [vmem:[#allocation2 + $0x48] sm:$0xff]
    %v919 = vld [vmem:[#allocation2 + $0x50] sm:$0x1]
    %v920 = vld [vmem:[#allocation2 + $0x58] sm:$0x1]
    %v921 = vld [vmem:[#allocation4] sm:$0xff]
    %v922 = vld [vmem:[#allocation4 + $0x8] sm:$0xff]
    %v923 = vld [vmem:[#allocation4 + $0x10] sm:$0xff]
    %v924 = vld [vmem:[#allocation4 + $0x18] sm:$0xff]
    %v925 = vld [vmem:[#allocation4 + $0x20] sm:$0xff]
    %v926 = vld [vmem:[#allocation4 + $0x28] sm:$0xff]
    %v927 = vld [vmem:[#allocation4 + $0x30] sm:$0xff]
    %v928 = vld [vmem:[#allocation4 + $0x38] sm:$0xff]
    %v929 = vld [vmem:[#allocation4 + $0x40] sm:$0xff]
    %v930 = vld [vmem:[#allocation4 + $0x48] sm:$0xff]
    %v931 = vld [vmem:[#allocation4 + $0x50] sm:$0xff]
    %v932 = vld [vmem:[#allocation4 + $0x58] sm:$0xff]
    %v933 = vld [vmem:[#allocation4 + $0x60] sm:$0xff]
    %v934 = vld [vmem:[#allocation4 + $0x68] sm:$0xff]
    %v935 = vld [vmem:[#allocation4 + $0x70] sm:$0xff]
    %v936 = vld [vmem:[#allocation4 + $0x78] sm:$0xff]
    %v937 = vld [vmem:[#allocation4 + $0x80] sm:$0xff]
    %v938 = vld [vmem:[#allocation4 + $0x88] sm:$0xff]
    %v939 = vld [vmem:[#allocation4 + $0x90] sm:$0xff]
    %v940 = vld [vmem:[#allocation4 + $0x98] sm:$0xff]
    %v941 = vld [vmem:[#allocation4 + $0xa0] sm:$0xff]
    %v942 = vld [vmem:[#allocation4 + $0xa8] sm:$0xff]
    %v943 = vld [vmem:[#allocation4 + $0xb0] sm:$0xff]
    %v944 = vld [vmem:[#allocation4 + $0xb8] sm:$0xff]
    %v945 = vld [vmem:[#allocation4 + $0xc0] sm:$0xff]
    %v946 = vld [vmem:[#allocation4 + $0xc8] sm:$0xff]
    %v947 = vld [vmem:[#allocation4 + $0xd0] sm:$0xff]
    %v948 = vld [vmem:[#allocation4 + $0xd8] sm:$0xff]
    %v949 = vld [vmem:[#allocation4 + $0xe0] sm:$0xff]
    %v950 = vld [vmem:[#allocation4 + $0xe8] sm:$0xff]
    %v951 = vld [vmem:[#allocation4 + $0xf0] sm:$0xff]
    %v952 = vld [vmem:[#allocation4 + $0xf8] sm:$0xff]
    %v953 = vld [vmem:[#allocation4 + $0x100] sm:$0xff]
    %v954 = vld [vmem:[#allocation4 + $0x108] sm:$0xff]
    %v955 = vld [vmem:[#allocation4 + $0x110] sm:$0xff]
    %v956 = vld [vmem:[#allocation4 + $0x118] sm:$0xff]
    %v957 = vld [vmem:[#allocation4 + $0x120] sm:$0xff]
    %v958 = vld [vmem:[#allocation4 + $0x128] sm:$0xff]
    %v959 = vld [vmem:[#allocation4 + $0x130] sm:$0xff]
    %v960 = vld [vmem:[#allocation4 + $0x138] sm:$0xff]
    %v961 = vld [vmem:[#allocation4 + $0x140] sm:$0xff]
    %v962 = vld [vmem:[#allocation4 + $0x148] sm:$0xff]
    %v963 = vld [vmem:[#allocation4 + $0x150] sm:$0xff]
    %v964 = vld [vmem:[#allocation4 + $0x158] sm:$0xff]
    %v965 = vld [vmem:[#allocation4 + $0x160] sm:$0xff]
    %v966 = vld [vmem:[#allocation4 + $0x168] sm:$0xff]
    %v967 = vld [vmem:[#allocation4 + $0x170] sm:$0xff]
    %v968 = vld [vmem:[#allocation4 + $0x178] sm:$0xff]
    %v969 = vld [vmem:[#allocation4 + $0x180] sm:$0xff]
    %v970 = vld [vmem:[#allocation4 + $0x188] sm:$0xff]
    %v971 = vld [vmem:[#allocation4 + $0x190] sm:$0xff]
    %v972 = vld [vmem:[#allocation4 + $0x198] sm:$0xff]
    %v973 = vld [vmem:[#allocation4 + $0x1a0] sm:$0xff]
    %v974 = vld [vmem:[#allocation4 + $0x1a8] sm:$0xff]
    %v975 = vld [vmem:[#allocation4 + $0x1b0] sm:$0xff]
    %v976 = vld [vmem:[#allocation4 + $0x1b8] sm:$0xff]
    %v977 = vld [vmem:[#allocation4 + $0x1c0] sm:$0xff]
    %v978 = vld [vmem:[#allocation4 + $0x1c8] sm:$0xff]
    %v979 = vld [vmem:[#allocation4 + $0x1d0] sm:$0xff]
    %v980 = vld [vmem:[#allocation4 + $0x1d8] sm:$0xff]
    %v981 = vld [vmem:[#allocation4 + $0x1e0] sm:$0xff]
    %v982 = vld [vmem:[#allocation4 + $0x1e8] sm:$0xff]
    %v983 = vld [vmem:[#allocation4 + $0x1f0] sm:$0xff]
    %v984 = vld [vmem:[#allocation4 + $0x1f8] sm:$0xff]
    %v985 = vld [vmem:[%s4] sm:$0x3]
    %v987 = vlaneseq
    %v988 = vshrl.u32 %v987, 7
    %v989 = vsub.s32 0, %v988
    %v990 = vrot.slane %v985, %v989
    %v991 = vlaneseq
    %v992 = vshrl.u32 %v991, 7
    %v993 = vsub.s32 1, %v992
    %v994 = vrot.slane %v985, %v993
    %vm1009 = vcmask 1046528
    %v1010 = vrot.slane %v909, 1
    %v1011 = vrot.slane %v911, 1
    %v1012 = vsel %vm1009, %v1010, %v1011
    %v1013 = vrot.slane %v910, 1
    %v1014 = vrot.slane %v912, 1
    %v1015 = vsel %vm1009, %v1013, %v1014
    %v1016 = vrot.slane %v913, 1
    %v1017 = vsel %vm1009, %v1011, %v1016
    %v1018 = vrot.slane %v914, 1
    %v1019 = vsel %vm1009, %v1014, %v1018
    %v1020 = vrot.slane %v915, 1
    %v1021 = vsel %vm1009, %v1016, %v1020
    %v1022 = vrot.slane %v916, 1
    %v1023 = vsel %vm1009, %v1018, %v1022
    %v1024 = vrot.slane %v917, 1
    %v1025 = vsel %vm1009, %v1020, %v1024
    %v1026 = vrot.slane %v918, 1
    %v1027 = vsel %vm1009, %v1022, %v1026
    %v1028 = vrot.slane %v919, 1
    %v1029 = vsel %vm1009, %v1024, %v1028
    %v1030 = vrot.slane %v920, 1
    %v1031 = vsel %vm1009, %v1026, %v1030
    %1042 = vmatprep.subr.mxu0 %v922
    %1043 = vmatpush1.msra.mxu0 %v921
    %1044 = vmatprep.subr.mxu0 %v924
    %1045 = vmatpush1.msra.mxu0 %v923
    %1046 = vmatprep.subr.mxu0 %v926
    %1047 = vmatpush1.msra.mxu0 %v925
    %1048 = vmatprep.subr.mxu0 %v928
    %1049 = vmatpush1.msra.mxu0 %v927
    %1050 = vmatprep.subr.mxu0 %v930
    %1051 = vmatpush1.msra.mxu0 %v929
    %1052 = vmatprep.subr.mxu0 %v932
    %1053 = vmatpush1.msra.mxu0 %v931
    %1054 = vmatprep.subr.mxu0 %v934
    %1055 = vmatpush1.msra.mxu0 %v933
    %1056 = vmatprep.subr.mxu0 %v936
    %1057 = vmatpush1.msra.mxu0 %v935
    %1058 = vmatprep.subr.mxu0 %v938
    %1059 = vmatpush1.msra.mxu0 %v937
    %1060 = vmatprep.subr.mxu0 %v940
    %1061 = vmatpush1.msra.mxu0 %v939
    %1062 = vmatprep.subr.mxu0 %v942
    %1063 = vmatpush1.msra.mxu0 %v941
    %1064 = vmatprep.subr.mxu0 %v944
    %1065 = vmatpush1.msra.mxu0 %v943
    %1066 = vmatprep.subr.mxu0 %v946
    %1067 = vmatpush1.msra.mxu0 %v945
    %1068 = vmatprep.subr.mxu0 %v948
    %1069 = vmatpush1.msra.mxu0 %v947
    %1070 = vmatprep.subr.mxu0 %v950
    %1071 = vmatpush1.msra.mxu0 %v949
    %1072 = vmatprep.subr.mxu0 %v952
    %1073 = vmatpush1.msra.mxu0 %v951
    %1074 = vmatprep.subr.mxu0 %v954
    %1075 = vmatpush1.msra.mxu0 %v953
    %1076 = vmatprep.subr.mxu0 %v956
    %1077 = vmatpush1.msra.mxu0 %v955
    %1078 = vmatprep.subr.mxu0 %v958
    %1079 = vmatpush1.msra.mxu0 %v957
    %1080 = vmatprep.subr.mxu0 %v960
    %1081 = vmatpush1.msra.mxu0 %v959
    %1082 = vmatprep.subr.mxu0 %v962
    %1083 = vmatpush1.msra.mxu0 %v961
    %1084 = vmatprep.subr.mxu0 %v964
    %1085 = vmatpush1.msra.mxu0 %v963
    %1086 = vmatprep.subr.mxu0 %v966
    %1087 = vmatpush1.msra.mxu0 %v965
    %1088 = vmatprep.subr.mxu0 %v968
    %1089 = vmatpush1.msra.mxu0 %v967
    %1090 = vmatprep.subr.mxu0 %v970
    %1091 = vmatpush1.msra.mxu0 %v969
    %1092 = vmatprep.subr.mxu0 %v972
    %1093 = vmatpush1.msra.mxu0 %v971
    %1094 = vmatprep.subr.mxu0 %v974
    %1095 = vmatpush1.msra.mxu0 %v973
    %1096 = vmatprep.subr.mxu0 %v976
    %1097 = vmatpush1.msra.mxu0 %v975
    %1098 = vmatprep.subr.mxu0 %v978
    %1099 = vmatpush1.msra.mxu0 %v977
    %1100 = vmatprep.subr.mxu0 %v980
    %1101 = vmatpush1.msra.mxu0 %v979
    %1102 = vmatprep.subr.mxu0 %v982
    %1103 = vmatpush1.msra.mxu0 %v981
    %1104 = vmatprep.subr.mxu0 %v984
    %1105 = vmatpush1.msra.mxu0 %v983
    %1106 = vmatprep.mubr.f32.mxu0 %v1015
    %1107 = vmatmul.mubr.f32.gmra.mrb[0].mxu0 %v1012
    %v1108 = vpop.f32.mrb[0].mxu0
    %v1109 = vadd.f32 %v990, %v1108
    %v1110 = vpop.f32.mrb[0].mxu0
    %v1111 = vadd.f32 %v994, %v1110
    %1112 = vmatprep.mubr.f32.mxu0 %v1019
    %1113 = vmatmul.mubr.f32.gmra.mrb[0].mxu0 %v1017
    %v1114 = vpop.f32.mrb[0].mxu0
    %v1115 = vadd.f32 %v990, %v1114
    %v1116 = vpop.f32.mrb[0].mxu0
    %v1117 = vadd.f32 %v994, %v1116
    %1118 = vmatprep.mubr.f32.mxu0 %v1023
    %1119 = vmatmul.mubr.f32.gmra.mrb[0].mxu0 %v1021
    %v1120 = vpop.f32.mrb[0].mxu0
    %v1121 = vadd.f32 %v990, %v1120
    %v1122 = vpop.f32.mrb[0].mxu0
    %v1123 = vadd.f32 %v994, %v1122
    %1124 = vmatprep.mubr.f32.mxu0 %v1027
    %1125 = vmatmul.mubr.f32.gmra.mrb[0].mxu0 %v1025
    %v1126 = vpop.f32.mrb[0].mxu0
    %v1127 = vadd.f32 %v990, %v1126
    %v1128 = vpop.f32.mrb[0].mxu0
    %v1129 = vadd.f32 %v994, %v1128
    %1130 = vmatprep.mubr.f32.mxu0 %v1031
    %1131 = vmatmul.mubr.f32.gmra.mrb[0].mxu0 %v1029
    %v1132 = vpop.f32.mrb[0].mxu0
    %v1133 = vadd.f32 %v990, %v1132
    %v1134 = vpop.f32.mrb[0].mxu0
    %v1135 = vadd.f32 %v994, %v1134
    %1136 = vdwg.mxu0
    %v1137 = vld [vmem:[#allocation2] sm:$0xfc]
    %v1138 = vld [vmem:[#allocation2 + $0x8] sm:$0xfc]
    %v1139 = vld [vmem:[#allocation2 + $0x50] sm:$0x3]
    %v1140 = vld [vmem:[#allocation2 + $0x58] sm:$0x3]
    %s1141 = scalar_lea.vmem [#allocation4], 512
    %v1142 = vld [vmem:[%s1141] sm:$0xff]
    %v1143 = vld [vmem:[%s1141 + $0x8] sm:$0xff]
    %v1144 = vld [vmem:[%s1141 + $0x10] sm:$0xff]
    %v1145 = vld [vmem:[%s1141 + $0x18] sm:$0xff]
    %v1146 = vld [vmem:[%s1141 + $0x20] sm:$0xff]
    %v1147 = vld [vmem:[%s1141 + $0x28] sm:$0xff]
    %v1148 = vld [vmem:[%s1141 + $0x30] sm:$0xff]
    %v1149 = vld [vmem:[%s1141 + $0x38] sm:$0xff]
    %v1150 = vld [vmem:[%s1141 + $0x40] sm:$0xff]
    %v1151 = vld [vmem:[%s1141 + $0x48] sm:$0xff]
    %v1152 = vld [vmem:[%s1141 + $0x50] sm:$0xff]
    %v1153 = vld [vmem:[%s1141 + $0x58] sm:$0xff]
    %v1154 = vld [vmem:[%s1141 + $0x60] sm:$0xff]
    %v1155 = vld [vmem:[%s1141 + $0x68] sm:$0xff]
    %v1156 = vld [vmem:[%s1141 + $0x70] sm:$0xff]
    %v1157 = vld [vmem:[%s1141 + $0x78] sm:$0xff]
    %v1158 = vld [vmem:[%s1141 + $0x80] sm:$0xff]
    %v1159 = vld [vmem:[%s1141 + $0x88] sm:$0xff]
    %v1160 = vld [vmem:[%s1141 + $0x90] sm:$0xff]
    %v1161 = vld [vmem:[%s1141 + $0x98] sm:$0xff]
    %v1162 = vld [vmem:[%s1141 + $0xa0] sm:$0xff]
    %v1163 = vld [vmem:[%s1141 + $0xa8] sm:$0xff]
    %v1164 = vld [vmem:[%s1141 + $0xb0] sm:$0xff]
    %v1165 = vld [vmem:[%s1141 + $0xb8] sm:$0xff]
    %v1166 = vld [vmem:[%s1141 + $0xc0] sm:$0xff]
    %v1167 = vld [vmem:[%s1141 + $0xc8] sm:$0xff]
    %v1168 = vld [vmem:[%s1141 + $0xd0] sm:$0xff]
    %v1169 = vld [vmem:[%s1141 + $0xd8] sm:$0xff]
    %v1170 = vld [vmem:[%s1141 + $0xe0] sm:$0xff]
    %v1171 = vld [vmem:[%s1141 + $0xe8] sm:$0xff]
    %v1172 = vld [vmem:[%s1141 + $0xf0] sm:$0xff]
    %v1173 = vld [vmem:[%s1141 + $0xf8] sm:$0xff]
    %v1174 = vld [vmem:[%s1141 + $0x100] sm:$0xff]
    %v1175 = vld [vmem:[%s1141 + $0x108] sm:$0xff]
    %v1176 = vld [vmem:[%s1141 + $0x110] sm:$0xff]
    %v1177 = vld [vmem:[%s1141 + $0x118] sm:$0xff]
    %v1178 = vld [vmem:[%s1141 + $0x120] sm:$0xff]
    %v1179 = vld [vmem:[%s1141 + $0x128] sm:$0xff]
    %v1180 = vld [vmem:[%s1141 + $0x130] sm:$0xff]
    %v1181 = vld [vmem:[%s1141 + $0x138] sm:$0xff]
    %v1182 = vld [vmem:[%s1141 + $0x140] sm:$0xff]
    %v1183 = vld [vmem:[%s1141 + $0x148] sm:$0xff]
    %v1184 = vld [vmem:[%s1141 + $0x150] sm:$0xff]
    %v1185 = vld [vmem:[%s1141 + $0x158] sm:$0xff]
    %v1186 = vld [vmem:[%s1141 + $0x160] sm:$0xff]
    %v1187 = vld [vmem:[%s1141 + $0x168] sm:$0xff]
    %v1188 = vld [vmem:[%s1141 + $0x170] sm:$0xff]
    %v1189 = vld [vmem:[%s1141 + $0x178] sm:$0xff]
    %v1190 = vld [vmem:[%s1141 + $0x180] sm:$0xff]
    %v1191 = vld [vmem:[%s1141 + $0x188] sm:$0xff]
    %v1192 = vld [vmem:[%s1141 + $0x190] sm:$0xff]
    %v1193 = vld [vmem:[%s1141 + $0x198] sm:$0xff]
    %v1194 = vld [vmem:[%s1141 + $0x1a0] sm:$0xff]
    %v1195 = vld [vmem:[%s1141 + $0x1a8] sm:$0xff]
    %v1196 = vld [vmem:[%s1141 + $0x1b0] sm:$0xff]
    %v1197 = vld [vmem:[%s1141 + $0x1b8] sm:$0xff]
    %v1198 = vld [vmem:[%s1141 + $0x1c0] sm:$0xff]
    %v1199 = vld [vmem:[%s1141 + $0x1c8] sm:$0xff]
    %v1200 = vld [vmem:[%s1141 + $0x1d0] sm:$0xff]
    %v1201 = vld [vmem:[%s1141 + $0x1d8] sm:$0xff]
    %v1202 = vld [vmem:[%s1141 + $0x1e0] sm:$0xff]
    %v1203 = vld [vmem:[%s1141 + $0x1e8] sm:$0xff]
    %v1204 = vld [vmem:[%s1141 + $0x1f0] sm:$0xff]
    %v1205 = vld [vmem:[%s1141 + $0x1f8] sm:$0xff]
    %vm1210 = vcmask 1045504
    %v1211 = vrot.slane %v1137, 2
    %v1212 = vrot.slane %v911, 2
    %v1213 = vsel %vm1210, %v1211, %v1212
    %v1214 = vrot.slane %v1138, 2
    %v1215 = vrot.slane %v912, 2
    %v1216 = vsel %vm1210, %v1214, %v1215
    %v1217 = vrot.slane %v913, 2
    %v1218 = vsel %vm1210, %v1212, %v1217
    %v1219 = vrot.slane %v914, 2
    %v1220 = vsel %vm1210, %v1215, %v1219
    %v1221 = vrot.slane %v915, 2
    %v1222 = vsel %vm1210, %v1217, %v1221
    %v1223 = vrot.slane %v916, 2
    %v1224 = vsel %vm1210, %v1219, %v1223
    %v1225 = vrot.slane %v917, 2
    %v1226 = vsel %vm1210, %v1221, %v1225
    %v1227 = vrot.slane %v918, 2
    %v1228 = vsel %vm1210, %v1223, %v1227
    %v1229 = vrot.slane %v1139, 2
    %v1230 = vsel %vm1210, %v1225, %v1229
    %v1231 = vrot.slane %v1140, 2
    %v1232 = vsel %vm1210, %v1227, %v1231
    %1243 = vmatprep.subr.mxu0 %v1143
    %1244 = vmatpush1.msra.mxu0 %v1142
    %1245 = vmatprep.subr.mxu0 %v1145
    %1246 = vmatpush1.msra.mxu0 %v1144
    %1247 = vmatprep.subr.mxu0 %v1147
    %1248 = vmatpush1.msra.mxu0 %v1146
    %1249 = vmatprep.subr.mxu0 %v1149
    %1250 = vmatpush1.msra.mxu0 %v1148
    %1251 = vmatprep.subr.mxu0 %v1151
    %1252 = vmatpush1.msra.mxu0 %v1150
    %1253 = vmatprep.subr.mxu0 %v1153
    %1254 = vmatpush1.msra.mxu0 %v1152
    %1255 = vmatprep.subr.mxu0 %v1155
    %1256 = vmatpush1.msra.mxu0 %v1154
    %1257 = vmatprep.subr.mxu0 %v1157
    %1258 = vmatpush1.msra.mxu0 %v1156
    %1259 = vmatprep.subr.mxu0 %v1159
    %1260 = vmatpush1.msra.mxu0 %v1158
    %1261 = vmatprep.subr.mxu0 %v1161
    %1262 = vmatpush1.msra.mxu0 %v1160
    %1263 = vmatprep.subr.mxu0 %v1163
    %1264 = vmatpush1.msra.mxu0 %v1162
    %1265 = vmatprep.subr.mxu0 %v1165
    %1266 = vmatpush1.msra.mxu0 %v1164
    %1267 = vmatprep.subr.mxu0 %v1167
    %1268 = vmatpush1.msra.mxu0 %v1166
    %1269 = vmatprep.subr.mxu0 %v1169
    %1270 = vmatpush1.msra.mxu0 %v1168
    %1271 = vmatprep.subr.mxu0 %v1171
    %1272 = vmatpush1.msra.mxu0 %v1170
    %1273 = vmatprep.subr.mxu0 %v1173
    %1274 = vmatpush1.msra.mxu0 %v1172
    %1275 = vmatprep.subr.mxu0 %v1175
    %1276 = vmatpush1.msra.mxu0 %v1174
    %1277 = vmatprep.subr.mxu0 %v1177
    %1278 = vmatpush1.msra.mxu0 %v1176
    %1279 = vmatprep.subr.mxu0 %v1179
    %1280 = vmatpush1.msra.mxu0 %v1178
    %1281 = vmatprep.subr.mxu0 %v1181
    %1282 = vmatpush1.msra.mxu0 %v1180
    %1283 = vmatprep.subr.mxu0 %v1183
    %1284 = vmatpush1.msra.mxu0 %v1182
    %1285 = vmatprep.subr.mxu0 %v1185
    %1286 = vmatpush1.msra.mxu0 %v1184
    %1287 = vmatprep.subr.mxu0 %v1187
    %1288 = vmatpush1.msra.mxu0 %v1186
    %1289 = vmatprep.subr.mxu0 %v1189
    %1290 = vmatpush1.msra.mxu0 %v1188
    %1291 = vmatprep.subr.mxu0 %v1191
    %1292 = vmatpush1.msra.mxu0 %v1190
    %1293 = vmatprep.subr.mxu0 %v1193
    %1294 = vmatpush1.msra.mxu0 %v1192
    %1295 = vmatprep.subr.mxu0 %v1195
    %1296 = vmatpush1.msra.mxu0 %v1194
    %1297 = vmatprep.subr.mxu0 %v1197
    %1298 = vmatpush1.msra.mxu0 %v1196
    %1299 = vmatprep.subr.mxu0 %v1199
    %1300 = vmatpush1.msra.mxu0 %v1198
    %1301 = vmatprep.subr.mxu0 %v1201
    %1302 = vmatpush1.msra.mxu0 %v1200
    %1303 = vmatprep.subr.mxu0 %v1203
    %1304 = vmatpush1.msra.mxu0 %v1202
    %1305 = vmatprep.subr.mxu0 %v1205
    %1306 = vmatpush1.msra.mxu0 %v1204
    %1307 = vmatprep.mubr.f32.mxu0 %v1216
    %1308 = vmatmul.mubr.f32.gmra.mrb[0].mxu0 %v1213
    %v1309 = vpop.f32.mrb[0].mxu0
    %v1310 = vadd.f32 0.0, %v1309
    %v1311 = vpop.f32.mrb[0].mxu0
    %v1312 = vadd.f32 0.0, %v1311
    %1313 = vmatprep.mubr.f32.mxu0 %v1220
    %1314 = vmatmul.mubr.f32.gmra.mrb[0].mxu0 %v1218
    %v1315 = vpop.f32.mrb[0].mxu0
    %v1316 = vadd.f32 0.0, %v1315
    %v1317 = vpop.f32.mrb[0].mxu0
    %v1318 = vadd.f32 0.0, %v1317
    %1319 = vmatprep.mubr.f32.mxu0 %v1224
    %1320 = vmatmul.mubr.f32.gmra.mrb[0].mxu0 %v1222
    %v1321 = vpop.f32.mrb[0].mxu0
    %v1322 = vadd.f32 0.0, %v1321
    %v1323 = vpop.f32.mrb[0].mxu0
    %v1324 = vadd.f32 0.0, %v1323
    %1325 = vmatprep.mubr.f32.mxu0 %v1228
    %1326 = vmatmul.mubr.f32.gmra.mrb[0].mxu0 %v1226
    %v1327 = vpop.f32.mrb[0].mxu0
    %v1328 = vadd.f32 0.0, %v1327
    %v1329 = vpop.f32.mrb[0].mxu0
    %v1330 = vadd.f32 0.0, %v1329
    %1331 = vmatprep.mubr.f32.mxu0 %v1232
    %1332 = vmatmul.mubr.f32.gmra.mrb[0].mxu0 %v1230
    %v1333 = vpop.f32.mrb[0].mxu0
    %v1334 = vadd.f32 0.0, %v1333
    %v1335 = vpop.f32.mrb[0].mxu0
    %v1336 = vadd.f32 0.0, %v1335
    %1337 = vdwg.mxu0
    %v1338 = vadd.f32 %v1109, %v1310
    %v1339 = vadd.f32 %v1111, %v1312
    %v1340 = vadd.f32 %v1115, %v1316
    %v1341 = vadd.f32 %v1117, %v1318
    %v1342 = vadd.f32 %v1121, %v1322
    %v1343 = vadd.f32 %v1123, %v1324
    %v1344 = vadd.f32 %v1127, %v1328
    %v1345 = vadd.f32 %v1129, %v1330
    %v1346 = vadd.f32 %v1133, %v1334
    %v1347 = vadd.f32 %v1135, %v1336
    %v1348 = vld [vmem:[#allocation2] sm:$0xf8]
    %v1349 = vld [vmem:[#allocation2 + $0x8] sm:$0xf8]
    %v1350 = vld [vmem:[#allocation2 + $0x50] sm:$0x7]
    %v1351 = vld [vmem:[#allocation2 + $0x58] sm:$0x7]
    %s1352 = scalar_lea.vmem [#allocation4], 1024
    %v1353 = vld [vmem:[%s1352] sm:$0xff]
    %v1354 = vld [vmem:[%s1352 + $0x8] sm:$0xff]
    %v1355 = vld [vmem:[%s1352 + $0x10] sm:$0xff]
    %v1356 = vld [vmem:[%s1352 + $0x18] sm:$0xff]
    %v1357 = vld [vmem:[%s1352 + $0x20] sm:$0xff]
    %v1358 = vld [vmem:[%s1352 + $0x28] sm:$0xff]
    %v1359 = vld [vmem:[%s1352 + $0x30] sm:$0xff]
    %v1360 = vld [vmem:[%s1352 + $0x38] sm:$0xff]
    %v1361 = vld [vmem:[%s1352 + $0x40] sm:$0xff]
    %v1362 = vld [vmem:[%s1352 + $0x48] sm:$0xff]
    %v1363 = vld [vmem:[%s1352 + $0x50] sm:$0xff]
    %v1364 = vld [vmem:[%s1352 + $0x58] sm:$0xff]
    %v1365 = vld [vmem:[%s1352 + $0x60] sm:$0xff]
    %v1366 = vld [vmem:[%s1352 + $0x68] sm:$0xff]
    %v1367 = vld [vmem:[%s1352 + $0x70] sm:$0xff]
    %v1368 = vld [vmem:[%s1352 + $0x78] sm:$0xff]
    %v1369 = vld [vmem:[%s1352 + $0x80] sm:$0xff]
    %v1370 = vld [vmem:[%s1352 + $0x88] sm:$0xff]
    %v1371 = vld [vmem:[%s1352 + $0x90] sm:$0xff]
    %v1372 = vld [vmem:[%s1352 + $0x98] sm:$0xff]
    %v1373 = vld [vmem:[%s1352 + $0xa0] sm:$0xff]
    %v1374 = vld [vmem:[%s1352 + $0xa8] sm:$0xff]
    %v1375 = vld [vmem:[%s1352 + $0xb0] sm:$0xff]
    %v1376 = vld [vmem:[%s1352 + $0xb8] sm:$0xff]
    %v1377 = vld [vmem:[%s1352 + $0xc0] sm:$0xff]
    %v1378 = vld [vmem:[%s1352 + $0xc8] sm:$0xff]
    %v1379 = vld [vmem:[%s1352 + $0xd0] sm:$0xff]
    %v1380 = vld [vmem:[%s1352 + $0xd8] sm:$0xff]
    %v1381 = vld [vmem:[%s1352 + $0xe0] sm:$0xff]
    %v1382 = vld [vmem:[%s1352 + $0xe8] sm:$0xff]
    %v1383 = vld [vmem:[%s1352 + $0xf0] sm:$0xff]
    %v1384 = vld [vmem:[%s1352 + $0xf8] sm:$0xff]
    %v1385 = vld [vmem:[%s1352 + $0x100] sm:$0xff]
    %v1386 = vld [vmem:[%s1352 + $0x108] sm:$0xff]
    %v1387 = vld [vmem:[%s1352 + $0x110] sm:$0xff]
    %v1388 = vld [vmem:[%s1352 + $0x118] sm:$0xff]
    %v1389 = vld [vmem:[%s1352 + $0x120] sm:$0xff]
    %v1390 = vld [vmem:[%s1352 + $0x128] sm:$0xff]
    %v1391 = vld [vmem:[%s1352 + $0x130] sm:$0xff]
    %v1392 = vld [vmem:[%s1352 + $0x138] sm:$0xff]
    %v1393 = vld [vmem:[%s1352 + $0x140] sm:$0xff]
    %v1394 = vld [vmem:[%s1352 + $0x148] sm:$0xff]
    %v1395 = vld [vmem:[%s1352 + $0x150] sm:$0xff]
    %v1396 = vld [vmem:[%s1352 + $0x158] sm:$0xff]
    %v1397 = vld [vmem:[%s1352 + $0x160] sm:$0xff]
    %v1398 = vld [vmem:[%s1352 + $0x168] sm:$0xff]
    %v1399 = vld [vmem:[%s1352 + $0x170] sm:$0xff]
    %v1400 = vld [vmem:[%s1352 + $0x178] sm:$0xff]
    %v1401 = vld [vmem:[%s1352 + $0x180] sm:$0xff]
    %v1402 = vld [vmem:[%s1352 + $0x188] sm:$0xff]
    %v1403 = vld [vmem:[%s1352 + $0x190] sm:$0xff]
    %v1404 = vld [vmem:[%s1352 + $0x198] sm:$0xff]
    %v1405 = vld [vmem:[%s1352 + $0x1a0] sm:$0xff]
    %v1406 = vld [vmem:[%s1352 + $0x1a8] sm:$0xff]
    %v1407 = vld [vmem:[%s1352 + $0x1b0] sm:$0xff]
    %v1408 = vld [vmem:[%s1352 + $0x1b8] sm:$0xff]
    %v1409 = vld [vmem:[%s1352 + $0x1c0] sm:$0xff]
    %v1410 = vld [vmem:[%s1352 + $0x1c8] sm:$0xff]
    %v1411 = vld [vmem:[%s1352 + $0x1d0] sm:$0xff]
    %v1412 = vld [vmem:[%s1352 + $0x1d8] sm:$0xff]
    %v1413 = vld [vmem:[%s1352 + $0x1e0] sm:$0xff]
    %v1414 = vld [vmem:[%s1352 + $0x1e8] sm:$0xff]
    %v1415 = vld [vmem:[%s1352 + $0x1f0] sm:$0xff]
    %v1416 = vld [vmem:[%s1352 + $0x1f8] sm:$0xff]
    %vm1421 = vcmask 1044480
    %v1422 = vrot.slane %v1348, 3
    %v1423 = vrot.slane %v911, 3
    %v1424 = vsel %vm1421, %v1422, %v1423
    %v1425 = vrot.slane %v1349, 3
    %v1426 = vrot.slane %v912, 3
    %v1427 = vsel %vm1421, %v1425, %v1426
    %v1428 = vrot.slane %v913, 3
    %v1429 = vsel %vm1421, %v1423, %v1428
    %v1430 = vrot.slane %v914, 3
    %v1431 = vsel %vm1421, %v1426, %v1430
    %v1432 = vrot.slane %v915, 3
    %v1433 = vsel %vm1421, %v1428, %v1432
    %v1434 = vrot.slane %v916, 3
    %v1435 = vsel %vm1421, %v1430, %v1434
    %v1436 = vrot.slane %v917, 3
    %v1437 = vsel %vm1421, %v1432, %v1436
    %v1438 = vrot.slane %v918, 3
    %v1439 = vsel %vm1421, %v1434, %v1438
    %v1440 = vrot.slane %v1350, 3
    %v1441 = vsel %vm1421, %v1436, %v1440
    %v1442 = vrot.slane %v1351, 3
    %v1443 = vsel %vm1421, %v1438, %v1442
    %1454 = vmatprep.subr.mxu0 %v1354
    %1455 = vmatpush1.msra.mxu0 %v1353
    %1456 = vmatprep.subr.mxu0 %v1356
    %1457 = vmatpush1.msra.mxu0 %v1355
    %1458 = vmatprep.subr.mxu0 %v1358
    %1459 = vmatpush1.msra.mxu0 %v1357
    %1460 = vmatprep.subr.mxu0 %v1360
    %1461 = vmatpush1.msra.mxu0 %v1359
    %1462 = vmatprep.subr.mxu0 %v1362
    %1463 = vmatpush1.msra.mxu0 %v1361
    %1464 = vmatprep.subr.mxu0 %v1364
    %1465 = vmatpush1.msra.mxu0 %v1363
    %1466 = vmatprep.subr.mxu0 %v1366
    %1467 = vmatpush1.msra.mxu0 %v1365
    %1468 = vmatprep.subr.mxu0 %v1368
    %1469 = vmatpush1.msra.mxu0 %v1367
    %1470 = vmatprep.subr.mxu0 %v1370
    %1471 = vmatpush1.msra.mxu0 %v1369
    %1472 = vmatprep.subr.mxu0 %v1372
    %1473 = vmatpush1.msra.mxu0 %v1371
    %1474 = vmatprep.subr.mxu0 %v1374
    %1475 = vmatpush1.msra.mxu0 %v1373
    %1476 = vmatprep.subr.mxu0 %v1376
    %1477 = vmatpush1.msra.mxu0 %v1375
    %1478 = vmatprep.subr.mxu0 %v1378
    %1479 = vmatpush1.msra.mxu0 %v1377
    %1480 = vmatprep.subr.mxu0 %v1380
    %1481 = vmatpush1.msra.mxu0 %v1379
    %1482 = vmatprep.subr.mxu0 %v1382
    %1483 = vmatpush1.msra.mxu0 %v1381
    %1484 = vmatprep.subr.mxu0 %v1384
    %1485 = vmatpush1.msra.mxu0 %v1383
    %1486 = vmatprep.subr.mxu0 %v1386
    %1487 = vmatpush1.msra.mxu0 %v1385
    %1488 = vmatprep.subr.mxu0 %v1388
    %1489 = vmatpush1.msra.mxu0 %v1387
    %1490 = vmatprep.subr.mxu0 %v1390
    %1491 = vmatpush1.msra.mxu0 %v1389
    %1492 = vmatprep.subr.mxu0 %v1392
    %1493 = vmatpush1.msra.mxu0 %v1391
    %1494 = vmatprep.subr.mxu0 %v1394
    %1495 = vmatpush1.msra.mxu0 %v1393
    %1496 = vmatprep.subr.mxu0 %v1396
    %1497 = vmatpush1.msra.mxu0 %v1395
    %1498 = vmatprep.subr.mxu0 %v1398
    %1499 = vmatpush1.msra.mxu0 %v1397
    %1500 = vmatprep.subr.mxu0 %v1400
    %1501 = vmatpush1.msra.mxu0 %v1399
    %1502 = vmatprep.subr.mxu0 %v1402
    %1503 = vmatpush1.msra.mxu0 %v1401
    %1504 = vmatprep.subr.mxu0 %v1404
    %1505 = vmatpush1.msra.mxu0 %v1403
    %1506 = vmatprep.subr.mxu0 %v1406
    %1507 = vmatpush1.msra.mxu0 %v1405
    %1508 = vmatprep.subr.mxu0 %v1408
    %1509 = vmatpush1.msra.mxu0 %v1407
    %1510 = vmatprep.subr.mxu0 %v1410
    %1511 = vmatpush1.msra.mxu0 %v1409
    %1512 = vmatprep.subr.mxu0 %v1412
    %1513 = vmatpush1.msra.mxu0 %v1411
    %1514 = vmatprep.subr.mxu0 %v1414
    %1515 = vmatpush1.msra.mxu0 %v1413
    %1516 = vmatprep.subr.mxu0 %v1416
    %1517 = vmatpush1.msra.mxu0 %v1415
    %1518 = vmatprep.mubr.f32.mxu0 %v1427
    %1519 = vmatmul.mubr.f32.gmra.mrb[0].mxu0 %v1424
    %v1520 = vpop.f32.mrb[0].mxu0
    %v1521 = vadd.f32 0.0, %v1520
    %v1522 = vpop.f32.mrb[0].mxu0
    %v1523 = vadd.f32 0.0, %v1522
    %1524 = vmatprep.mubr.f32.mxu0 %v1431
    %1525 = vmatmul.mubr.f32.gmra.mrb[0].mxu0 %v1429
    %v1526 = vpop.f32.mrb[0].mxu0
    %v1527 = vadd.f32 0.0, %v1526
    %v1528 = vpop.f32.mrb[0].mxu0
    %v1529 = vadd.f32 0.0, %v1528
    %1530 = vmatprep.mubr.f32.mxu0 %v1435
    %1531 = vmatmul.mubr.f32.gmra.mrb[0].mxu0 %v1433
    %v1532 = vpop.f32.mrb[0].mxu0
    %v1533 = vadd.f32 0.0, %v1532
    %v1534 = vpop.f32.mrb[0].mxu0
    %v1535 = vadd.f32 0.0, %v1534
    %1536 = vmatprep.mubr.f32.mxu0 %v1439
    %1537 = vmatmul.mubr.f32.gmra.mrb[0].mxu0 %v1437
    %v1538 = vpop.f32.mrb[0].mxu0
    %v1539 = vadd.f32 0.0, %v1538
    %v1540 = vpop.f32.mrb[0].mxu0
    %v1541 = vadd.f32 0.0, %v1540
    %1542 = vmatprep.mubr.f32.mxu0 %v1443
    %1543 = vmatmul.mubr.f32.gmra.mrb[0].mxu0 %v1441
    %v1544 = vpop.f32.mrb[0].mxu0
    %v1545 = vadd.f32 0.0, %v1544
    %v1546 = vpop.f32.mrb[0].mxu0
    %v1547 = vadd.f32 0.0, %v1546
    %1548 = vdwg.mxu0
    %v1549 = vadd.f32 %v1338, %v1521
    %v1550 = vadd.f32 %v1339, %v1523
    %v1551 = vadd.f32 %v1340, %v1527
    %v1552 = vadd.f32 %v1341, %v1529
    %v1553 = vadd.f32 %v1342, %v1533
    %v1554 = vadd.f32 %v1343, %v1535
    %v1555 = vadd.f32 %v1344, %v1539
    %v1556 = vadd.f32 %v1345, %v1541
    %v1557 = vadd.f32 %v1346, %v1545
    %v1558 = vadd.f32 %v1347, %v1547
    %v1559 = vmax.f32 %v1549, 0.0
    %v1560 = vmax.f32 %v1550, 0.0
    %v1561 = vmax.f32 %v1551, 0.0
    %v1562 = vmax.f32 %v1552, 0.0
    %v1563 = vmax.f32 %v1553, 0.0
    %v1564 = vmax.f32 %v1554, 0.0
    %v1565 = vmax.f32 %v1555, 0.0
    %v1566 = vmax.f32 %v1556, 0.0
    %v1567 = vmax.f32 %v1557, 0.0
    %v1568 = vmax.f32 %v1558, 0.0
    %v1569 = vmul.f32 %v1559, %v824
    %v1570 = vmul.f32 %v1560, %v824
    %v1571 = vmul.f32 %v1561, %v829
    %v1572 = vmul.f32 %v1562, %v829
    %v1573 = vmul.f32 %v1563, %v834
    %v1574 = vmul.f32 %v1564, %v834
    %v1575 = vmul.f32 %v1565, %v839
    %v1576 = vmul.f32 %v1566, %v839
    %v1577 = vmul.f32 %v1567, %v844
    %v1578 = vmul.f32 %v1568, %v844
    %v1589 = vrot.slane %v1569, 6
    %v1590 = vrot.slane %v1570, 6
    %v1591 = vrot.slane %v1571, 6
    %v1592 = vsel %vm866, %v1589, %v1591
    %v1593 = vrot.slane %v1572, 6
    %v1594 = vsel %vm866, %v1590, %v1593
    %v1595 = vrot.slane %v1573, 6
    %v1596 = vsel %vm866, %v1591, %v1595
    %v1597 = vrot.slane %v1574, 6
    %v1598 = vsel %vm866, %v1593, %v1597
    %v1599 = vrot.slane %v1575, 6
    %v1600 = vsel %vm866, %v1595, %v1599
    %v1601 = vrot.slane %v1576, 6
    %v1602 = vsel %vm866, %v1597, %v1601
    %v1603 = vrot.slane %v1577, 6
    %v1604 = vsel %vm866, %v1599, %v1603
    %v1605 = vrot.slane %v1578, 6
    %v1606 = vsel %vm866, %v1601, %v1605
    %1619 = vst [vmem:[#allocation3] sm:$0xfc] %v1589
    %1620 = vst [vmem:[#allocation3 + $0x8] sm:$0xfc] %v1590
    %1621 = vst [vmem:[#allocation3 + $0x10] sm:$0xff] %v1592
    %1622 = vst [vmem:[#allocation3 + $0x18] sm:$0xff] %v1594
    %1623 = vst [vmem:[#allocation3 + $0x20] sm:$0xff] %v1596
    %1624 = vst [vmem:[#allocation3 + $0x28] sm:$0xff] %v1598
    %1625 = vst [vmem:[#allocation3 + $0x30] sm:$0xff] %v1600
    %1626 = vst [vmem:[#allocation3 + $0x38] sm:$0xff] %v1602
    %1627 = vst [vmem:[#allocation3 + $0x40] sm:$0xff] %v1604
    %1628 = vst [vmem:[#allocation3 + $0x48] sm:$0xff] %v1606
    %1629 = vst [vmem:[#allocation3 + $0x50] sm:$0x3] %v1603
    %1630 = vst [vmem:[#allocation3 + $0x58] sm:$0x3] %v1605
    %v1631 = vld [vmem:[#allocation3] sm:$0xfe]
    %v1632 = vld [vmem:[#allocation3 + $0x8] sm:$0xfe]
    %v1633 = vld [vmem:[#allocation3 + $0x10] sm:$0xff]
    %v1634 = vld [vmem:[#allocation3 + $0x18] sm:$0xff]
    %v1635 = vld [vmem:[#allocation3 + $0x20] sm:$0xff]
    %v1636 = vld [vmem:[#allocation3 + $0x28] sm:$0xff]
    %v1637 = vld [vmem:[#allocation3 + $0x30] sm:$0xff]
    %v1638 = vld [vmem:[#allocation3 + $0x38] sm:$0xff]
    %v1639 = vld [vmem:[#allocation3 + $0x40] sm:$0xff]
    %v1640 = vld [vmem:[#allocation3 + $0x48] sm:$0xff]
    %v1641 = vld [vmem:[#allocation3 + $0x50] sm:$0x1]
    %v1642 = vld [vmem:[#allocation3 + $0x58] sm:$0x1]
    %v1643 = vld [vmem:[#allocation7] sm:$0xff]
    %v1644 = vld [vmem:[#allocation7 + $0x8] sm:$0xff]
    %v1645 = vld [vmem:[#allocation7 + $0x10] sm:$0xff]
    %v1646 = vld [vmem:[#allocation7 + $0x18] sm:$0xff]
    %v1647 = vld [vmem:[#allocation7 + $0x20] sm:$0xff]
    %v1648 = vld [vmem:[#allocation7 + $0x28] sm:$0xff]
    %v1649 = vld [vmem:[#allocation7 + $0x30] sm:$0xff]
    %v1650 = vld [vmem:[#allocation7 + $0x38] sm:$0xff]
    %v1651 = vld [vmem:[#allocation7 + $0x40] sm:$0xff]
    %v1652 = vld [vmem:[#allocation7 + $0x48] sm:$0xff]
    %v1653 = vld [vmem:[#allocation7 + $0x50] sm:$0xff]
    %v1654 = vld [vmem:[#allocation7 + $0x58] sm:$0xff]
    %v1655 = vld [vmem:[#allocation7 + $0x60] sm:$0xff]
    %v1656 = vld [vmem:[#allocation7 + $0x68] sm:$0xff]
    %v1657 = vld [vmem:[#allocation7 + $0x70] sm:$0xff]
    %v1658 = vld [vmem:[#allocation7 + $0x78] sm:$0xff]
    %v1659 = vld [vmem:[#allocation7 + $0x80] sm:$0xff]
    %v1660 = vld [vmem:[#allocation7 + $0x88] sm:$0xff]
    %v1661 = vld [vmem:[#allocation7 + $0x90] sm:$0xff]
    %v1662 = vld [vmem:[#allocation7 + $0x98] sm:$0xff]
    %v1663 = vld [vmem:[#allocation7 + $0xa0] sm:$0xff]
    %v1664 = vld [vmem:[#allocation7 + $0xa8] sm:$0xff]
    %v1665 = vld [vmem:[#allocation7 + $0xb0] sm:$0xff]
    %v1666 = vld [vmem:[#allocation7 + $0xb8] sm:$0xff]
    %v1667 = vld [vmem:[#allocation7 + $0xc0] sm:$0xff]
    %v1668 = vld [vmem:[#allocation7 + $0xc8] sm:$0xff]
    %v1669 = vld [vmem:[#allocation7 + $0xd0] sm:$0xff]
    %v1670 = vld [vmem:[#allocation7 + $0xd8] sm:$0xff]
    %v1671 = vld [vmem:[#allocation7 + $0xe0] sm:$0xff]
    %v1672 = vld [vmem:[#allocation7 + $0xe8] sm:$0xff]
    %v1673 = vld [vmem:[#allocation7 + $0xf0] sm:$0xff]
    %v1674 = vld [vmem:[#allocation7 + $0xf8] sm:$0xff]
    %v1675 = vld [vmem:[#allocation7 + $0x100] sm:$0xff]
    %v1676 = vld [vmem:[#allocation7 + $0x108] sm:$0xff]
    %v1677 = vld [vmem:[#allocation7 + $0x110] sm:$0xff]
    %v1678 = vld [vmem:[#allocation7 + $0x118] sm:$0xff]
    %v1679 = vld [vmem:[#allocation7 + $0x120] sm:$0xff]
    %v1680 = vld [vmem:[#allocation7 + $0x128] sm:$0xff]
    %v1681 = vld [vmem:[#allocation7 + $0x130] sm:$0xff]
    %v1682 = vld [vmem:[#allocation7 + $0x138] sm:$0xff]
    %v1683 = vld [vmem:[#allocation7 + $0x140] sm:$0xff]
    %v1684 = vld [vmem:[#allocation7 + $0x148] sm:$0xff]
    %v1685 = vld [vmem:[#allocation7 + $0x150] sm:$0xff]
    %v1686 = vld [vmem:[#allocation7 + $0x158] sm:$0xff]
    %v1687 = vld [vmem:[#allocation7 + $0x160] sm:$0xff]
    %v1688 = vld [vmem:[#allocation7 + $0x168] sm:$0xff]
    %v1689 = vld [vmem:[#allocation7 + $0x170] sm:$0xff]
    %v1690 = vld [vmem:[#allocation7 + $0x178] sm:$0xff]
    %v1691 = vld [vmem:[#allocation7 + $0x180] sm:$0xff]
    %v1692 = vld [vmem:[#allocation7 + $0x188] sm:$0xff]
    %v1693 = vld [vmem:[#allocation7 + $0x190] sm:$0xff]
    %v1694 = vld [vmem:[#allocation7 + $0x198] sm:$0xff]
    %v1695 = vld [vmem:[#allocation7 + $0x1a0] sm:$0xff]
    %v1696 = vld [vmem:[#allocation7 + $0x1a8] sm:$0xff]
    %v1697 = vld [vmem:[#allocation7 + $0x1b0] sm:$0xff]
    %v1698 = vld [vmem:[#allocation7 + $0x1b8] sm:$0xff]
    %v1699 = vld [vmem:[#allocation7 + $0x1c0] sm:$0xff]
    %v1700 = vld [vmem:[#allocation7 + $0x1c8] sm:$0xff]
    %v1701 = vld [vmem:[#allocation7 + $0x1d0] sm:$0xff]
    %v1702 = vld [vmem:[#allocation7 + $0x1d8] sm:$0xff]
    %v1703 = vld [vmem:[#allocation7 + $0x1e0] sm:$0xff]
    %v1704 = vld [vmem:[#allocation7 + $0x1e8] sm:$0xff]
    %v1705 = vld [vmem:[#allocation7 + $0x1f0] sm:$0xff]
    %v1706 = vld [vmem:[#allocation7 + $0x1f8] sm:$0xff]
    %v1707 = vld [vmem:[%s6] sm:$0x3]
    %v1709 = vlaneseq
    %v1710 = vshrl.u32 %v1709, 7
    %v1711 = vsub.s32 0, %v1710
    %v1712 = vrot.slane %v1707, %v1711
    %v1713 = vlaneseq
    %v1714 = vshrl.u32 %v1713, 7
    %v1715 = vsub.s32 1, %v1714
    %v1716 = vrot.slane %v1707, %v1715
    %v1731 = vrot.slane %v1631, 1
    %v1732 = vrot.slane %v1633, 1
    %v1733 = vsel %vm1009, %v1731, %v1732
    %v1734 = vrot.slane %v1632, 1
    %v1735 = vrot.slane %v1634, 1
    %v1736 = vsel %vm1009, %v1734, %v1735
    %v1737 = vrot.slane %v1635, 1
    %v1738 = vsel %vm1009, %v1732, %v1737
    %v1739 = vrot.slane %v1636, 1
    %v1740 = vsel %vm1009, %v1735, %v1739
    %v1741 = vrot.slane %v1637, 1
    %v1742 = vsel %vm1009, %v1737, %v1741
    %v1743 = vrot.slane %v1638, 1
    %v1744 = vsel %vm1009, %v1739, %v1743
    %v1745 = vrot.slane %v1639, 1
    %v1746 = vsel %vm1009, %v1741, %v1745
    %v1747 = vrot.slane %v1640, 1
    %v1748 = vsel %vm1009, %v1743, %v1747
    %v1749 = vrot.slane %v1641, 1
    %v1750 = vsel %vm1009, %v1745, %v1749
    %v1751 = vrot.slane %v1642, 1
    %v1752 = vsel %vm1009, %v1747, %v1751
    %1763 = vmatprep.subr.mxu0 %v1644
    %1764 = vmatpush1.msra.mxu0 %v1643
    %1765 = vmatprep.subr.mxu0 %v1646
    %1766 = vmatpush1.msra.mxu0 %v1645
    %1767 = vmatprep.subr.mxu0 %v1648
    %1768 = vmatpush1.msra.mxu0 %v1647
    %1769 = vmatprep.subr.mxu0 %v1650
    %1770 = vmatpush1.msra.mxu0 %v1649
    %1771 = vmatprep.subr.mxu0 %v1652
    %1772 = vmatpush1.msra.mxu0 %v1651
    %1773 = vmatprep.subr.mxu0 %v1654
    %1774 = vmatpush1.msra.mxu0 %v1653
    %1775 = vmatprep.subr.mxu0 %v1656
    %1776 = vmatpush1.msra.mxu0 %v1655
    %1777 = vmatprep.subr.mxu0 %v1658
    %1778 = vmatpush1.msra.mxu0 %v1657
    %1779 = vmatprep.subr.mxu0 %v1660
    %1780 = vmatpush1.msra.mxu0 %v1659
    %1781 = vmatprep.subr.mxu0 %v1662
    %1782 = vmatpush1.msra.mxu0 %v1661
    %1783 = vmatprep.subr.mxu0 %v1664
    %1784 = vmatpush1.msra.mxu0 %v1663
    %1785 = vmatprep.subr.mxu0 %v1666
    %1786 = vmatpush1.msra.mxu0 %v1665
    %1787 = vmatprep.subr.mxu0 %v1668
    %1788 = vmatpush1.msra.mxu0 %v1667
    %1789 = vmatprep.subr.mxu0 %v1670
    %1790 = vmatpush1.msra.mxu0 %v1669
    %1791 = vmatprep.subr.mxu0 %v1672
    %1792 = vmatpush1.msra.mxu0 %v1671
    %1793 = vmatprep.subr.mxu0 %v1674
    %1794 = vmatpush1.msra.mxu0 %v1673
    %1795 = vmatprep.subr.mxu0 %v1676
    %1796 = vmatpush1.msra.mxu0 %v1675
    %1797 = vmatprep.subr.mxu0 %v1678
    %1798 = vmatpush1.msra.mxu0 %v1677
    %1799 = vmatprep.subr.mxu0 %v1680
    %1800 = vmatpush1.msra.mxu0 %v1679
    %1801 = vmatprep.subr.mxu0 %v1682
    %1802 = vmatpush1.msra.mxu0 %v1681
    %1803 = vmatprep.subr.mxu0 %v1684
    %1804 = vmatpush1.msra.mxu0 %v1683
    %1805 = vmatprep.subr.mxu0 %v1686
    %1806 = vmatpush1.msra.mxu0 %v1685
    %1807 = vmatprep.subr.mxu0 %v1688
    %1808 = vmatpush1.msra.mxu0 %v1687
    %1809 = vmatprep.subr.mxu0 %v1690
    %1810 = vmatpush1.msra.mxu0 %v1689
    %1811 = vmatprep.subr.mxu0 %v1692
    %1812 = vmatpush1.msra.mxu0 %v1691
    %1813 = vmatprep.subr.mxu0 %v1694
    %1814 = vmatpush1.msra.mxu0 %v1693
    %1815 = vmatprep.subr.mxu0 %v1696
    %1816 = vmatpush1.msra.mxu0 %v1695
    %1817 = vmatprep.subr.mxu0 %v1698
    %1818 = vmatpush1.msra.mxu0 %v1697
    %1819 = vmatprep.subr.mxu0 %v1700
    %1820 = vmatpush1.msra.mxu0 %v1699
    %1821 = vmatprep.subr.mxu0 %v1702
    %1822 = vmatpush1.msra.mxu0 %v1701
    %1823 = vmatprep.subr.mxu0 %v1704
    %1824 = vmatpush1.msra.mxu0 %v1703
    %1825 = vmatprep.subr.mxu0 %v1706
    %1826 = vmatpush1.msra.mxu0 %v1705
    %1827 = vmatprep.mubr.f32.mxu0 %v1736
    %1828 = vmatmul.mubr.f32.gmra.mrb[0].mxu0 %v1733
    %v1829 = vpop.f32.mrb[0].mxu0
    %v1830 = vadd.f32 %v1712, %v1829
    %v1831 = vpop.f32.mrb[0].mxu0
    %v1832 = vadd.f32 %v1716, %v1831
    %1833 = vmatprep.mubr.f32.mxu0 %v1740
    %1834 = vmatmul.mubr.f32.gmra.mrb[0].mxu0 %v1738
    %v1835 = vpop.f32.mrb[0].mxu0
    %v1836 = vadd.f32 %v1712, %v1835
    %v1837 = vpop.f32.mrb[0].mxu0
    %v1838 = vadd.f32 %v1716, %v1837
    %1839 = vmatprep.mubr.f32.mxu0 %v1744
    %1840 = vmatmul.mubr.f32.gmra.mrb[0].mxu0 %v1742
    %v1841 = vpop.f32.mrb[0].mxu0
    %v1842 = vadd.f32 %v1712, %v1841
    %v1843 = vpop.f32.mrb[0].mxu0
    %v1844 = vadd.f32 %v1716, %v1843
    %1845 = vmatprep.mubr.f32.mxu0 %v1748
    %1846 = vmatmul.mubr.f32.gmra.mrb[0].mxu0 %v1746
    %v1847 = vpop.f32.mrb[0].mxu0
    %v1848 = vadd.f32 %v1712, %v1847
    %v1849 = vpop.f32.mrb[0].mxu0
    %v1850 = vadd.f32 %v1716, %v1849
    %1851 = vmatprep.mubr.f32.mxu0 %v1752
    %1852 = vmatmul.mubr.f32.gmra.mrb[0].mxu0 %v1750
    %v1853 = vpop.f32.mrb[0].mxu0
    %v1854 = vadd.f32 %v1712, %v1853
    %v1855 = vpop.f32.mrb[0].mxu0
    %v1856 = vadd.f32 %v1716, %v1855
    %1857 = vdwg.mxu0
    %v1858 = vld [vmem:[#allocation3] sm:$0xfc]
    %v1859 = vld [vmem:[#allocation3 + $0x8] sm:$0xfc]
    %v1860 = vld [vmem:[#allocation3 + $0x50] sm:$0x3]
    %v1861 = vld [vmem:[#allocation3 + $0x58] sm:$0x3]
    %s1862 = scalar_lea.vmem [#allocation7], 512
    %v1863 = vld [vmem:[%s1862] sm:$0xff]
    %v1864 = vld [vmem:[%s1862 + $0x8] sm:$0xff]
    %v1865 = vld [vmem:[%s1862 + $0x10] sm:$0xff]
    %v1866 = vld [vmem:[%s1862 + $0x18] sm:$0xff]
    %v1867 = vld [vmem:[%s1862 + $0x20] sm:$0xff]
    %v1868 = vld [vmem:[%s1862 + $0x28] sm:$0xff]
    %v1869 = vld [vmem:[%s1862 + $0x30] sm:$0xff]
    %v1870 = vld [vmem:[%s1862 + $0x38] sm:$0xff]
    %v1871 = vld [vmem:[%s1862 + $0x40] sm:$0xff]
    %v1872 = vld [vmem:[%s1862 + $0x48] sm:$0xff]
    %v1873 = vld [vmem:[%s1862 + $0x50] sm:$0xff]
    %v1874 = vld [vmem:[%s1862 + $0x58] sm:$0xff]
    %v1875 = vld [vmem:[%s1862 + $0x60] sm:$0xff]
    %v1876 = vld [vmem:[%s1862 + $0x68] sm:$0xff]
    %v1877 = vld [vmem:[%s1862 + $0x70] sm:$0xff]
    %v1878 = vld [vmem:[%s1862 + $0x78] sm:$0xff]
    %v1879 = vld [vmem:[%s1862 + $0x80] sm:$0xff]
    %v1880 = vld [vmem:[%s1862 + $0x88] sm:$0xff]
    %v1881 = vld [vmem:[%s1862 + $0x90] sm:$0xff]
    %v1882 = vld [vmem:[%s1862 + $0x98] sm:$0xff]
    %v1883 = vld [vmem:[%s1862 + $0xa0] sm:$0xff]
    %v1884 = vld [vmem:[%s1862 + $0xa8] sm:$0xff]
    %v1885 = vld [vmem:[%s1862 + $0xb0] sm:$0xff]
    %v1886 = vld [vmem:[%s1862 + $0xb8] sm:$0xff]
    %v1887 = vld [vmem:[%s1862 + $0xc0] sm:$0xff]
    %v1888 = vld [vmem:[%s1862 + $0xc8] sm:$0xff]
    %v1889 = vld [vmem:[%s1862 + $0xd0] sm:$0xff]
    %v1890 = vld [vmem:[%s1862 + $0xd8] sm:$0xff]
    %v1891 = vld [vmem:[%s1862 + $0xe0] sm:$0xff]
    %v1892 = vld [vmem:[%s1862 + $0xe8] sm:$0xff]
    %v1893 = vld [vmem:[%s1862 + $0xf0] sm:$0xff]
    %v1894 = vld [vmem:[%s1862 + $0xf8] sm:$0xff]
    %v1895 = vld [vmem:[%s1862 + $0x100] sm:$0xff]
    %v1896 = vld [vmem:[%s1862 + $0x108] sm:$0xff]
    %v1897 = vld [vmem:[%s1862 + $0x110] sm:$0xff]
    %v1898 = vld [vmem:[%s1862 + $0x118] sm:$0xff]
    %v1899 = vld [vmem:[%s1862 + $0x120] sm:$0xff]
    %v1900 = vld [vmem:[%s1862 + $0x128] sm:$0xff]
    %v1901 = vld [vmem:[%s1862 + $0x130] sm:$0xff]
    %v1902 = vld [vmem:[%s1862 + $0x138] sm:$0xff]
    %v1903 = vld [vmem:[%s1862 + $0x140] sm:$0xff]
    %v1904 = vld [vmem:[%s1862 + $0x148] sm:$0xff]
    %v1905 = vld [vmem:[%s1862 + $0x150] sm:$0xff]
    %v1906 = vld [vmem:[%s1862 + $0x158] sm:$0xff]
    %v1907 = vld [vmem:[%s1862 + $0x160] sm:$0xff]
    %v1908 = vld [vmem:[%s1862 + $0x168] sm:$0xff]
    %v1909 = vld [vmem:[%s1862 + $0x170] sm:$0xff]
    %v1910 = vld [vmem:[%s1862 + $0x178] sm:$0xff]
    %v1911 = vld [vmem:[%s1862 + $0x180] sm:$0xff]
    %v1912 = vld [vmem:[%s1862 + $0x188] sm:$0xff]
    %v1913 = vld [vmem:[%s1862 + $0x190] sm:$0xff]
    %v1914 = vld [vmem:[%s1862 + $0x198] sm:$0xff]
    %v1915 = vld [vmem:[%s1862 + $0x1a0] sm:$0xff]
    %v1916 = vld [vmem:[%s1862 + $0x1a8] sm:$0xff]
    %v1917 = vld [vmem:[%s1862 + $0x1b0] sm:$0xff]
    %v1918 = vld [vmem:[%s1862 + $0x1b8] sm:$0xff]
    %v1919 = vld [vmem:[%s1862 + $0x1c0] sm:$0xff]
    %v1920 = vld [vmem:[%s1862 + $0x1c8] sm:$0xff]
    %v1921 = vld [vmem:[%s1862 + $0x1d0] sm:$0xff]
    %v1922 = vld [vmem:[%s1862 + $0x1d8] sm:$0xff]
    %v1923 = vld [vmem:[%s1862 + $0x1e0] sm:$0xff]
    %v1924 = vld [vmem:[%s1862 + $0x1e8] sm:$0xff]
    %v1925 = vld [vmem:[%s1862 + $0x1f0] sm:$0xff]
    %v1926 = vld [vmem:[%s1862 + $0x1f8] sm:$0xff]
    %v1931 = vrot.slane %v1858, 2
    %v1932 = vrot.slane %v1633, 2
    %v1933 = vsel %vm1210, %v1931, %v1932
    %v1934 = vrot.slane %v1859, 2
    %v1935 = vrot.slane %v1634, 2
    %v1936 = vsel %vm1210, %v1934, %v1935
    %v1937 = vrot.slane %v1635, 2
    %v1938 = vsel %vm1210, %v1932, %v1937
    %v1939 = vrot.slane %v1636, 2
    %v1940 = vsel %vm1210, %v1935, %v1939
    %v1941 = vrot.slane %v1637, 2
    %v1942 = vsel %vm1210, %v1937, %v1941
    %v1943 = vrot.slane %v1638, 2
    %v1944 = vsel %vm1210, %v1939, %v1943
    %v1945 = vrot.slane %v1639, 2
    %v1946 = vsel %vm1210, %v1941, %v1945
    %v1947 = vrot.slane %v1640, 2
    %v1948 = vsel %vm1210, %v1943, %v1947
    %v1949 = vrot.slane %v1860, 2
    %v1950 = vsel %vm1210, %v1945, %v1949
    %v1951 = vrot.slane %v1861, 2
    %v1952 = vsel %vm1210, %v1947, %v1951
    %1963 = vmatprep.subr.mxu0 %v1864
    %1964 = vmatpush1.msra.mxu0 %v1863
    %1965 = vmatprep.subr.mxu0 %v1866
    %1966 = vmatpush1.msra.mxu0 %v1865
    %1967 = vmatprep.subr.mxu0 %v1868
    %1968 = vmatpush1.msra.mxu0 %v1867
    %1969 = vmatprep.subr.mxu0 %v1870
    %1970 = vmatpush1.msra.mxu0 %v1869
    %1971 = vmatprep.subr.mxu0 %v1872
    %1972 = vmatpush1.msra.mxu0 %v1871
    %1973 = vmatprep.subr.mxu0 %v1874
    %1974 = vmatpush1.msra.mxu0 %v1873
    %1975 = vmatprep.subr.mxu0 %v1876
    %1976 = vmatpush1.msra.mxu0 %v1875
    %1977 = vmatprep.subr.mxu0 %v1878
    %1978 = vmatpush1.msra.mxu0 %v1877
    %1979 = vmatprep.subr.mxu0 %v1880
    %1980 = vmatpush1.msra.mxu0 %v1879
    %1981 = vmatprep.subr.mxu0 %v1882
    %1982 = vmatpush1.msra.mxu0 %v1881
    %1983 = vmatprep.subr.mxu0 %v1884
    %1984 = vmatpush1.msra.mxu0 %v1883
    %1985 = vmatprep.subr.mxu0 %v1886
    %1986 = vmatpush1.msra.mxu0 %v1885
    %1987 = vmatprep.subr.mxu0 %v1888
    %1988 = vmatpush1.msra.mxu0 %v1887
    %1989 = vmatprep.subr.mxu0 %v1890
    %1990 = vmatpush1.msra.mxu0 %v1889
    %1991 = vmatprep.subr.mxu0 %v1892
    %1992 = vmatpush1.msra.mxu0 %v1891
    %1993 = vmatprep.subr.mxu0 %v1894
    %1994 = vmatpush1.msra.mxu0 %v1893
    %1995 = vmatprep.subr.mxu0 %v1896
    %1996 = vmatpush1.msra.mxu0 %v1895
    %1997 = vmatprep.subr.mxu0 %v1898
    %1998 = vmatpush1.msra.mxu0 %v1897
    %1999 = vmatprep.subr.mxu0 %v1900
    %2000 = vmatpush1.msra.mxu0 %v1899
    %2001 = vmatprep.subr.mxu0 %v1902
    %2002 = vmatpush1.msra.mxu0 %v1901
    %2003 = vmatprep.subr.mxu0 %v1904
    %2004 = vmatpush1.msra.mxu0 %v1903
    %2005 = vmatprep.subr.mxu0 %v1906
    %2006 = vmatpush1.msra.mxu0 %v1905
    %2007 = vmatprep.subr.mxu0 %v1908
    %2008 = vmatpush1.msra.mxu0 %v1907
    %2009 = vmatprep.subr.mxu0 %v1910
    %2010 = vmatpush1.msra.mxu0 %v1909
    %2011 = vmatprep.subr.mxu0 %v1912
    %2012 = vmatpush1.msra.mxu0 %v1911
    %2013 = vmatprep.subr.mxu0 %v1914
    %2014 = vmatpush1.msra.mxu0 %v1913
    %2015 = vmatprep.subr.mxu0 %v1916
    %2016 = vmatpush1.msra.mxu0 %v1915
    %2017 = vmatprep.subr.mxu0 %v1918
    %2018 = vmatpush1.msra.mxu0 %v1917
    %2019 = vmatprep.subr.mxu0 %v1920
    %2020 = vmatpush1.msra.mxu0 %v1919
    %2021 = vmatprep.subr.mxu0 %v1922
    %2022 = vmatpush1.msra.mxu0 %v1921
    %2023 = vmatprep.subr.mxu0 %v1924
    %2024 = vmatpush1.msra.mxu0 %v1923
    %2025 = vmatprep.subr.mxu0 %v1926
    %2026 = vmatpush1.msra.mxu0 %v1925
    %2027 = vmatprep.mubr.f32.mxu0 %v1936
    %2028 = vmatmul.mubr.f32.gmra.mrb[0].mxu0 %v1933
    %v2029 = vpop.f32.mrb[0].mxu0
    %v2030 = vadd.f32 0.0, %v2029
    %v2031 = vpop.f32.mrb[0].mxu0
    %v2032 = vadd.f32 0.0, %v2031
    %2033 = vmatprep.mubr.f32.mxu0 %v1940
    %2034 = vmatmul.mubr.f32.gmra.mrb[0].mxu0 %v1938
    %v2035 = vpop.f32.mrb[0].mxu0
    %v2036 = vadd.f32 0.0, %v2035
    %v2037 = vpop.f32.mrb[0].mxu0
    %v2038 = vadd.f32 0.0, %v2037
    %2039 = vmatprep.mubr.f32.mxu0 %v1944
    %2040 = vmatmul.mubr.f32.gmra.mrb[0].mxu0 %v1942
    %v2041 = vpop.f32.mrb[0].mxu0
    %v2042 = vadd.f32 0.0, %v2041
    %v2043 = vpop.f32.mrb[0].mxu0
    %v2044 = vadd.f32 0.0, %v2043
    %2045 = vmatprep.mubr.f32.mxu0 %v1948
    %2046 = vmatmul.mubr.f32.gmra.mrb[0].mxu0 %v1946
    %v2047 = vpop.f32.mrb[0].mxu0
    %v2048 = vadd.f32 0.0, %v2047
    %v2049 = vpop.f32.mrb[0].mxu0
    %v2050 = vadd.f32 0.0, %v2049
    %2051 = vmatprep.mubr.f32.mxu0 %v1952
    %2052 = vmatmul.mubr.f32.gmra.mrb[0].mxu0 %v1950
    %v2053 = vpop.f32.mrb[0].mxu0
    %v2054 = vadd.f32 0.0, %v2053
    %v2055 = vpop.f32.mrb[0].mxu0
    %v2056 = vadd.f32 0.0, %v2055
    %2057 = vdwg.mxu0
    %v2058 = vadd.f32 %v1830, %v2030
    %v2059 = vadd.f32 %v1832, %v2032
    %v2060 = vadd.f32 %v1836, %v2036
    %v2061 = vadd.f32 %v1838, %v2038
    %v2062 = vadd.f32 %v1842, %v2042
    %v2063 = vadd.f32 %v1844, %v2044
    %v2064 = vadd.f32 %v1848, %v2048
    %v2065 = vadd.f32 %v1850, %v2050
    %v2066 = vadd.f32 %v1854, %v2054
    %v2067 = vadd.f32 %v1856, %v2056
    %v2068 = vld [vmem:[#allocation3] sm:$0xf8]
    %v2069 = vld [vmem:[#allocation3 + $0x8] sm:$0xf8]
    %v2070 = vld [vmem:[#allocation3 + $0x50] sm:$0x7]
    %v2071 = vld [vmem:[#allocation3 + $0x58] sm:$0x7]
    %s2072 = scalar_lea.vmem [#allocation7], 1024
    %v2073 = vld [vmem:[%s2072] sm:$0xff]
    %v2074 = vld [vmem:[%s2072 + $0x8] sm:$0xff]
    %v2075 = vld [vmem:[%s2072 + $0x10] sm:$0xff]
    %v2076 = vld [vmem:[%s2072 + $0x18] sm:$0xff]
    %v2077 = vld [vmem:[%s2072 + $0x20] sm:$0xff]
    %v2078 = vld [vmem:[%s2072 + $0x28] sm:$0xff]
    %v2079 = vld [vmem:[%s2072 + $0x30] sm:$0xff]
    %v2080 = vld [vmem:[%s2072 + $0x38] sm:$0xff]
    %v2081 = vld [vmem:[%s2072 + $0x40] sm:$0xff]
    %v2082 = vld [vmem:[%s2072 + $0x48] sm:$0xff]
    %v2083 = vld [vmem:[%s2072 + $0x50] sm:$0xff]
    %v2084 = vld [vmem:[%s2072 + $0x58] sm:$0xff]
    %v2085 = vld [vmem:[%s2072 + $0x60] sm:$0xff]
    %v2086 = vld [vmem:[%s2072 + $0x68] sm:$0xff]
    %v2087 = vld [vmem:[%s2072 + $0x70] sm:$0xff]
    %v2088 = vld [vmem:[%s2072 + $0x78] sm:$0xff]
    %v2089 = vld [vmem:[%s2072 + $0x80] sm:$0xff]
    %v2090 = vld [vmem:[%s2072 + $0x88] sm:$0xff]
    %v2091 = vld [vmem:[%s2072 + $0x90] sm:$0xff]
    %v2092 = vld [vmem:[%s2072 + $0x98] sm:$0xff]
    %v2093 = vld [vmem:[%s2072 + $0xa0] sm:$0xff]
    %v2094 = vld [vmem:[%s2072 + $0xa8] sm:$0xff]
    %v2095 = vld [vmem:[%s2072 + $0xb0] sm:$0xff]
    %v2096 = vld [vmem:[%s2072 + $0xb8] sm:$0xff]
    %v2097 = vld [vmem:[%s2072 + $0xc0] sm:$0xff]
    %v2098 = vld [vmem:[%s2072 + $0xc8] sm:$0xff]
    %v2099 = vld [vmem:[%s2072 + $0xd0] sm:$0xff]
    %v2100 = vld [vmem:[%s2072 + $0xd8] sm:$0xff]
    %v2101 = vld [vmem:[%s2072 + $0xe0] sm:$0xff]
    %v2102 = vld [vmem:[%s2072 + $0xe8] sm:$0xff]
    %v2103 = vld [vmem:[%s2072 + $0xf0] sm:$0xff]
    %v2104 = vld [vmem:[%s2072 + $0xf8] sm:$0xff]
    %v2105 = vld [vmem:[%s2072 + $0x100] sm:$0xff]
    %v2106 = vld [vmem:[%s2072 + $0x108] sm:$0xff]
    %v2107 = vld [vmem:[%s2072 + $0x110] sm:$0xff]
    %v2108 = vld [vmem:[%s2072 + $0x118] sm:$0xff]
    %v2109 = vld [vmem:[%s2072 + $0x120] sm:$0xff]
    %v2110 = vld [vmem:[%s2072 + $0x128] sm:$0xff]
    %v2111 = vld [vmem:[%s2072 + $0x130] sm:$0xff]
    %v2112 = vld [vmem:[%s2072 + $0x138] sm:$0xff]
    %v2113 = vld [vmem:[%s2072 + $0x140] sm:$0xff]
    %v2114 = vld [vmem:[%s2072 + $0x148] sm:$0xff]
    %v2115 = vld [vmem:[%s2072 + $0x150] sm:$0xff]
    %v2116 = vld [vmem:[%s2072 + $0x158] sm:$0xff]
    %v2117 = vld [vmem:[%s2072 + $0x160] sm:$0xff]
    %v2118 = vld [vmem:[%s2072 + $0x168] sm:$0xff]
    %v2119 = vld [vmem:[%s2072 + $0x170] sm:$0xff]
    %v2120 = vld [vmem:[%s2072 + $0x178] sm:$0xff]
    %v2121 = vld [vmem:[%s2072 + $0x180] sm:$0xff]
    %v2122 = vld [vmem:[%s2072 + $0x188] sm:$0xff]
    %v2123 = vld [vmem:[%s2072 + $0x190] sm:$0xff]
    %v2124 = vld [vmem:[%s2072 + $0x198] sm:$0xff]
    %v2125 = vld [vmem:[%s2072 + $0x1a0] sm:$0xff]
    %v2126 = vld [vmem:[%s2072 + $0x1a8] sm:$0xff]
    %v2127 = vld [vmem:[%s2072 + $0x1b0] sm:$0xff]
    %v2128 = vld [vmem:[%s2072 + $0x1b8] sm:$0xff]
    %v2129 = vld [vmem:[%s2072 + $0x1c0] sm:$0xff]
    %v2130 = vld [vmem:[%s2072 + $0x1c8] sm:$0xff]
    %v2131 = vld [vmem:[%s2072 + $0x1d0] sm:$0xff]
    %v2132 = vld [vmem:[%s2072 + $0x1d8] sm:$0xff]
    %v2133 = vld [vmem:[%s2072 + $0x1e0] sm:$0xff]
    %v2134 = vld [vmem:[%s2072 + $0x1e8] sm:$0xff]
    %v2135 = vld [vmem:[%s2072 + $0x1f0] sm:$0xff]
    %v2136 = vld [vmem:[%s2072 + $0x1f8] sm:$0xff]
    %v2141 = vrot.slane %v2068, 3
    %v2142 = vrot.slane %v1633, 3
    %v2143 = vsel %vm1421, %v2141, %v2142
    %v2144 = vrot.slane %v2069, 3
    %v2145 = vrot.slane %v1634, 3
    %v2146 = vsel %vm1421, %v2144, %v2145
    %v2147 = vrot.slane %v1635, 3
    %v2148 = vsel %vm1421, %v2142, %v2147
    %v2149 = vrot.slane %v1636, 3
    %v2150 = vsel %vm1421, %v2145, %v2149
    %v2151 = vrot.slane %v1637, 3
    %v2152 = vsel %vm1421, %v2147, %v2151
    %v2153 = vrot.slane %v1638, 3
    %v2154 = vsel %vm1421, %v2149, %v2153
    %v2155 = vrot.slane %v1639, 3
    %v2156 = vsel %vm1421, %v2151, %v2155
    %v2157 = vrot.slane %v1640, 3
    %v2158 = vsel %vm1421, %v2153, %v2157
    %v2159 = vrot.slane %v2070, 3
    %v2160 = vsel %vm1421, %v2155, %v2159
    %v2161 = vrot.slane %v2071, 3
    %v2162 = vsel %vm1421, %v2157, %v2161
    %2173 = vmatprep.subr.mxu0 %v2074
    %2174 = vmatpush1.msra.mxu0 %v2073
    %2175 = vmatprep.subr.mxu0 %v2076
    %2176 = vmatpush1.msra.mxu0 %v2075
    %2177 = vmatprep.subr.mxu0 %v2078
    %2178 = vmatpush1.msra.mxu0 %v2077
    %2179 = vmatprep.subr.mxu0 %v2080
    %2180 = vmatpush1.msra.mxu0 %v2079
    %2181 = vmatprep.subr.mxu0 %v2082
    %2182 = vmatpush1.msra.mxu0 %v2081
    %2183 = vmatprep.subr.mxu0 %v2084
    %2184 = vmatpush1.msra.mxu0 %v2083
    %2185 = vmatprep.subr.mxu0 %v2086
    %2186 = vmatpush1.msra.mxu0 %v2085
    %2187 = vmatprep.subr.mxu0 %v2088
    %2188 = vmatpush1.msra.mxu0 %v2087
    %2189 = vmatprep.subr.mxu0 %v2090
    %2190 = vmatpush1.msra.mxu0 %v2089
    %2191 = vmatprep.subr.mxu0 %v2092
    %2192 = vmatpush1.msra.mxu0 %v2091
    %2193 = vmatprep.subr.mxu0 %v2094
    %2194 = vmatpush1.msra.mxu0 %v2093
    %2195 = vmatprep.subr.mxu0 %v2096
    %2196 = vmatpush1.msra.mxu0 %v2095
    %2197 = vmatprep.subr.mxu0 %v2098
    %2198 = vmatpush1.msra.mxu0 %v2097
    %2199 = vmatprep.subr.mxu0 %v2100
    %2200 = vmatpush1.msra.mxu0 %v2099
    %2201 = vmatprep.subr.mxu0 %v2102
    %2202 = vmatpush1.msra.mxu0 %v2101
    %2203 = vmatprep.subr.mxu0 %v2104
    %2204 = vmatpush1.msra.mxu0 %v2103
    %2205 = vmatprep.subr.mxu0 %v2106
    %2206 = vmatpush1.msra.mxu0 %v2105
    %2207 = vmatprep.subr.mxu0 %v2108
    %2208 = vmatpush1.msra.mxu0 %v2107
    %2209 = vmatprep.subr.mxu0 %v2110
    %2210 = vmatpush1.msra.mxu0 %v2109
    %2211 = vmatprep.subr.mxu0 %v2112
    %2212 = vmatpush1.msra.mxu0 %v2111
    %2213 = vmatprep.subr.mxu0 %v2114
    %2214 = vmatpush1.msra.mxu0 %v2113
    %2215 = vmatprep.subr.mxu0 %v2116
    %2216 = vmatpush1.msra.mxu0 %v2115
    %2217 = vmatprep.subr.mxu0 %v2118
    %2218 = vmatpush1.msra.mxu0 %v2117
    %2219 = vmatprep.subr.mxu0 %v2120
    %2220 = vmatpush1.msra.mxu0 %v2119
    %2221 = vmatprep.subr.mxu0 %v2122
    %2222 = vmatpush1.msra.mxu0 %v2121
    %2223 = vmatprep.subr.mxu0 %v2124
    %2224 = vmatpush1.msra.mxu0 %v2123
    %2225 = vmatprep.subr.mxu0 %v2126
    %2226 = vmatpush1.msra.mxu0 %v2125
    %2227 = vmatprep.subr.mxu0 %v2128
    %2228 = vmatpush1.msra.mxu0 %v2127
    %2229 = vmatprep.subr.mxu0 %v2130
    %2230 = vmatpush1.msra.mxu0 %v2129
    %2231 = vmatprep.subr.mxu0 %v2132
    %2232 = vmatpush1.msra.mxu0 %v2131
    %2233 = vmatprep.subr.mxu0 %v2134
    %2234 = vmatpush1.msra.mxu0 %v2133
    %2235 = vmatprep.subr.mxu0 %v2136
    %2236 = vmatpush1.msra.mxu0 %v2135
    %2237 = vmatprep.mubr.f32.mxu0 %v2146
    %2238 = vmatmul.mubr.f32.gmra.mrb[0].mxu0 %v2143
    %v2239 = vpop.f32.mrb[0].mxu0
    %v2240 = vadd.f32 0.0, %v2239
    %v2241 = vpop.f32.mrb[0].mxu0
    %v2242 = vadd.f32 0.0, %v2241
    %2243 = vmatprep.mubr.f32.mxu0 %v2150
    %2244 = vmatmul.mubr.f32.gmra.mrb[0].mxu0 %v2148
    %v2245 = vpop.f32.mrb[0].mxu0
    %v2246 = vadd.f32 0.0, %v2245
    %v2247 = vpop.f32.mrb[0].mxu0
    %v2248 = vadd.f32 0.0, %v2247
    %2249 = vmatprep.mubr.f32.mxu0 %v2154
    %2250 = vmatmul.mubr.f32.gmra.mrb[0].mxu0 %v2152
    %v2251 = vpop.f32.mrb[0].mxu0
    %v2252 = vadd.f32 0.0, %v2251
    %v2253 = vpop.f32.mrb[0].mxu0
    %v2254 = vadd.f32 0.0, %v2253
    %2255 = vmatprep.mubr.f32.mxu0 %v2158
    %2256 = vmatmul.mubr.f32.gmra.mrb[0].mxu0 %v2156
    %v2257 = vpop.f32.mrb[0].mxu0
    %v2258 = vadd.f32 0.0, %v2257
    %v2259 = vpop.f32.mrb[0].mxu0
    %v2260 = vadd.f32 0.0, %v2259
    %2261 = vmatprep.mubr.f32.mxu0 %v2162
    %2262 = vmatmul.mubr.f32.gmra.mrb[0].mxu0 %v2160
    %v2263 = vpop.f32.mrb[0].mxu0
    %v2264 = vadd.f32 0.0, %v2263
    %v2265 = vpop.f32.mrb[0].mxu0
    %v2266 = vadd.f32 0.0, %v2265
    %2267 = vdwg.mxu0
    %v2268 = vadd.f32 %v2058, %v2240
    %v2269 = vadd.f32 %v2059, %v2242
    %v2270 = vadd.f32 %v2060, %v2246
    %v2271 = vadd.f32 %v2061, %v2248
    %v2272 = vadd.f32 %v2062, %v2252
    %v2273 = vadd.f32 %v2063, %v2254
    %v2274 = vadd.f32 %v2064, %v2258
    %v2275 = vadd.f32 %v2065, %v2260
    %v2276 = vadd.f32 %v2066, %v2264
    %v2277 = vadd.f32 %v2067, %v2266
    %v2278 = vmax.f32 %v2268, 0.0
    %v2279 = vmax.f32 %v2269, 0.0
    %v2280 = vmax.f32 %v2270, 0.0
    %v2281 = vmax.f32 %v2271, 0.0
    %v2282 = vmax.f32 %v2272, 0.0
    %v2283 = vmax.f32 %v2273, 0.0
    %v2284 = vmax.f32 %v2274, 0.0
    %v2285 = vmax.f32 %v2275, 0.0
    %v2286 = vmax.f32 %v2276, 0.0
    %v2287 = vmax.f32 %v2277, 0.0
    %v2288 = vld [vmem:[#allocation9] sm:$0xff]
    %v2289 = vld [vmem:[#allocation9 + $0x8] sm:$0xff]
    %v2290 = vld [vmem:[#allocation9 + $0x10] sm:$0xff]
    %v2291 = vld [vmem:[#allocation9 + $0x18] sm:$0xff]
    %v2292 = vld [vmem:[#allocation9 + $0x20] sm:$0xff]
    %v2293 = vld [vmem:[#allocation9 + $0x28] sm:$0xff]
    %v2294 = vld [vmem:[#allocation9 + $0x30] sm:$0xff]
    %v2295 = vld [vmem:[#allocation9 + $0x38] sm:$0xff]
    %v2296 = vld [vmem:[#allocation9 + $0x40] sm:$0xff]
    %v2297 = vld [vmem:[#allocation9 + $0x48] sm:$0xff]
    %v2298 = vld [vmem:[#allocation9 + $0x50] sm:$0xff]
    %v2299 = vld [vmem:[#allocation9 + $0x58] sm:$0xff]
    %v2300 = vld [vmem:[#allocation9 + $0x60] sm:$0xff]
    %v2301 = vld [vmem:[#allocation9 + $0x68] sm:$0xff]
    %v2302 = vld [vmem:[#allocation9 + $0x70] sm:$0xff]
    %v2303 = vld [vmem:[#allocation9 + $0x78] sm:$0xff]
    %v2304 = vld [vmem:[#allocation9 + $0x80] sm:$0xff]
    %v2305 = vld [vmem:[#allocation9 + $0x88] sm:$0xff]
    %v2306 = vld [vmem:[#allocation9 + $0x90] sm:$0xff]
    %v2307 = vld [vmem:[#allocation9 + $0x98] sm:$0xff]
    %v2308 = vld [vmem:[#allocation9 + $0xa0] sm:$0xff]
    %v2309 = vld [vmem:[#allocation9 + $0xa8] sm:$0xff]
    %v2310 = vld [vmem:[#allocation9 + $0xb0] sm:$0xff]
    %v2311 = vld [vmem:[#allocation9 + $0xb8] sm:$0xff]
    %v2312 = vld [vmem:[#allocation9 + $0xc0] sm:$0xff]
    %v2313 = vld [vmem:[#allocation9 + $0xc8] sm:$0xff]
    %v2314 = vld [vmem:[#allocation9 + $0xd0] sm:$0xff]
    %v2315 = vld [vmem:[#allocation9 + $0xd8] sm:$0xff]
    %v2316 = vld [vmem:[#allocation9 + $0xe0] sm:$0xff]
    %v2317 = vld [vmem:[#allocation9 + $0xe8] sm:$0xff]
    %v2318 = vld [vmem:[#allocation9 + $0xf0] sm:$0xff]
    %v2319 = vld [vmem:[#allocation9 + $0xf8] sm:$0xff]
    %2320 = vmatprep.subr.mxu0 0.0
    %2321 = vmatpush1.msra.mxu0 %v2288
    %2322 = vmatprep.subr.mxu0 0.0
    %2323 = vmatpush1.msra.mxu0 %v2289
    %2324 = vmatprep.subr.mxu0 0.0
    %2325 = vmatpush1.msra.mxu0 %v2290
    %2326 = vmatprep.subr.mxu0 0.0
    %2327 = vmatpush1.msra.mxu0 %v2291
    %2328 = vmatprep.subr.mxu0 0.0
    %2329 = vmatpush1.msra.mxu0 %v2292
    %2330 = vmatprep.subr.mxu0 0.0
    %2331 = vmatpush1.msra.mxu0 %v2293
    %2332 = vmatprep.subr.mxu0 0.0
    %2333 = vmatpush1.msra.mxu0 %v2294
    %2334 = vmatprep.subr.mxu0 0.0
    %2335 = vmatpush1.msra.mxu0 %v2295
    %2336 = vmatprep.subr.mxu0 0.0
    %2337 = vmatpush1.msra.mxu0 %v2296
    %2338 = vmatprep.subr.mxu0 0.0
    %2339 = vmatpush1.msra.mxu0 %v2297
    %2340 = vmatprep.subr.mxu0 0.0
    %2341 = vmatpush1.msra.mxu0 %v2298
    %2342 = vmatprep.subr.mxu0 0.0
    %2343 = vmatpush1.msra.mxu0 %v2299
    %2344 = vmatprep.subr.mxu0 0.0
    %2345 = vmatpush1.msra.mxu0 %v2300
    %2346 = vmatprep.subr.mxu0 0.0
    %2347 = vmatpush1.msra.mxu0 %v2301
    %2348 = vmatprep.subr.mxu0 0.0
    %2349 = vmatpush1.msra.mxu0 %v2302
    %2350 = vmatprep.subr.mxu0 0.0
    %2351 = vmatpush1.msra.mxu0 %v2303
    %2352 = vmatprep.subr.mxu0 0.0
    %2353 = vmatpush1.msra.mxu0 %v2304
    %2354 = vmatprep.subr.mxu0 0.0
    %2355 = vmatpush1.msra.mxu0 %v2305
    %2356 = vmatprep.subr.mxu0 0.0
    %2357 = vmatpush1.msra.mxu0 %v2306
    %2358 = vmatprep.subr.mxu0 0.0
    %2359 = vmatpush1.msra.mxu0 %v2307
    %2360 = vmatprep.subr.mxu0 0.0
    %2361 = vmatpush1.msra.mxu0 %v2308
    %2362 = vmatprep.subr.mxu0 0.0
    %2363 = vmatpush1.msra.mxu0 %v2309
    %2364 = vmatprep.subr.mxu0 0.0
    %2365 = vmatpush1.msra.mxu0 %v2310
    %2366 = vmatprep.subr.mxu0 0.0
    %2367 = vmatpush1.msra.mxu0 %v2311
    %2368 = vmatprep.subr.mxu0 0.0
    %2369 = vmatpush1.msra.mxu0 %v2312
    %2370 = vmatprep.subr.mxu0 0.0
    %2371 = vmatpush1.msra.mxu0 %v2313
    %2372 = vmatprep.subr.mxu0 0.0
    %2373 = vmatpush1.msra.mxu0 %v2314
    %2374 = vmatprep.subr.mxu0 0.0
    %2375 = vmatpush1.msra.mxu0 %v2315
    %2376 = vmatprep.subr.mxu0 0.0
    %2377 = vmatpush1.msra.mxu0 %v2316
    %2378 = vmatprep.subr.mxu0 0.0
    %2379 = vmatpush1.msra.mxu0 %v2317
    %2380 = vmatprep.subr.mxu0 0.0
    %2381 = vmatpush1.msra.mxu0 %v2318
    %2382 = vmatprep.subr.mxu0 0.0
    %2383 = vmatpush1.msra.mxu0 %v2319
    %2384 = vmatprep.mubr.f32.mxu0 %v2279
    %2385 = vmatmul.mubr.f32.gmra.mrb[0].mxu0 %v2278
    %v2386 = vpop.f32.mrb[0].mxu0
    %v2387 = vadd.f32 0.0, %v2386
    %v2388 = vpop.f32.mrb[0].mxu0
    %2389 = vmatprep.mubr.f32.mxu0 %v2281
    %2390 = vmatmul.mubr.f32.gmra.mrb[0].mxu0 %v2280
    %v2391 = vpop.f32.mrb[0].mxu0
    %v2392 = vadd.f32 0.0, %v2391
    %v2393 = vpop.f32.mrb[0].mxu0
    %2394 = vmatprep.mubr.f32.mxu0 %v2283
    %2395 = vmatmul.mubr.f32.gmra.mrb[0].mxu0 %v2282
    %v2396 = vpop.f32.mrb[0].mxu0
    %v2397 = vadd.f32 0.0, %v2396
    %v2398 = vpop.f32.mrb[0].mxu0
    %2399 = vmatprep.mubr.f32.mxu0 %v2285
    %2400 = vmatmul.mubr.f32.gmra.mrb[0].mxu0 %v2284
    %v2401 = vpop.f32.mrb[0].mxu0
    %v2402 = vadd.f32 0.0, %v2401
    %v2403 = vpop.f32.mrb[0].mxu0
    %2404 = vmatprep.mubr.f32.mxu0 %v2287
    %2405 = vmatmul.mubr.f32.gmra.mrb[0].mxu0 %v2286
    %v2406 = vpop.f32.mrb[0].mxu0
    %v2407 = vadd.f32 0.0, %v2406
    %v2408 = vpop.f32.mrb[0].mxu0
    %2409 = vdwg.mxu0
    %v2410 = vld [vmem:[%s10] sm:$0xff]
    %v2411 = vld [vmem:[%s10 + $0x8] sm:$0xff]
    %v2412 = vld [vmem:[%s10 + $0x10] sm:$0xff]
    %v2413 = vld [vmem:[%s10 + $0x18] sm:$0xff]
    %v2414 = vld [vmem:[%s10 + $0x20] sm:$0xff]
    %v2415 = vmul.f32 %v2387, %v2410
    %v2416 = vmul.f32 %v2392, %v2411
    %v2417 = vmul.f32 %v2397, %v2412
    %v2418 = vmul.f32 %v2402, %v2413
    %v2419 = vmul.f32 %v2407, %v2414
    %v2420 = vld [vmem:[%s11] sm:$0x3]
    %vm2421 = vcmask 326656
    %v2423 = vsel %vm2421, %v2420, 0
    %2425 = vmatprep.subr.mxu0 0.0
    %2426 = vmatpush1.msra.mxu0 %v2415
    %2427 = vmatprep.subr.mxu0 0.0
    %2428 = vmatpush1.msra.mxu0 %v2416
    %2429 = vmatprep.subr.mxu0 0.0
    %2430 = vmatpush1.msra.mxu0 %v2417
    %2431 = vmatprep.subr.mxu0 0.0
    %2432 = vmatpush1.msra.mxu0 %v2418
    %2433 = vmatprep.subr.mxu0 0.0
    %2434 = vmatpush1.msra.mxu0 %v2419
    %2435 = vmatprep.subr.mxu0 0.0
    %2436 = vmatpush1.msra.mxu0 0.0
    %2437 = vmatprep.subr.mxu0 0.0
    %2438 = vmatpush1.msra.mxu0 0.0
    %2439 = vmatprep.subr.mxu0 0.0
    %2440 = vmatpush1.msra.mxu0 0.0
    %2441 = vmatprep.subr.mxu0 0.0
    %2442 = vmatpush1.msra.mxu0 0.0
    %2443 = vmatprep.subr.mxu0 0.0
    %2444 = vmatpush1.msra.mxu0 0.0
    %2445 = vmatprep.subr.mxu0 0.0
    %2446 = vmatpush1.msra.mxu0 0.0
    %2447 = vmatprep.subr.mxu0 0.0
    %2448 = vmatpush1.msra.mxu0 0.0
    %2449 = vmatprep.subr.mxu0 0.0
    %2450 = vmatpush1.msra.mxu0 0.0
    %2451 = vmatprep.subr.mxu0 0.0
    %2452 = vmatpush1.msra.mxu0 0.0
    %2453 = vmatprep.subr.mxu0 0.0
    %2454 = vmatpush1.msra.mxu0 0.0
    %2455 = vmatprep.subr.mxu0 0.0
    %2456 = vmatpush1.msra.mxu0 0.0
    %2457 = vmatprep.subr.mxu0 0.0
    %2458 = vmatpush1.msra.mxu0 0.0
    %2459 = vmatprep.subr.mxu0 0.0
    %2460 = vmatpush1.msra.mxu0 0.0
    %2461 = vmatprep.subr.mxu0 0.0
    %2462 = vmatpush1.msra.mxu0 0.0
    %2463 = vmatprep.subr.mxu0 0.0
    %2464 = vmatpush1.msra.mxu0 0.0
    %2465 = vmatprep.subr.mxu0 0.0
    %2466 = vmatpush1.msra.mxu0 0.0
    %2467 = vmatprep.subr.mxu0 0.0
    %2468 = vmatpush1.msra.mxu0 0.0
    %2469 = vmatprep.subr.mxu0 0.0
    %2470 = vmatpush1.msra.mxu0 0.0
    %2471 = vmatprep.subr.mxu0 0.0
    %2472 = vmatpush1.msra.mxu0 0.0
    %2473 = vmatprep.subr.mxu0 0.0
    %2474 = vmatpush1.msra.mxu0 0.0
    %2475 = vmatprep.subr.mxu0 0.0
    %2476 = vmatpush1.msra.mxu0 0.0
    %2477 = vmatprep.subr.mxu0 0.0
    %2478 = vmatpush1.msra.mxu0 0.0
    %2479 = vmatprep.subr.mxu0 0.0
    %2480 = vmatpush1.msra.mxu0 0.0
    %2481 = vmatprep.subr.mxu0 0.0
    %2482 = vmatpush1.msra.mxu0 0.0
    %2483 = vmatprep.subr.mxu0 0.0
    %2484 = vmatpush1.msra.mxu0 0.0
    %2485 = vmatprep.subr.mxu0 0.0
    %2486 = vmatpush1.msra.mxu0 0.0
    %2487 = vmatprep.subr.mxu0 0.0
    %2488 = vmatpush1.msra.mxu0 0.0
    %2489 = vmatprep.mubr.f32.mxu0 0.0
    %2490 = vmatmul.mubr.f32.gmra.mrb[0].mxu0 %v2423
    %v2491 = vpop.f32.mrb[0].mxu0
    %v2492 = vadd.f32 0.0, %v2491
    %v2493 = vpop.f32.mrb[0].mxu0
    %2494 = vdwg.mxu0
    %v2495 = vld [vmem:[%s12] sm:$0xff]
    %v2496 = vld [vmem:[%s12 + $0x8] sm:$0xff]
    %v2497 = vld [vmem:[%s12 + $0x10] sm:$0xff]
    %v2498 = vld [vmem:[%s12 + $0x18] sm:$0xff]
    %v2499 = vld [vmem:[%s12 + $0x20] sm:$0xff]
    %v2500 = vld [vmem:[%s12 + $0x28] sm:$0xff]
    %v2501 = vld [vmem:[%s12 + $0x30] sm:$0xff]
    %v2502 = vld [vmem:[%s12 + $0x38] sm:$0xff]
    %v2503 = vld [vmem:[%s12 + $0x40] sm:$0xff]
    %v2504 = vld [vmem:[%s12 + $0x48] sm:$0xff]
    %v2505 = vld [vmem:[%s12 + $0x50] sm:$0xff]
    %v2506 = vld [vmem:[%s12 + $0x58] sm:$0xff]
    %v2507 = vld [vmem:[%s12 + $0x60] sm:$0xff]
    %v2508 = vld [vmem:[%s12 + $0x68] sm:$0xff]
    %v2509 = vld [vmem:[%s12 + $0x70] sm:$0xff]
    %v2510 = vld [vmem:[%s12 + $0x78] sm:$0xff]
    %v2511 = vld [vmem:[%s8] sm:$0x1]
    %v2513 = vlaneseq
    %v2514 = vshrl.u32 %v2513, 7
    %v2515 = vsub.s32 0, %v2514
    %v2516 = vrot.slane %v2511, %v2515
    %2518 = vmatprep.subr.mxu0 0.0
    %2519 = vmatpush1.msra.mxu0 %v2495
    %2520 = vmatprep.subr.mxu0 0.0
    %2521 = vmatpush1.msra.mxu0 %v2496
    %2522 = vmatprep.subr.mxu0 0.0
    %2523 = vmatpush1.msra.mxu0 %v2497
    %2524 = vmatprep.subr.mxu0 0.0
    %2525 = vmatpush1.msra.mxu0 %v2498
    %2526 = vmatprep.subr.mxu0 0.0
    %2527 = vmatpush1.msra.mxu0 %v2499
    %2528 = vmatprep.subr.mxu0 0.0
    %2529 = vmatpush1.msra.mxu0 %v2500
    %2530 = vmatprep.subr.mxu0 0.0
    %2531 = vmatpush1.msra.mxu0 %v2501
    %2532 = vmatprep.subr.mxu0 0.0
    %2533 = vmatpush1.msra.mxu0 %v2502
    %2534 = vmatprep.subr.mxu0 0.0
    %2535 = vmatpush1.msra.mxu0 %v2503
    %2536 = vmatprep.subr.mxu0 0.0
    %2537 = vmatpush1.msra.mxu0 %v2504
    %2538 = vmatprep.subr.mxu0 0.0
    %2539 = vmatpush1.msra.mxu0 %v2505
    %2540 = vmatprep.subr.mxu0 0.0
    %2541 = vmatpush1.msra.mxu0 %v2506
    %2542 = vmatprep.subr.mxu0 0.0
    %2543 = vmatpush1.msra.mxu0 %v2507
    %2544 = vmatprep.subr.mxu0 0.0
    %2545 = vmatpush1.msra.mxu0 %v2508
    %2546 = vmatprep.subr.mxu0 0.0
    %2547 = vmatpush1.msra.mxu0 %v2509
    %2548 = vmatprep.subr.mxu0 0.0
    %2549 = vmatpush1.msra.mxu0 %v2510
    %2550 = vmatprep.subr.mxu0 0.0
    %2551 = vmatpush1.msra.mxu0 0.0
    %2552 = vmatprep.subr.mxu0 0.0
    %2553 = vmatpush1.msra.mxu0 0.0
    %2554 = vmatprep.subr.mxu0 0.0
    %2555 = vmatpush1.msra.mxu0 0.0
    %2556 = vmatprep.subr.mxu0 0.0
    %2557 = vmatpush1.msra.mxu0 0.0
    %2558 = vmatprep.subr.mxu0 0.0
    %2559 = vmatpush1.msra.mxu0 0.0
    %2560 = vmatprep.subr.mxu0 0.0
    %2561 = vmatpush1.msra.mxu0 0.0
    %2562 = vmatprep.subr.mxu0 0.0
    %2563 = vmatpush1.msra.mxu0 0.0
    %2564 = vmatprep.subr.mxu0 0.0
    %2565 = vmatpush1.msra.mxu0 0.0
    %2566 = vmatprep.subr.mxu0 0.0
    %2567 = vmatpush1.msra.mxu0 0.0
    %2568 = vmatprep.subr.mxu0 0.0
    %2569 = vmatpush1.msra.mxu0 0.0
    %2570 = vmatprep.subr.mxu0 0.0
    %2571 = vmatpush1.msra.mxu0 0.0
    %2572 = vmatprep.subr.mxu0 0.0
    %2573 = vmatpush1.msra.mxu0 0.0
    %2574 = vmatprep.subr.mxu0 0.0
    %2575 = vmatpush1.msra.mxu0 0.0
    %2576 = vmatprep.subr.mxu0 0.0
    %2577 = vmatpush1.msra.mxu0 0.0
    %2578 = vmatprep.subr.mxu0 0.0
    %2579 = vmatpush1.msra.mxu0 0.0
    %2580 = vmatprep.subr.mxu0 0.0
    %2581 = vmatpush1.msra.mxu0 0.0
    %2582 = vmatprep.mubr.f32.mxu0 0.0
    %2583 = vmatmul.mubr.f32.gmra.mrb[0].mxu0 %v2492
    %v2584 = vpop.f32.mrb[0].mxu0
    %v2585 = vadd.f32 %v2516, %v2584
    %v2586 = vpop.f32.mrb[0].mxu0
    %2587 = vdwg.mxu0
    %vm2588 = vcmask 58368
    %v2589 = vsel %vm2588, %v2585, -inf
    %2590 = vmax.xlane.f32.xlu0 %v2589
    %v2591 = vpop.xlane.xlu0 %2590
    %v2592 = vsub.f32 %v2585, %v2591
    %v2593 = vmul.f32 %v2592, 1.442695
    %v2594 = vpow.pop %v2593
    %v2595 = vsel %vm2588, %v2594, 0.0
    %2596 = vadd.xlane.f32.xlu0 %v2595
    %v2597 = vpop.xlane.xlu0 %2596
    %v2598 = vrcp.pop %v2597
    %v2599 = vmul.f32 %v2594, %v2598
    %2600 = vst.msk [vmem:[#allocation10] sm:$0x3] %vm2588, %v2599
    // Predicated region
    $region66: #{policy_forward.1} parent=1 // pred_check
      _
    $region67: #{policy_forward.1} parent=1 // pred_check_branch
      %2602 = sbr.rel (0) target = $region69
    $region68: #{policy_forward.1} parent=1 // pred_region
      %s2604 = ssub.s32 32, 32
      %2605 = vsyncadd [#allocation6], %s2604
      %s2607 = sshll.u32 [#allocation10], 4
      %s2608 = int_to_ptr.vmem [resolvable:$true] %s2607
      %2610 = dma.vmem_to_hbm [thread:$0]  %s2608, 32, %s13, [#allocation6]
    $region69: #{policy_forward.1} parent=1 // pred_fallthru
      _
    // Predicated region
    $region70: #{policy_forward.1} parent=1 // pred_check
      _
    $region71: #{policy_forward.1} parent=1 // pred_check_branch
      %2612 = sbr.rel (0) target = $region73
    $region72: #{policy_forward.1} parent=1 // pred_region
      %2613 = dma.done [#allocation6], 32
    $region73: #{policy_forward.1} parent=1 // pred_fallthru
      _
    %2614 = vsyncpa [#allocation5], 1
    %2615 = vsyncpa [#allocation8], 1
    %2616 = vsyncpa [#allocation6], 1

</llo_original>
